<compile_context>
chip_gen: v7x
topology: tpu7x:2x2x1
jax: 0.10.0
libtpu: 0.0.40
codegen_flags: <defaults>
</compile_context>

<pallas_src>
import functools

import jax
import jax.numpy as jnp
from jax import lax
from jax.experimental import pallas as pl
from jax.experimental.pallas import tpu as pltpu


# ----------------------------------------------------------------------------
# Tiling / VMEM helpers
# ----------------------------------------------------------------------------
@functools.lru_cache(maxsize=1)
def _scoped_vmem_limit():
    """Generation-aware scoped-VMEM budget: ~half of physical VMEM
    (64 MiB on v5e/v6e, 32 MiB on v7x)."""
    try:
        cap = int(pltpu.get_tpu_info().vmem_capacity_bytes)
        return max(32 * 1024 * 1024, min(64 * 1024 * 1024, cap // 2))
    except Exception:
        return 32 * 1024 * 1024  # safe on every generation


def _pad8(x):
    return ((x + 7) // 8) * 8


def _pick_tq(nq, nr, d, d_feat, k, batch):
    """Largest multiple-of-128 query tile dividing nq whose estimated per-step
    VMEM footprint stays under ~1/3 of the scoped limit (~10 MiB on v7x,
    ~21 MiB on v5e/v6e), while keeping >= ~4 total grid steps so both v7x
    TensorCores get work and the pipeline can overlap DMA with compute."""
    budget = _scoped_vmem_limit() // 3
    # TQ-independent footprint: double-buffered r / f / r2 input blocks.
    fixed = 2 * 4 * nr * (_pad8(d) + _pad8(d_feat) + 8)
    candidates = [t for t in range(1024, 127, -128) if nq % t == 0]
    for tq in candidates:
        live = 3 * tq * nr * 4                       # (TQ, nr) 32-bit temporaries
        io = 2 * 4 * (tq * 128                       # q tile (3 -> 128 lane pad)
                      + 2 * _pad8(k) * tq            # dist + idx blocks
                      + k * _pad8(d) * tq            # gathered points block
                      + k * _pad8(d_feat) * tq)      # gathered feats block
        io += tq * 128 * 4                           # packed-min scratch
        if fixed + live + io <= budget and batch * (nq // tq) >= 4:
            return tq
    if candidates:
        # Best effort: smallest lane-aligned tile (may exceed the soft budget
        # for huge reference frames; vmem_limit_bytes is raised anyway).
        return candidates[-1]
    return nq  # small / irregular nq: run the query axis untiled


# ----------------------------------------------------------------------------
# Pallas kernel: fused KNN (k nearest reference points per query, ascending
# squared L2) + one-hot MXU gather of the neighbour points and features.
# ----------------------------------------------------------------------------
def _knn_kernel(k, idx_bits, two_stage, q_ref, r_ref, f_ref, r2_ref,
                dist_ref, idx_ref, pts_ref, feats_ref, mins_ref):
    q = q_ref[0]                # (TQ, 3) query coords, channels-last
    r = r_ref[0]                # (d, n)  reference frame, channels-first
    f = f_ref[0]                # (d_feat, n) feature frame, channels-first
    r2 = r2_ref[0]              # (1, n)  |r_xyz|^2 precomputed in the wrapper
    r_xyz = r[0:3, :]           # (3, n)
    tq = q.shape[0]
    n = r.shape[1]

    # Pairwise squared distances D[i, j] = |q_i|^2 + |r_j|^2 - 2 q_i . r_j
    cross = lax.dot_general(q, r_xyz, (((1,), (0,)), ((), ())),
                            preferred_element_type=jnp.float32)        # (TQ, n)
    q2 = jnp.sum(q * q, axis=-1, keepdims=True)                         # (TQ, 1)
    dmat = jnp.maximum(q2 + r2 - 2.0 * cross, 0.0)                      # (TQ, n)

    # Pack (distance, index) into one monotonic int32 key: non-negative f32 bit
    # patterns order like int32; the low idx_bits mantissa bits carry the
    # column index so ONE min-reduction yields both argmin and value.
    mask_val = (1 << idx_bits) - 1
    idx_mask = jnp.int32(mask_val)
    inv_mask = jnp.int32(-1 - mask_val)      # == ~mask_val
    big = jnp.int32(2147483647)

    col_ids = lax.broadcasted_iota(jnp.int32, (tq, n), 1)
    cur = (pltpu.bitcast(dmat, jnp.int32) & inv_mask) | col_ids         # (TQ, n)

    def _row_min(x):
        if two_stage:
            # Fold 128-lane groups element-wise on the VPU (4 ports), leaving a
            # single 128-lane cross-lane min for the XLU (2 ports).
            folded = x[:, 0:128]
            for g in range(1, n // 128):
                folded = jnp.minimum(folded, x[:, g * 128:(g + 1) * 128])
            return jnp.min(folded, axis=-1, keepdims=True)
        return jnp.min(x, axis=-1, keepdims=True)

    for j in range(k):                          # unrolled; k is small (e.g. 16)
        kmin = _row_min(cur)                    # (TQ, 1) packed (dist | idx)
        mins_ref[:, j:j + 1] = kmin             # accumulate in VMEM scratch
        eq = cur == kmin                        # exact argmin column (keys unique)
        onehot = eq.astype(jnp.float32)         # reuse as MXU gather matrix
        pts_ref[0, j, :, :] = lax.dot_general(  # gathered neighbour j, lane-dense
            r, onehot, (((1,), (1,)), ((), ())),
            preferred_element_type=jnp.float32)            # (d, TQ)
        feats_ref[0, j, :, :] = lax.dot_general(
            f, onehot, (((1,), (1,)), ((), ())),
            preferred_element_type=jnp.float32)            # (d_feat, TQ)
        if j + 1 < k:
            cur = jnp.where(eq, big, cur)       # drop selected column

    # Lane-dense dist / idx: ONE small transpose of the packed (TQ, k) scratch
    # (through an f32 bitcast so it is pure data movement).
    kmat = mins_ref[...]                                                 # (TQ, k)
    kt = pltpu.bitcast(pltpu.bitcast(kmat, jnp.float32).T, jnp.int32)    # (k, TQ)
    idx_ref[0] = kt & idx_mask
    dist_ref[0] = pltpu.bitcast(kt & inv_mask, jnp.float32)


def knn_gather_pallas(q, r, f, k):
    """Fused KNN + neighbour gather.

    q: (B, nq, 3)   channels-last query coordinates.
    r: (B, d, nr)   channels-first reference frame (rows 0:3 are xyz).
    f: (B, d_feat, nr) channels-first feature frame (gather source).

    Returns (dist, idx, pts, feats):
      dist, idx : (B, k, nq)        ascending squared L2 / neighbour index
      pts       : (B, k, d, nq)     r gathered at idx  (pts[:, 0] = nearest point)
      feats     : (B, k, d_feat, nq) f gathered at idx
    """
    q = q.astype(jnp.float32)
    r = r.astype(jnp.float32)
    f = f.astype(jnp.float32)
    B, nq, _ = q.shape
    d, nr = r.shape[1], r.shape[2]
    d_feat = f.shape[1]
    assert k <= nr, "k must not exceed the number of reference points"

    tq = _pick_tq(nq, nr, d, d_feat, k, B)
    idx_bits = max(1, (nr - 1).bit_length())
    two_stage = (nr % 128 == 0) and (nr > 128)
    r2 = jnp.sum(r[:, 0:3, :] ** 2, axis=1, keepdims=True)   # (B, 1, nr), once/frame

    kern = functools.partial(_knn_kernel, k, idx_bits, two_stage)

    dist, idx, pts, feats = pl.pallas_call(
        kern,
        out_shape=(
            jax.ShapeDtypeStruct((B, k, nq), jnp.float32),
            jax.ShapeDtypeStruct((B, k, nq), jnp.int32),
            jax.ShapeDtypeStruct((B, k, d, nq), jnp.float32),
            jax.ShapeDtypeStruct((B, k, d_feat, nq), jnp.float32),
        ),
        grid=(B, nq // tq),
        in_specs=[
            pl.BlockSpec((1, tq, 3), lambda bi, qi: (bi, qi, 0)),
            pl.BlockSpec((1, d, nr), lambda bi, qi: (bi, 0, 0)),
            pl.BlockSpec((1, d_feat, nr), lambda bi, qi: (bi, 0, 0)),
            pl.BlockSpec((1, 1, nr), lambda bi, qi: (bi, 0, 0)),
        ],
        out_specs=(
            pl.BlockSpec((1, k, tq), lambda bi, qi: (bi, 0, qi)),
            pl.BlockSpec((1, k, tq), lambda bi, qi: (bi, 0, qi)),
            pl.BlockSpec((1, k, d, tq), lambda bi, qi: (bi, 0, 0, qi)),
            pl.BlockSpec((1, k, d_feat, tq), lambda bi, qi: (bi, 0, 0, qi)),
        ),
        scratch_shapes=[pltpu.VMEM((tq, k), jnp.int32)],
        compiler_params=pltpu.CompilerParams(
            dimension_semantics=("parallel", "parallel"),
            vmem_limit_bytes=_scoped_vmem_limit(),
        ),
    )(q, r, f, r2)
    return dist, idx, pts, feats


# ----------------------------------------------------------------------------
# Plain-JAX glue reproducing get_tpatches / forward semantics.
# ----------------------------------------------------------------------------
def get_tpatches_jax(x1, x2, feat_seq, *, k, radius=None, sample_mode="nn"):
    """Returns per-direction tensors with leading (B, t, ...) shape."""
    B, t, n, d = x1.shape
    feat = x1 if feat_seq is None else feat_seq
    d_feat = feat.shape[-1]

    # shifted feature sequence (frame 0 duplicated)
    feat_seq_2 = jnp.concatenate([feat[:, :1], feat], axis=1)[:, :-1]

    # channels-first gather sources, transposed ONCE outside the frame loop
    x1_cf = jnp.swapaxes(x1, 2, 3)            # (B, t, d, n)
    fs2_cf = jnp.swapaxes(feat_seq_2, 2, 3)   # (B, t, d_feat, n)

    x_current = x2[:, 0]                      # (B, n, d) channels-last
    out_x_l, dist_l, idx_l, pts_l, feats_l = [], [], [], [], []
    # NOTE: sequential in t because x_current carries across frames; t is small
    # (temporal_stride). For very large t this loop could become a lax.scan.
    for i in range(t):
        dist_i, idx_i, pts_i, feats_i = knn_gather_pallas(
            x_current[..., 0:3], x1_cf[:, i], fs2_cf[:, i], k)
        if sample_mode == "nn":
            # nearest point comes straight out of the kernel (row j=0,
            # channels-first); radius clipping never changes idx[..., 0].
            x_current = jnp.swapaxes(pts_i[:, 0], 1, 2)   # (B, n, d)
        elif sample_mode == "gt":
            x_current = x1[:, i]
        else:
            # TODO(synk): 'randn' sample mode (random neighbour pick) not implemented.
            raise ValueError("sample mode not supported")

        # TODO(synk): add_centroid_jitter not implemented (module default None).
        out_x_l.append(x_current)
        dist_l.append(dist_i)
        idx_l.append(idx_i)
        pts_l.append(pts_i)
        feats_l.append(feats_i)

    out_x = jnp.stack(out_x_l, axis=1)                                   # (B,t,n,d)
    distances = jnp.transpose(jnp.stack(dist_l, 1), (0, 1, 3, 2))        # (B,t,n,k)
    idxs = jnp.transpose(jnp.stack(idx_l, 1), (0, 1, 3, 2))              # (B,t,n,k)
    patchlet_points = jnp.transpose(jnp.stack(pts_l, 1), (0, 1, 4, 2, 3))    # (B,t,n,k,d)
    patchlet_feats = jnp.transpose(jnp.stack(feats_l, 1), (0, 1, 4, 2, 3))   # (B,t,n,k,d_feat)

    if radius is not None:
        # Clipping to neighbour 0 (matches the reference get_knn + gathers).
        mask = distances > radius ** 2
        idxs = jnp.where(mask, idxs[..., :1], idxs)
        distances = jnp.where(mask, 0.0, distances)
        patchlet_points = jnp.where(mask[..., None],
                                    patchlet_points[..., 0:1, :], patchlet_points)
        patchlet_feats = jnp.where(mask[..., None],
                                   patchlet_feats[..., 0:1, :], patchlet_feats)
    patchlets = idxs

    # TODO(synk): downsample_method 'fps' / 'var' / 'mean_var_t' not implemented
    # (module default downsample_method=None, so this branch is never taken).
    return (patchlet_points, patchlet_feats, distances, idxs, patchlets,
            n, d_feat, None, out_x)


def tpatch_extractor_bidirectional(point_seq, feat_seq=None, *, k=16, radius=None,
                                   sample_mode="nn", perm_key=None):
    b, t, n, d = point_seq.shape
    n_out = n

    # Forward and backward directions are independent -> stack them along the
    # batch axis so every frame needs ONE pallas_call over a (2b, nq/TQ) grid.
    x1f = point_seq
    x2f = jnp.concatenate([point_seq[:, :1], point_seq], axis=1)[:, :-1]
    x1b = jnp.flip(point_seq, axis=1)
    x2b = jnp.concatenate([x1b[:, :1], x1b], axis=1)[:, :-1]

    x1 = jnp.concatenate([x1f, x1b], axis=0)   # (2b, t, n, d)
    x2 = jnp.concatenate([x2f, x2b], axis=0)
    fs = None if feat_seq is None else jnp.concatenate([feat_seq, feat_seq], axis=0)

    (pp, pf, dist, idx, pls, n_, d_feat, fps_idx, out_x_all) = get_tpatches_jax(
        x1, x2, fs, k=k, radius=radius, sample_mode=sample_mode)

    def split_and_flip(a):
        fwd, bwd = a[:b], a[b:]
        return fwd, jnp.flip(bwd, axis=1)   # backward direction flipped in t

    pp1, pp2 = split_and_flip(pp)
    pf1, pf2 = split_and_flip(pf)
    d1, d2 = split_and_flip(dist)
    i1, i2 = split_and_flip(idx)
    pls1, pls2 = split_and_flip(pls)
    out_x1 = out_x_all[:b]

    def flat(a):
        return a.reshape((b * t,) + a.shape[2:])

    pp1, pp2, pf1, pf2 = flat(pp1), flat(pp2), flat(pf1), flat(pf2)
    d1, d2, i1, i2 = flat(d1), flat(d2), flat(i1), flat(i2)
    pls1, pls2 = flat(pls1), flat(pls2)

    # deterministic replacement for torch.randperm(n)[:n//2]
    if perm_key is None:
        perm_key = jax.random.PRNGKey(0)
    rand_idxs = jax.random.permutation(perm_key, n_)[: n_ // 2]

    patchlets = jnp.concatenate([pls1[:, rand_idxs], pls2[:, rand_idxs]], axis=1)
    patchlet_feats = jnp.concatenate([pf1[:, rand_idxs], pf2[:, rand_idxs]], axis=1)
    patchlet_points = jnp.concatenate([pp1[:, rand_idxs], pp2[:, rand_idxs]], axis=1)
    distances = jnp.concatenate([d1[:, rand_idxs], d2[:, rand_idxs]], axis=1)
    idxs = jnp.concatenate([i1[:, rand_idxs], i2[:, rand_idxs]], axis=1)
    out_x = out_x1

    distances = distances.reshape(b, t, n_, k)
    idxs = idxs.reshape(b, t, n_, k)
    patchlets = patchlets.reshape(b, t, n_, k)
    patchlet_points = patchlet_points.reshape(b, t, n_, k, d)
    patchlet_feats = patchlet_feats.reshape(b, t, n_, k, d_feat)

    # patchlet_points[:, 0, :, [0], :].unsqueeze(1) -> (b, 1, n, 1, d)
    anchor = lax.stop_gradient(patchlet_points[:, 0, :, 0:1, :][:, None])
    normalized_patchlet_points = patchlet_points - anchor
    patchlet_feats = jnp.concatenate(
        [patchlet_feats, normalized_patchlet_points], axis=-1)

    return {
        "idx": idxs,
        "distances": distances,
        "patchlets": patchlets,
        "patchlet_points": patchlet_points,
        "patchlet_feats": patchlet_feats,
        "normalized_patchlet_points": normalized_patchlet_points,
        "fps_idx": fps_idx,
        "x_current": out_x.reshape(b, t, n_out, d),
    }


if __name__ == "__main__":
    key = jax.random.PRNGKey(0)
    key_pts, key_big = jax.random.split(key)
    b, t, n, d, k = 2, 4, 32, 3, 16
    point_seq = jax.random.normal(key_pts, (b, t, n, d), dtype=jnp.float32)

    # --- sanity check 1: small n (untiled, single-stage reduce) -------------
    q0 = point_seq[:, 0, :, :3]                         # (b, n, 3)
    r_cf = jnp.swapaxes(q0, 1, 2)                       # (b, 3, n)
    diff = q0[:, :, None, :] - q0[:, None, :, :]
    ref_d = jnp.sort(jnp.sum(diff * diff, axis=-1), axis=-1)[..., :k]
    got_d, got_i, got_p, got_f = knn_gather_pallas(q0, r_cf, r_cf, k)
    jax.block_until_ready((got_d, got_i, got_p, got_f))
    got_d_nk = jnp.swapaxes(got_d, 1, 2)                # (b, n, k)
    assert got_d_nk.shape == (b, n, k) and got_i.shape == (b, k, n)
    assert float(jnp.max(jnp.abs(ref_d - got_d_nk))) < 1e-3
    nn0 = jnp.swapaxes(got_p[:, 0], 1, 2)               # (b, n, 3) nearest point
    assert float(jnp.max(jnp.abs(nn0 - q0))) < 1e-4     # each point is its own NN

    # --- sanity check 2: larger n (tiled grid + two-stage VPU/XLU reduce) ---
    nb = 256
    pts2 = jax.random.normal(key_big, (2, nb, 3), dtype=jnp.float32)
    r2cf = jnp.swapaxes(pts2, 1, 2)
    dist2, idx2, p2, f2 = knn_gather_pallas(pts2, r2cf, r2cf, k)
    jax.block_until_ready((dist2, idx2, p2, f2))
    diff2 = pts2[:, :, None, :] - pts2[:, None, :, :]
    ref2 = jnp.sort(jnp.sum(diff2 * diff2, axis=-1), axis=-1)[..., :k]
    assert float(jnp.max(jnp.abs(ref2 - jnp.swapaxes(dist2, 1, 2)))) < 5e-3
    idx_nk = jnp.swapaxes(idx2, 1, 2)                   # (2, nb, k)
    pts_nk = jnp.transpose(p2, (0, 3, 1, 2))            # (2, nb, k, 3)
    ref_gather = pts2[jnp.arange(2)[:, None, None], idx_nk]
    assert float(jnp.max(jnp.abs(pts_nk - ref_gather))) < 1e-5

    # --- full bidirectional extractor ----------------------------------------
    fwd = jax.jit(functools.partial(tpatch_extractor_bidirectional, k=k))
    out = fwd(point_seq)
    jax.block_until_ready(out)

    assert out["idx"].shape == (b, t, n, k)
    assert out["distances"].shape == (b, t, n, k)
    assert out["patchlets"].shape == (b, t, n, k)
    assert out["patchlet_points"].shape == (b, t, n, k, d)
    assert out["patchlet_feats"].shape == (b, t, n, k, d + d)
    assert out["normalized_patchlet_points"].shape == (b, t, n, k, d)
    assert out["x_current"].shape == (b, t, n, d)
    print("KERNEL_OK")
</pallas_src>

<mosaic_0001>
module attributes {stable_mosaic.version = 11 : i64} {
  func.func @_knn_kernel(%arg0: i32, %arg1: i32, %arg2: memref<1x32x3xf32, #tpu.memory_space<vmem>>, %arg3: memref<1x3x32xf32, #tpu.memory_space<vmem>>, %arg4: memref<1x3x32xf32, #tpu.memory_space<vmem>>, %arg5: memref<1x1x32xf32, #tpu.memory_space<vmem>>, %arg6: memref<1x16x32xf32, #tpu.memory_space<vmem>>, %arg7: memref<1x16x32xi32, #tpu.memory_space<vmem>>, %arg8: memref<1x16x3x32xf32, #tpu.memory_space<vmem>>, %arg9: memref<1x16x3x32xf32, #tpu.memory_space<vmem>>, %arg10: memref<32x16xi32, #tpu.memory_space<vmem>>) attributes {dimension_semantics = [#tpu.dimension_semantics<parallel>, #tpu.dimension_semantics<parallel>], iteration_bounds = array<i64: 2, 1>, scalar_prefetch = 0 : i64, scratch_operands = 1 : i64, tpu.core_type = #tpu.core_type<tc>, window_params = [{transform_indices = @transform_0, window_bounds = array<i64: 1, 32, 3>}, {transform_indices = @transform_1, window_bounds = array<i64: 1, 3, 32>}, {transform_indices = @transform_2, window_bounds = array<i64: 1, 3, 32>}, {transform_indices = @transform_3, window_bounds = array<i64: 1, 1, 32>}, {transform_indices = @transform_4, window_bounds = array<i64: 1, 16, 32>}, {transform_indices = @transform_5, window_bounds = array<i64: 1, 16, 32>}, {transform_indices = @transform_6, window_bounds = array<i64: 1, 16, 3, 32>}, {transform_indices = @transform_7, window_bounds = array<i64: 1, 16, 3, 32>}]} {
    %c0 = arith.constant 0 : index
    %c0_0 = arith.constant 0 : index
    %c0_1 = arith.constant 0 : index
    %0 = vector.load %arg2[%c0, %c0_0, %c0_1] : memref<1x32x3xf32, #tpu.memory_space<vmem>>, vector<1x32x3xf32>
    %1 = vector.shape_cast %0 : vector<1x32x3xf32> to vector<32x3xf32>
    %c0_2 = arith.constant 0 : index
    %c0_3 = arith.constant 0 : index
    %c0_4 = arith.constant 0 : index
    %2 = vector.load %arg3[%c0_2, %c0_3, %c0_4] : memref<1x3x32xf32, #tpu.memory_space<vmem>>, vector<1x3x32xf32>
    %3 = vector.shape_cast %2 : vector<1x3x32xf32> to vector<3x32xf32>
    %c0_5 = arith.constant 0 : index
    %c0_6 = arith.constant 0 : index
    %c0_7 = arith.constant 0 : index
    %4 = vector.load %arg4[%c0_5, %c0_6, %c0_7] : memref<1x3x32xf32, #tpu.memory_space<vmem>>, vector<1x3x32xf32>
    %5 = vector.shape_cast %4 : vector<1x3x32xf32> to vector<3x32xf32>
    %c0_8 = arith.constant 0 : index
    %c0_9 = arith.constant 0 : index
    %c0_10 = arith.constant 0 : index
    %6 = vector.load %arg5[%c0_8, %c0_9, %c0_10] : memref<1x1x32xf32, #tpu.memory_space<vmem>>, vector<1x1x32xf32>
    %7 = vector.shape_cast %6 : vector<1x1x32xf32> to vector<1x32xf32>
    %cst = arith.constant dense<0.000000e+00> : vector<32x32xf32>
    %8 = tpu.matmul %1, %3, %cst {dimension_numbers = #tpu.dot_dimension_numbers<[1], [0], [0], [1], [0, 0, 1, 1], [], []>} : vector<32x3xf32>, vector<3x32xf32>, vector<32x32xf32> -> vector<32x32xf32>
    %9 = arith.mulf %1, %1 : vector<32x3xf32>
    %cst_11 = arith.constant dense<0.000000e+00> : vector<32xf32>
    %10 = vector.multi_reduction <add>, %9, %cst_11 [1] : vector<32x3xf32> to vector<32xf32>
    %11 = vector.shape_cast %10 : vector<32xf32> to vector<32x1xf32>
    %12 = vector.broadcast %11 : vector<32x1xf32> to vector<32x32xf32>
    %13 = vector.broadcast %7 : vector<1x32xf32> to vector<32x32xf32>
    %14 = arith.addf %12, %13 : vector<32x32xf32>
    %cst_12 = arith.constant 2.000000e+00 : f32
    %15 = vector.broadcast %cst_12 : f32 to vector<32x32xf32>
    %16 = arith.mulf %15, %8 : vector<32x32xf32>
    %17 = arith.subf %14, %16 : vector<32x32xf32>
    %cst_13 = arith.constant 0.000000e+00 : f32
    %18 = vector.broadcast %cst_13 : f32 to vector<32x32xf32>
    %19 = arith.maximumf %17, %18 : vector<32x32xf32>
    %20 = tpu.iota {dimensions = array<i32: 1>} : vector<32x32xi32>
    %21 = tpu.bitcast %19 : vector<32x32xf32> -> vector<32x32xi32>
    %c-32_i32 = arith.constant -32 : i32
    %22 = vector.broadcast %c-32_i32 : i32 to vector<32x32xi32>
    %23 = arith.andi %21, %22 : vector<32x32xi32>
    %24 = arith.ori %23, %20 : vector<32x32xi32>
    %cst_14 = arith.constant dense<2147483647> : vector<32xi32>
    %25 = vector.multi_reduction <minsi>, %24, %cst_14 [1] : vector<32x32xi32> to vector<32xi32>
    %26 = vector.shape_cast %25 : vector<32xi32> to vector<32x1xi32>
    %c0_15 = arith.constant 0 : index
    %c0_16 = arith.constant 0 : index
    %27 = vector.load %arg10[%c0_15, %c0_16] : memref<32x16xi32, #tpu.memory_space<vmem>>, vector<32x1xi32>
    tpu.vector_store %arg10[%c0_15, %c0_16], %26 {strides = array<i32>} : memref<32x16xi32, #tpu.memory_space<vmem>>, vector<32x1xi32>,
    %28 = vector.broadcast %26 : vector<32x1xi32> to vector<32x32xi32>
    %29 = arith.cmpi eq, %24, %28 : vector<32x32xi32>
    %30 = arith.extui %29 : vector<32x32xi1> to vector<32x32xi32>
    %31 = arith.sitofp %30 : vector<32x32xi32> to vector<32x32xf32>
    %cst_17 = arith.constant dense<0.000000e+00> : vector<3x32xf32>
    %32 = tpu.matmul %3, %31, %cst_17 {dimension_numbers = #tpu.dot_dimension_numbers<[1], [1], [0], [0], [0, 0, 1, 0], [], []>} : vector<3x32xf32>, vector<32x32xf32>, vector<3x32xf32> -> vector<3x32xf32>
    %c0_18 = arith.constant 0 : index
    %c0_19 = arith.constant 0 : index
    %c0_20 = arith.constant 0 : index
    %c0_21 = arith.constant 0 : index
    %33 = vector.load %arg8[%c0_18, %c0_19, %c0_20, %c0_21] : memref<1x16x3x32xf32, #tpu.memory_space<vmem>>, vector<1x1x3x32xf32>
    %34 = vector.shape_cast %33 : vector<1x1x3x32xf32> to vector<3x32xf32>
    %35 = vector.shape_cast %32 : vector<3x32xf32> to vector<1x1x3x32xf32>
    tpu.vector_store %arg8[%c0_18, %c0_19, %c0_20, %c0_21], %35 {strides = array<i32>} : memref<1x16x3x32xf32, #tpu.memory_space<vmem>>, vector<1x1x3x32xf32>,
    %cst_22 = arith.constant dense<0.000000e+00> : vector<3x32xf32>
    %36 = tpu.matmul %5, %31, %cst_22 {dimension_numbers = #tpu.dot_dimension_numbers<[1], [1], [0], [0], [0, 0, 1, 0], [], []>} : vector<3x32xf32>, vector<32x32xf32>, vector<3x32xf32> -> vector<3x32xf32>
    %c0_23 = arith.constant 0 : index
    %c0_24 = arith.constant 0 : index
    %c0_25 = arith.constant 0 : index
    %c0_26 = arith.constant 0 : index
    %37 = vector.load %arg9[%c0_23, %c0_24, %c0_25, %c0_26] : memref<1x16x3x32xf32, #tpu.memory_space<vmem>>, vector<1x1x3x32xf32>
    %38 = vector.shape_cast %37 : vector<1x1x3x32xf32> to vector<3x32xf32>
    %39 = vector.shape_cast %36 : vector<3x32xf32> to vector<1x1x3x32xf32>
    tpu.vector_store %arg9[%c0_23, %c0_24, %c0_25, %c0_26], %39 {strides = array<i32>} : memref<1x16x3x32xf32, #tpu.memory_space<vmem>>, vector<1x1x3x32xf32>,
    %c2147483647_i32 = arith.constant 2147483647 : i32
    %40 = vector.broadcast %c2147483647_i32 : i32 to vector<32x32xi32>
    %41 = arith.select %29, %40, %24 : vector<32x32xi1>, vector<32x32xi32>
    %cst_27 = arith.constant dense<2147483647> : vector<32xi32>
    %42 = vector.multi_reduction <minsi>, %41, %cst_27 [1] : vector<32x32xi32> to vector<32xi32>
    %43 = vector.shape_cast %42 : vector<32xi32> to vector<32x1xi32>
    %c0_28 = arith.constant 0 : index
    %c1 = arith.constant 1 : index
    %44 = vector.load %arg10[%c0_28, %c1] : memref<32x16xi32, #tpu.memory_space<vmem>>, vector<32x1xi32>
    tpu.vector_store %arg10[%c0_28, %c1], %43 {strides = array<i32>} : memref<32x16xi32, #tpu.memory_space<vmem>>, vector<32x1xi32>,
    %45 = vector.broadcast %43 : vector<32x1xi32> to vector<32x32xi32>
    %46 = arith.cmpi eq, %41, %45 : vector<32x32xi32>
    %47 = arith.extui %46 : vector<32x32xi1> to vector<32x32xi32>
    %48 = arith.sitofp %47 : vector<32x32xi32> to vector<32x32xf32>
    %cst_29 = arith.constant dense<0.000000e+00> : vector<3x32xf32>
    %49 = tpu.matmul %3, %48, %cst_29 {dimension_numbers = #tpu.dot_dimension_numbers<[1], [1], [0], [0], [0, 0, 1, 0], [], []>} : vector<3x32xf32>, vector<32x32xf32>, vector<3x32xf32> -> vector<3x32xf32>
    %c0_30 = arith.constant 0 : index
    %c1_31 = arith.constant 1 : index
    %c0_32 = arith.constant 0 : index
    %c0_33 = arith.constant 0 : index
    %50 = vector.load %arg8[%c0_30, %c1_31, %c0_32, %c0_33] : memref<1x16x3x32xf32, #tpu.memory_space<vmem>>, vector<1x1x3x32xf32>
    %51 = vector.shape_cast %50 : vector<1x1x3x32xf32> to vector<3x32xf32>
    %52 = vector.shape_cast %49 : vector<3x32xf32> to vector<1x1x3x32xf32>
    tpu.vector_store %arg8[%c0_30, %c1_31, %c0_32, %c0_33], %52 {strides = array<i32>} : memref<1x16x3x32xf32, #tpu.memory_space<vmem>>, vector<1x1x3x32xf32>,
    %cst_34 = arith.constant dense<0.000000e+00> : vector<3x32xf32>
    %53 = tpu.matmul %5, %48, %cst_34 {dimension_numbers = #tpu.dot_dimension_numbers<[1], [1], [0], [0], [0, 0, 1, 0], [], []>} : vector<3x32xf32>, vector<32x32xf32>, vector<3x32xf32> -> vector<3x32xf32>
    %c0_35 = arith.constant 0 : index
    %c1_36 = arith.constant 1 : index
    %c0_37 = arith.constant 0 : index
    %c0_38 = arith.constant 0 : index
    %54 = vector.load %arg9[%c0_35, %c1_36, %c0_37, %c0_38] : memref<1x16x3x32xf32, #tpu.memory_space<vmem>>, vector<1x1x3x32xf32>
    %55 = vector.shape_cast %54 : vector<1x1x3x32xf32> to vector<3x32xf32>
    %56 = vector.shape_cast %53 : vector<3x32xf32> to vector<1x1x3x32xf32>
    tpu.vector_store %arg9[%c0_35, %c1_36, %c0_37, %c0_38], %56 {strides = array<i32>} : memref<1x16x3x32xf32, #tpu.memory_space<vmem>>, vector<1x1x3x32xf32>,
    %c2147483647_i32_39 = arith.constant 2147483647 : i32
    %57 = vector.broadcast %c2147483647_i32_39 : i32 to vector<32x32xi32>
    %58 = arith.select %46, %57, %41 : vector<32x32xi1>, vector<32x32xi32>
    %cst_40 = arith.constant dense<2147483647> : vector<32xi32>
    %59 = vector.multi_reduction <minsi>, %58, %cst_40 [1] : vector<32x32xi32> to vector<32xi32>
    %60 = vector.shape_cast %59 : vector<32xi32> to vector<32x1xi32>
    %c0_41 = arith.constant 0 : index
    %c2 = arith.constant 2 : index
    %61 = vector.load %arg10[%c0_41, %c2] : memref<32x16xi32, #tpu.memory_space<vmem>>, vector<32x1xi32>
    tpu.vector_store %arg10[%c0_41, %c2], %60 {strides = array<i32>} : memref<32x16xi32, #tpu.memory_space<vmem>>, vector<32x1xi32>,
    %62 = vector.broadcast %60 : vector<32x1xi32> to vector<32x32xi32>
    %63 = arith.cmpi eq, %58, %62 : vector<32x32xi32>
    %64 = arith.extui %63 : vector<32x32xi1> to vector<32x32xi32>
    %65 = arith.sitofp %64 : vector<32x32xi32> to vector<32x32xf32>
    %cst_42 = arith.constant dense<0.000000e+00> : vector<3x32xf32>
    %66 = tpu.matmul %3, %65, %cst_42 {dimension_numbers = #tpu.dot_dimension_numbers<[1], [1], [0], [0], [0, 0, 1, 0], [], []>} : vector<3x32xf32>, vector<32x32xf32>, vector<3x32xf32> -> vector<3x32xf32>
    %c0_43 = arith.constant 0 : index
    %c2_44 = arith.constant 2 : index
    %c0_45 = arith.constant 0 : index
    %c0_46 = arith.constant 0 : index
    %67 = vector.load %arg8[%c0_43, %c2_44, %c0_45, %c0_46] : memref<1x16x3x32xf32, #tpu.memory_space<vmem>>, vector<1x1x3x32xf32>
    %68 = vector.shape_cast %67 : vector<1x1x3x32xf32> to vector<3x32xf32>
    %69 = vector.shape_cast %66 : vector<3x32xf32> to vector<1x1x3x32xf32>
    tpu.vector_store %arg8[%c0_43, %c2_44, %c0_45, %c0_46], %69 {strides = array<i32>} : memref<1x16x3x32xf32, #tpu.memory_space<vmem>>, vector<1x1x3x32xf32>,
    %cst_47 = arith.constant dense<0.000000e+00> : vector<3x32xf32>
    %70 = tpu.matmul %5, %65, %cst_47 {dimension_numbers = #tpu.dot_dimension_numbers<[1], [1], [0], [0], [0, 0, 1, 0], [], []>} : vector<3x32xf32>, vector<32x32xf32>, vector<3x32xf32> -> vector<3x32xf32>
    %c0_48 = arith.constant 0 : index
    %c2_49 = arith.constant 2 : index
    %c0_50 = arith.constant 0 : index
    %c0_51 = arith.constant 0 : index
    %71 = vector.load %arg9[%c0_48, %c2_49, %c0_50, %c0_51] : memref<1x16x3x32xf32, #tpu.memory_space<vmem>>, vector<1x1x3x32xf32>
    %72 = vector.shape_cast %71 : vector<1x1x3x32xf32> to vector<3x32xf32>
    %73 = vector.shape_cast %70 : vector<3x32xf32> to vector<1x1x3x32xf32>
    tpu.vector_store %arg9[%c0_48, %c2_49, %c0_50, %c0_51], %73 {strides = array<i32>} : memref<1x16x3x32xf32, #tpu.memory_space<vmem>>, vector<1x1x3x32xf32>,
    %c2147483647_i32_52 = arith.constant 2147483647 : i32
    %74 = vector.broadcast %c2147483647_i32_52 : i32 to vector<32x32xi32>
    %75 = arith.select %63, %74, %58 : vector<32x32xi1>, vector<32x32xi32>
    %cst_53 = arith.constant dense<2147483647> : vector<32xi32>
    %76 = vector.multi_reduction <minsi>, %75, %cst_53 [1] : vector<32x32xi32> to vector<32xi32>
    %77 = vector.shape_cast %76 : vector<32xi32> to vector<32x1xi32>
    %c0_54 = arith.constant 0 : index
    %c3 = arith.constant 3 : index
    %78 = vector.load %arg10[%c0_54, %c3] : memref<32x16xi32, #tpu.memory_space<vmem>>, vector<32x1xi32>
    tpu.vector_store %arg10[%c0_54, %c3], %77 {strides = array<i32>} : memref<32x16xi32, #tpu.memory_space<vmem>>, vector<32x1xi32>,
    %79 = vector.broadcast %77 : vector<32x1xi32> to vector<32x32xi32>
    %80 = arith.cmpi eq, %75, %79 : vector<32x32xi32>
    %81 = arith.extui %80 : vector<32x32xi1> to vector<32x32xi32>
    %82 = arith.sitofp %81 : vector<32x32xi32> to vector<32x32xf32>
    %cst_55 = arith.constant dense<0.000000e+00> : vector<3x32xf32>
    %83 = tpu.matmul %3, %82, %cst_55 {dimension_numbers = #tpu.dot_dimension_numbers<[1], [1], [0], [0], [0, 0, 1, 0], [], []>} : vector<3x32xf32>, vector<32x32xf32>, vector<3x32xf32> -> vector<3x32xf32>
    %c0_56 = arith.constant 0 : index
    %c3_57 = arith.constant 3 : index
    %c0_58 = arith.constant 0 : index
    %c0_59 = arith.constant 0 : index
    %84 = vector.load %arg8[%c0_56, %c3_57, %c0_58, %c0_59] : memref<1x16x3x32xf32, #tpu.memory_space<vmem>>, vector<1x1x3x32xf32>
    %85 = vector.shape_cast %84 : vector<1x1x3x32xf32> to vector<3x32xf32>
    %86 = vector.shape_cast %83 : vector<3x32xf32> to vector<1x1x3x32xf32>
    tpu.vector_store %arg8[%c0_56, %c3_57, %c0_58, %c0_59], %86 {strides = array<i32>} : memref<1x16x3x32xf32, #tpu.memory_space<vmem>>, vector<1x1x3x32xf32>,
    %cst_60 = arith.constant dense<0.000000e+00> : vector<3x32xf32>
    %87 = tpu.matmul %5, %82, %cst_60 {dimension_numbers = #tpu.dot_dimension_numbers<[1], [1], [0], [0], [0, 0, 1, 0], [], []>} : vector<3x32xf32>, vector<32x32xf32>, vector<3x32xf32> -> vector<3x32xf32>
    %c0_61 = arith.constant 0 : index
    %c3_62 = arith.constant 3 : index
    %c0_63 = arith.constant 0 : index
    %c0_64 = arith.constant 0 : index
    %88 = vector.load %arg9[%c0_61, %c3_62, %c0_63, %c0_64] : memref<1x16x3x32xf32, #tpu.memory_space<vmem>>, vector<1x1x3x32xf32>
    %89 = vector.shape_cast %88 : vector<1x1x3x32xf32> to vector<3x32xf32>
    %90 = vector.shape_cast %87 : vector<3x32xf32> to vector<1x1x3x32xf32>
    tpu.vector_store %arg9[%c0_61, %c3_62, %c0_63, %c0_64], %90 {strides = array<i32>} : memref<1x16x3x32xf32, #tpu.memory_space<vmem>>, vector<1x1x3x32xf32>,
    %c2147483647_i32_65 = arith.constant 2147483647 : i32
    %91 = vector.broadcast %c2147483647_i32_65 : i32 to vector<32x32xi32>
    %92 = arith.select %80, %91, %75 : vector<32x32xi1>, vector<32x32xi32>
    %cst_66 = arith.constant dense<2147483647> : vector<32xi32>
    %93 = vector.multi_reduction <minsi>, %92, %cst_66 [1] : vector<32x32xi32> to vector<32xi32>
    %94 = vector.shape_cast %93 : vector<32xi32> to vector<32x1xi32>
    %c0_67 = arith.constant 0 : index
    %c4 = arith.constant 4 : index
    %95 = vector.load %arg10[%c0_67, %c4] : memref<32x16xi32, #tpu.memory_space<vmem>>, vector<32x1xi32>
    tpu.vector_store %arg10[%c0_67, %c4], %94 {strides = array<i32>} : memref<32x16xi32, #tpu.memory_space<vmem>>, vector<32x1xi32>,
    %96 = vector.broadcast %94 : vector<32x1xi32> to vector<32x32xi32>
    %97 = arith.cmpi eq, %92, %96 : vector<32x32xi32>
    %98 = arith.extui %97 : vector<32x32xi1> to vector<32x32xi32>
    %99 = arith.sitofp %98 : vector<32x32xi32> to vector<32x32xf32>
    %cst_68 = arith.constant dense<0.000000e+00> : vector<3x32xf32>
    %100 = tpu.matmul %3, %99, %cst_68 {dimension_numbers = #tpu.dot_dimension_numbers<[1], [1], [0], [0], [0, 0, 1, 0], [], []>} : vector<3x32xf32>, vector<32x32xf32>, vector<3x32xf32> -> vector<3x32xf32>
    %c0_69 = arith.constant 0 : index
    %c4_70 = arith.constant 4 : index
    %c0_71 = arith.constant 0 : index
    %c0_72 = arith.constant 0 : index
    %101 = vector.load %arg8[%c0_69, %c4_70, %c0_71, %c0_72] : memref<1x16x3x32xf32, #tpu.memory_space<vmem>>, vector<1x1x3x32xf32>
    %102 = vector.shape_cast %101 : vector<1x1x3x32xf32> to vector<3x32xf32>
    %103 = vector.shape_cast %100 : vector<3x32xf32> to vector<1x1x3x32xf32>
    tpu.vector_store %arg8[%c0_69, %c4_70, %c0_71, %c0_72], %103 {strides = array<i32>} : memref<1x16x3x32xf32, #tpu.memory_space<vmem>>, vector<1x1x3x32xf32>,
    %cst_73 = arith.constant dense<0.000000e+00> : vector<3x32xf32>
    %104 = tpu.matmul %5, %99, %cst_73 {dimension_numbers = #tpu.dot_dimension_numbers<[1], [1], [0], [0], [0, 0, 1, 0], [], []>} : vector<3x32xf32>, vector<32x32xf32>, vector<3x32xf32> -> vector<3x32xf32>
    %c0_74 = arith.constant 0 : index
    %c4_75 = arith.constant 4 : index
    %c0_76 = arith.constant 0 : index
    %c0_77 = arith.constant 0 : index
    %105 = vector.load %arg9[%c0_74, %c4_75, %c0_76, %c0_77] : memref<1x16x3x32xf32, #tpu.memory_space<vmem>>, vector<1x1x3x32xf32>
    %106 = vector.shape_cast %105 : vector<1x1x3x32xf32> to vector<3x32xf32>
    %107 = vector.shape_cast %104 : vector<3x32xf32> to vector<1x1x3x32xf32>
    tpu.vector_store %arg9[%c0_74, %c4_75, %c0_76, %c0_77], %107 {strides = array<i32>} : memref<1x16x3x32xf32, #tpu.memory_space<vmem>>, vector<1x1x3x32xf32>,
    %c2147483647_i32_78 = arith.constant 2147483647 : i32
    %108 = vector.broadcast %c2147483647_i32_78 : i32 to vector<32x32xi32>
    %109 = arith.select %97, %108, %92 : vector<32x32xi1>, vector<32x32xi32>
    %cst_79 = arith.constant dense<2147483647> : vector<32xi32>
    %110 = vector.multi_reduction <minsi>, %109, %cst_79 [1] : vector<32x32xi32> to vector<32xi32>
    %111 = vector.shape_cast %110 : vector<32xi32> to vector<32x1xi32>
    %c0_80 = arith.constant 0 : index
    %c5 = arith.constant 5 : index
    %112 = vector.load %arg10[%c0_80, %c5] : memref<32x16xi32, #tpu.memory_space<vmem>>, vector<32x1xi32>
    tpu.vector_store %arg10[%c0_80, %c5], %111 {strides = array<i32>} : memref<32x16xi32, #tpu.memory_space<vmem>>, vector<32x1xi32>,
    %113 = vector.broadcast %111 : vector<32x1xi32> to vector<32x32xi32>
    %114 = arith.cmpi eq, %109, %113 : vector<32x32xi32>
    %115 = arith.extui %114 : vector<32x32xi1> to vector<32x32xi32>
    %116 = arith.sitofp %115 : vector<32x32xi32> to vector<32x32xf32>
    %cst_81 = arith.constant dense<0.000000e+00> : vector<3x32xf32>
    %117 = tpu.matmul %3, %116, %cst_81 {dimension_numbers = #tpu.dot_dimension_numbers<[1], [1], [0], [0], [0, 0, 1, 0], [], []>} : vector<3x32xf32>, vector<32x32xf32>, vector<3x32xf32> -> vector<3x32xf32>
    %c0_82 = arith.constant 0 : index
    %c5_83 = arith.constant 5 : index
    %c0_84 = arith.constant 0 : index
    %c0_85 = arith.constant 0 : index
    %118 = vector.load %arg8[%c0_82, %c5_83, %c0_84, %c0_85] : memref<1x16x3x32xf32, #tpu.memory_space<vmem>>, vector<1x1x3x32xf32>
    %119 = vector.shape_cast %118 : vector<1x1x3x32xf32> to vector<3x32xf32>
    %120 = vector.shape_cast %117 : vector<3x32xf32> to vector<1x1x3x32xf32>
    tpu.vector_store %arg8[%c0_82, %c5_83, %c0_84, %c0_85], %120 {strides = array<i32>} : memref<1x16x3x32xf32, #tpu.memory_space<vmem>>, vector<1x1x3x32xf32>,
    %cst_86 = arith.constant dense<0.000000e+00> : vector<3x32xf32>
    %121 = tpu.matmul %5, %116, %cst_86 {dimension_numbers = #tpu.dot_dimension_numbers<[1], [1], [0], [0], [0, 0, 1, 0], [], []>} : vector<3x32xf32>, vector<32x32xf32>, vector<3x32xf32> -> vector<3x32xf32>
    %c0_87 = arith.constant 0 : index
    %c5_88 = arith.constant 5 : index
    %c0_89 = arith.constant 0 : index
    %c0_90 = arith.constant 0 : index
    %122 = vector.load %arg9[%c0_87, %c5_88, %c0_89, %c0_90] : memref<1x16x3x32xf32, #tpu.memory_space<vmem>>, vector<1x1x3x32xf32>
    %123 = vector.shape_cast %122 : vector<1x1x3x32xf32> to vector<3x32xf32>
    %124 = vector.shape_cast %121 : vector<3x32xf32> to vector<1x1x3x32xf32>
    tpu.vector_store %arg9[%c0_87, %c5_88, %c0_89, %c0_90], %124 {strides = array<i32>} : memref<1x16x3x32xf32, #tpu.memory_space<vmem>>, vector<1x1x3x32xf32>,
    %c2147483647_i32_91 = arith.constant 2147483647 : i32
    %125 = vector.broadcast %c2147483647_i32_91 : i32 to vector<32x32xi32>
    %126 = arith.select %114, %125, %109 : vector<32x32xi1>, vector<32x32xi32>
    %cst_92 = arith.constant dense<2147483647> : vector<32xi32>
    %127 = vector.multi_reduction <minsi>, %126, %cst_92 [1] : vector<32x32xi32> to vector<32xi32>
    %128 = vector.shape_cast %127 : vector<32xi32> to vector<32x1xi32>
    %c0_93 = arith.constant 0 : index
    %c6 = arith.constant 6 : index
    %129 = vector.load %arg10[%c0_93, %c6] : memref<32x16xi32, #tpu.memory_space<vmem>>, vector<32x1xi32>
    tpu.vector_store %arg10[%c0_93, %c6], %128 {strides = array<i32>} : memref<32x16xi32, #tpu.memory_space<vmem>>, vector<32x1xi32>,
    %130 = vector.broadcast %128 : vector<32x1xi32> to vector<32x32xi32>
    %131 = arith.cmpi eq, %126, %130 : vector<32x32xi32>
    %132 = arith.extui %131 : vector<32x32xi1> to vector<32x32xi32>
    %133 = arith.sitofp %132 : vector<32x32xi32> to vector<32x32xf32>
    %cst_94 = arith.constant dense<0.000000e+00> : vector<3x32xf32>
    %134 = tpu.matmul %3, %133, %cst_94 {dimension_numbers = #tpu.dot_dimension_numbers<[1], [1], [0], [0], [0, 0, 1, 0], [], []>} : vector<3x32xf32>, vector<32x32xf32>, vector<3x32xf32> -> vector<3x32xf32>
    %c0_95 = arith.constant 0 : index
    %c6_96 = arith.constant 6 : index
    %c0_97 = arith.constant 0 : index
    %c0_98 = arith.constant 0 : index
    %135 = vector.load %arg8[%c0_95, %c6_96, %c0_97, %c0_98] : memref<1x16x3x32xf32, #tpu.memory_space<vmem>>, vector<1x1x3x32xf32>
    %136 = vector.shape_cast %135 : vector<1x1x3x32xf32> to vector<3x32xf32>
    %137 = vector.shape_cast %134 : vector<3x32xf32> to vector<1x1x3x32xf32>
    tpu.vector_store %arg8[%c0_95, %c6_96, %c0_97, %c0_98], %137 {strides = array<i32>} : memref<1x16x3x32xf32, #tpu.memory_space<vmem>>, vector<1x1x3x32xf32>,
    %cst_99 = arith.constant dense<0.000000e+00> : vector<3x32xf32>
    %138 = tpu.matmul %5, %133, %cst_99 {dimension_numbers = #tpu.dot_dimension_numbers<[1], [1], [0], [0], [0, 0, 1, 0], [], []>} : vector<3x32xf32>, vector<32x32xf32>, vector<3x32xf32> -> vector<3x32xf32>
    %c0_100 = arith.constant 0 : index
    %c6_101 = arith.constant 6 : index
    %c0_102 = arith.constant 0 : index
    %c0_103 = arith.constant 0 : index
    %139 = vector.load %arg9[%c0_100, %c6_101, %c0_102, %c0_103] : memref<1x16x3x32xf32, #tpu.memory_space<vmem>>, vector<1x1x3x32xf32>
    %140 = vector.shape_cast %139 : vector<1x1x3x32xf32> to vector<3x32xf32>
    %141 = vector.shape_cast %138 : vector<3x32xf32> to vector<1x1x3x32xf32>
    tpu.vector_store %arg9[%c0_100, %c6_101, %c0_102, %c0_103], %141 {strides = array<i32>} : memref<1x16x3x32xf32, #tpu.memory_space<vmem>>, vector<1x1x3x32xf32>,
    %c2147483647_i32_104 = arith.constant 2147483647 : i32
    %142 = vector.broadcast %c2147483647_i32_104 : i32 to vector<32x32xi32>
    %143 = arith.select %131, %142, %126 : vector<32x32xi1>, vector<32x32xi32>
    %cst_105 = arith.constant dense<2147483647> : vector<32xi32>
    %144 = vector.multi_reduction <minsi>, %143, %cst_105 [1] : vector<32x32xi32> to vector<32xi32>
    %145 = vector.shape_cast %144 : vector<32xi32> to vector<32x1xi32>
    %c0_106 = arith.constant 0 : index
    %c7 = arith.constant 7 : index
    %146 = vector.load %arg10[%c0_106, %c7] : memref<32x16xi32, #tpu.memory_space<vmem>>, vector<32x1xi32>
    tpu.vector_store %arg10[%c0_106, %c7], %145 {strides = array<i32>} : memref<32x16xi32, #tpu.memory_space<vmem>>, vector<32x1xi32>,
    %147 = vector.broadcast %145 : vector<32x1xi32> to vector<32x32xi32>
    %148 = arith.cmpi eq, %143, %147 : vector<32x32xi32>
    %149 = arith.extui %148 : vector<32x32xi1> to vector<32x32xi32>
    %150 = arith.sitofp %149 : vector<32x32xi32> to vector<32x32xf32>
    %cst_107 = arith.constant dense<0.000000e+00> : vector<3x32xf32>
    %151 = tpu.matmul %3, %150, %cst_107 {dimension_numbers = #tpu.dot_dimension_numbers<[1], [1], [0], [0], [0, 0, 1, 0], [], []>} : vector<3x32xf32>, vector<32x32xf32>, vector<3x32xf32> -> vector<3x32xf32>
    %c0_108 = arith.constant 0 : index
    %c7_109 = arith.constant 7 : index
    %c0_110 = arith.constant 0 : index
    %c0_111 = arith.constant 0 : index
    %152 = vector.load %arg8[%c0_108, %c7_109, %c0_110, %c0_111] : memref<1x16x3x32xf32, #tpu.memory_space<vmem>>, vector<1x1x3x32xf32>
    %153 = vector.shape_cast %152 : vector<1x1x3x32xf32> to vector<3x32xf32>
    %154 = vector.shape_cast %151 : vector<3x32xf32> to vector<1x1x3x32xf32>
    tpu.vector_store %arg8[%c0_108, %c7_109, %c0_110, %c0_111], %154 {strides = array<i32>} : memref<1x16x3x32xf32, #tpu.memory_space<vmem>>, vector<1x1x3x32xf32>,
    %cst_112 = arith.constant dense<0.000000e+00> : vector<3x32xf32>
    %155 = tpu.matmul %5, %150, %cst_112 {dimension_numbers = #tpu.dot_dimension_numbers<[1], [1], [0], [0], [0, 0, 1, 0], [], []>} : vector<3x32xf32>, vector<32x32xf32>, vector<3x32xf32> -> vector<3x32xf32>
    %c0_113 = arith.constant 0 : index
    %c7_114 = arith.constant 7 : index
    %c0_115 = arith.constant 0 : index
    %c0_116 = arith.constant 0 : index
    %156 = vector.load %arg9[%c0_113, %c7_114, %c0_115, %c0_116] : memref<1x16x3x32xf32, #tpu.memory_space<vmem>>, vector<1x1x3x32xf32>
    %157 = vector.shape_cast %156 : vector<1x1x3x32xf32> to vector<3x32xf32>
    %158 = vector.shape_cast %155 : vector<3x32xf32> to vector<1x1x3x32xf32>
    tpu.vector_store %arg9[%c0_113, %c7_114, %c0_115, %c0_116], %158 {strides = array<i32>} : memref<1x16x3x32xf32, #tpu.memory_space<vmem>>, vector<1x1x3x32xf32>,
    %c2147483647_i32_117 = arith.constant 2147483647 : i32
    %159 = vector.broadcast %c2147483647_i32_117 : i32 to vector<32x32xi32>
    %160 = arith.select %148, %159, %143 : vector<32x32xi1>, vector<32x32xi32>
    %cst_118 = arith.constant dense<2147483647> : vector<32xi32>
    %161 = vector.multi_reduction <minsi>, %160, %cst_118 [1] : vector<32x32xi32> to vector<32xi32>
    %162 = vector.shape_cast %161 : vector<32xi32> to vector<32x1xi32>
    %c0_119 = arith.constant 0 : index
    %c8 = arith.constant 8 : index
    %163 = vector.load %arg10[%c0_119, %c8] : memref<32x16xi32, #tpu.memory_space<vmem>>, vector<32x1xi32>
    tpu.vector_store %arg10[%c0_119, %c8], %162 {strides = array<i32>} : memref<32x16xi32, #tpu.memory_space<vmem>>, vector<32x1xi32>,
    %164 = vector.broadcast %162 : vector<32x1xi32> to vector<32x32xi32>
    %165 = arith.cmpi eq, %160, %164 : vector<32x32xi32>
    %166 = arith.extui %165 : vector<32x32xi1> to vector<32x32xi32>
    %167 = arith.sitofp %166 : vector<32x32xi32> to vector<32x32xf32>
    %cst_120 = arith.constant dense<0.000000e+00> : vector<3x32xf32>
    %168 = tpu.matmul %3, %167, %cst_120 {dimension_numbers = #tpu.dot_dimension_numbers<[1], [1], [0], [0], [0, 0, 1, 0], [], []>} : vector<3x32xf32>, vector<32x32xf32>, vector<3x32xf32> -> vector<3x32xf32>
    %c0_121 = arith.constant 0 : index
    %c8_122 = arith.constant 8 : index
    %c0_123 = arith.constant 0 : index
    %c0_124 = arith.constant 0 : index
    %169 = vector.load %arg8[%c0_121, %c8_122, %c0_123, %c0_124] : memref<1x16x3x32xf32, #tpu.memory_space<vmem>>, vector<1x1x3x32xf32>
    %170 = vector.shape_cast %169 : vector<1x1x3x32xf32> to vector<3x32xf32>
    %171 = vector.shape_cast %168 : vector<3x32xf32> to vector<1x1x3x32xf32>
    tpu.vector_store %arg8[%c0_121, %c8_122, %c0_123, %c0_124], %171 {strides = array<i32>} : memref<1x16x3x32xf32, #tpu.memory_space<vmem>>, vector<1x1x3x32xf32>,
    %cst_125 = arith.constant dense<0.000000e+00> : vector<3x32xf32>
    %172 = tpu.matmul %5, %167, %cst_125 {dimension_numbers = #tpu.dot_dimension_numbers<[1], [1], [0], [0], [0, 0, 1, 0], [], []>} : vector<3x32xf32>, vector<32x32xf32>, vector<3x32xf32> -> vector<3x32xf32>
    %c0_126 = arith.constant 0 : index
    %c8_127 = arith.constant 8 : index
    %c0_128 = arith.constant 0 : index
    %c0_129 = arith.constant 0 : index
    %173 = vector.load %arg9[%c0_126, %c8_127, %c0_128, %c0_129] : memref<1x16x3x32xf32, #tpu.memory_space<vmem>>, vector<1x1x3x32xf32>
    %174 = vector.shape_cast %173 : vector<1x1x3x32xf32> to vector<3x32xf32>
    %175 = vector.shape_cast %172 : vector<3x32xf32> to vector<1x1x3x32xf32>
    tpu.vector_store %arg9[%c0_126, %c8_127, %c0_128, %c0_129], %175 {strides = array<i32>} : memref<1x16x3x32xf32, #tpu.memory_space<vmem>>, vector<1x1x3x32xf32>,
    %c2147483647_i32_130 = arith.constant 2147483647 : i32
    %176 = vector.broadcast %c2147483647_i32_130 : i32 to vector<32x32xi32>
    %177 = arith.select %165, %176, %160 : vector<32x32xi1>, vector<32x32xi32>
    %cst_131 = arith.constant dense<2147483647> : vector<32xi32>
    %178 = vector.multi_reduction <minsi>, %177, %cst_131 [1] : vector<32x32xi32> to vector<32xi32>
    %179 = vector.shape_cast %178 : vector<32xi32> to vector<32x1xi32>
    %c0_132 = arith.constant 0 : index
    %c9 = arith.constant 9 : index
    %180 = vector.load %arg10[%c0_132, %c9] : memref<32x16xi32, #tpu.memory_space<vmem>>, vector<32x1xi32>
    tpu.vector_store %arg10[%c0_132, %c9], %179 {strides = array<i32>} : memref<32x16xi32, #tpu.memory_space<vmem>>, vector<32x1xi32>,
    %181 = vector.broadcast %179 : vector<32x1xi32> to vector<32x32xi32>
    %182 = arith.cmpi eq, %177, %181 : vector<32x32xi32>
    %183 = arith.extui %182 : vector<32x32xi1> to vector<32x32xi32>
    %184 = arith.sitofp %183 : vector<32x32xi32> to vector<32x32xf32>
    %cst_133 = arith.constant dense<0.000000e+00> : vector<3x32xf32>
    %185 = tpu.matmul %3, %184, %cst_133 {dimension_numbers = #tpu.dot_dimension_numbers<[1], [1], [0], [0], [0, 0, 1, 0], [], []>} : vector<3x32xf32>, vector<32x32xf32>, vector<3x32xf32> -> vector<3x32xf32>
    %c0_134 = arith.constant 0 : index
    %c9_135 = arith.constant 9 : index
    %c0_136 = arith.constant 0 : index
    %c0_137 = arith.constant 0 : index
    %186 = vector.load %arg8[%c0_134, %c9_135, %c0_136, %c0_137] : memref<1x16x3x32xf32, #tpu.memory_space<vmem>>, vector<1x1x3x32xf32>
    %187 = vector.shape_cast %186 : vector<1x1x3x32xf32> to vector<3x32xf32>
    %188 = vector.shape_cast %185 : vector<3x32xf32> to vector<1x1x3x32xf32>
    tpu.vector_store %arg8[%c0_134, %c9_135, %c0_136, %c0_137], %188 {strides = array<i32>} : memref<1x16x3x32xf32, #tpu.memory_space<vmem>>, vector<1x1x3x32xf32>,
    %cst_138 = arith.constant dense<0.000000e+00> : vector<3x32xf32>
    %189 = tpu.matmul %5, %184, %cst_138 {dimension_numbers = #tpu.dot_dimension_numbers<[1], [1], [0], [0], [0, 0, 1, 0], [], []>} : vector<3x32xf32>, vector<32x32xf32>, vector<3x32xf32> -> vector<3x32xf32>
    %c0_139 = arith.constant 0 : index
    %c9_140 = arith.constant 9 : index
    %c0_141 = arith.constant 0 : index
    %c0_142 = arith.constant 0 : index
    %190 = vector.load %arg9[%c0_139, %c9_140, %c0_141, %c0_142] : memref<1x16x3x32xf32, #tpu.memory_space<vmem>>, vector<1x1x3x32xf32>
    %191 = vector.shape_cast %190 : vector<1x1x3x32xf32> to vector<3x32xf32>
    %192 = vector.shape_cast %189 : vector<3x32xf32> to vector<1x1x3x32xf32>
    tpu.vector_store %arg9[%c0_139, %c9_140, %c0_141, %c0_142], %192 {strides = array<i32>} : memref<1x16x3x32xf32, #tpu.memory_space<vmem>>, vector<1x1x3x32xf32>,
    %c2147483647_i32_143 = arith.constant 2147483647 : i32
    %193 = vector.broadcast %c2147483647_i32_143 : i32 to vector<32x32xi32>
    %194 = arith.select %182, %193, %177 : vector<32x32xi1>, vector<32x32xi32>
    %cst_144 = arith.constant dense<2147483647> : vector<32xi32>
    %195 = vector.multi_reduction <minsi>, %194, %cst_144 [1] : vector<32x32xi32> to vector<32xi32>
    %196 = vector.shape_cast %195 : vector<32xi32> to vector<32x1xi32>
    %c0_145 = arith.constant 0 : index
    %c10 = arith.constant 10 : index
    %197 = vector.load %arg10[%c0_145, %c10] : memref<32x16xi32, #tpu.memory_space<vmem>>, vector<32x1xi32>
    tpu.vector_store %arg10[%c0_145, %c10], %196 {strides = array<i32>} : memref<32x16xi32, #tpu.memory_space<vmem>>, vector<32x1xi32>,
    %198 = vector.broadcast %196 : vector<32x1xi32> to vector<32x32xi32>
    %199 = arith.cmpi eq, %194, %198 : vector<32x32xi32>
    %200 = arith.extui %199 : vector<32x32xi1> to vector<32x32xi32>
    %201 = arith.sitofp %200 : vector<32x32xi32> to vector<32x32xf32>
    %cst_146 = arith.constant dense<0.000000e+00> : vector<3x32xf32>
    %202 = tpu.matmul %3, %201, %cst_146 {dimension_numbers = #tpu.dot_dimension_numbers<[1], [1], [0], [0], [0, 0, 1, 0], [], []>} : vector<3x32xf32>, vector<32x32xf32>, vector<3x32xf32> -> vector<3x32xf32>
    %c0_147 = arith.constant 0 : index
    %c10_148 = arith.constant 10 : index
    %c0_149 = arith.constant 0 : index
    %c0_150 = arith.constant 0 : index
    %203 = vector.load %arg8[%c0_147, %c10_148, %c0_149, %c0_150] : memref<1x16x3x32xf32, #tpu.memory_space<vmem>>, vector<1x1x3x32xf32>
    %204 = vector.shape_cast %203 : vector<1x1x3x32xf32> to vector<3x32xf32>
    %205 = vector.shape_cast %202 : vector<3x32xf32> to vector<1x1x3x32xf32>
    tpu.vector_store %arg8[%c0_147, %c10_148, %c0_149, %c0_150], %205 {strides = array<i32>} : memref<1x16x3x32xf32, #tpu.memory_space<vmem>>, vector<1x1x3x32xf32>,
    %cst_151 = arith.constant dense<0.000000e+00> : vector<3x32xf32>
    %206 = tpu.matmul %5, %201, %cst_151 {dimension_numbers = #tpu.dot_dimension_numbers<[1], [1], [0], [0], [0, 0, 1, 0], [], []>} : vector<3x32xf32>, vector<32x32xf32>, vector<3x32xf32> -> vector<3x32xf32>
    %c0_152 = arith.constant 0 : index
    %c10_153 = arith.constant 10 : index
    %c0_154 = arith.constant 0 : index
    %c0_155 = arith.constant 0 : index
    %207 = vector.load %arg9[%c0_152, %c10_153, %c0_154, %c0_155] : memref<1x16x3x32xf32, #tpu.memory_space<vmem>>, vector<1x1x3x32xf32>
    %208 = vector.shape_cast %207 : vector<1x1x3x32xf32> to vector<3x32xf32>
    %209 = vector.shape_cast %206 : vector<3x32xf32> to vector<1x1x3x32xf32>
    tpu.vector_store %arg9[%c0_152, %c10_153, %c0_154, %c0_155], %209 {strides = array<i32>} : memref<1x16x3x32xf32, #tpu.memory_space<vmem>>, vector<1x1x3x32xf32>,
    %c2147483647_i32_156 = arith.constant 2147483647 : i32
    %210 = vector.broadcast %c2147483647_i32_156 : i32 to vector<32x32xi32>
    %211 = arith.select %199, %210, %194 : vector<32x32xi1>, vector<32x32xi32>
    %cst_157 = arith.constant dense<2147483647> : vector<32xi32>
    %212 = vector.multi_reduction <minsi>, %211, %cst_157 [1] : vector<32x32xi32> to vector<32xi32>
    %213 = vector.shape_cast %212 : vector<32xi32> to vector<32x1xi32>
    %c0_158 = arith.constant 0 : index
    %c11 = arith.constant 11 : index
    %214 = vector.load %arg10[%c0_158, %c11] : memref<32x16xi32, #tpu.memory_space<vmem>>, vector<32x1xi32>
    tpu.vector_store %arg10[%c0_158, %c11], %213 {strides = array<i32>} : memref<32x16xi32, #tpu.memory_space<vmem>>, vector<32x1xi32>,
    %215 = vector.broadcast %213 : vector<32x1xi32> to vector<32x32xi32>
    %216 = arith.cmpi eq, %211, %215 : vector<32x32xi32>
    %217 = arith.extui %216 : vector<32x32xi1> to vector<32x32xi32>
    %218 = arith.sitofp %217 : vector<32x32xi32> to vector<32x32xf32>
    %cst_159 = arith.constant dense<0.000000e+00> : vector<3x32xf32>
    %219 = tpu.matmul %3, %218, %cst_159 {dimension_numbers = #tpu.dot_dimension_numbers<[1], [1], [0], [0], [0, 0, 1, 0], [], []>} : vector<3x32xf32>, vector<32x32xf32>, vector<3x32xf32> -> vector<3x32xf32>
    %c0_160 = arith.constant 0 : index
    %c11_161 = arith.constant 11 : index
    %c0_162 = arith.constant 0 : index
    %c0_163 = arith.constant 0 : index
    %220 = vector.load %arg8[%c0_160, %c11_161, %c0_162, %c0_163] : memref<1x16x3x32xf32, #tpu.memory_space<vmem>>, vector<1x1x3x32xf32>
    %221 = vector.shape_cast %220 : vector<1x1x3x32xf32> to vector<3x32xf32>
    %222 = vector.shape_cast %219 : vector<3x32xf32> to vector<1x1x3x32xf32>
    tpu.vector_store %arg8[%c0_160, %c11_161, %c0_162, %c0_163], %222 {strides = array<i32>} : memref<1x16x3x32xf32, #tpu.memory_space<vmem>>, vector<1x1x3x32xf32>,
    %cst_164 = arith.constant dense<0.000000e+00> : vector<3x32xf32>
    %223 = tpu.matmul %5, %218, %cst_164 {dimension_numbers = #tpu.dot_dimension_numbers<[1], [1], [0], [0], [0, 0, 1, 0], [], []>} : vector<3x32xf32>, vector<32x32xf32>, vector<3x32xf32> -> vector<3x32xf32>
    %c0_165 = arith.constant 0 : index
    %c11_166 = arith.constant 11 : index
    %c0_167 = arith.constant 0 : index
    %c0_168 = arith.constant 0 : index
    %224 = vector.load %arg9[%c0_165, %c11_166, %c0_167, %c0_168] : memref<1x16x3x32xf32, #tpu.memory_space<vmem>>, vector<1x1x3x32xf32>
    %225 = vector.shape_cast %224 : vector<1x1x3x32xf32> to vector<3x32xf32>
    %226 = vector.shape_cast %223 : vector<3x32xf32> to vector<1x1x3x32xf32>
    tpu.vector_store %arg9[%c0_165, %c11_166, %c0_167, %c0_168], %226 {strides = array<i32>} : memref<1x16x3x32xf32, #tpu.memory_space<vmem>>, vector<1x1x3x32xf32>,
    %c2147483647_i32_169 = arith.constant 2147483647 : i32
    %227 = vector.broadcast %c2147483647_i32_169 : i32 to vector<32x32xi32>
    %228 = arith.select %216, %227, %211 : vector<32x32xi1>, vector<32x32xi32>
    %cst_170 = arith.constant dense<2147483647> : vector<32xi32>
    %229 = vector.multi_reduction <minsi>, %228, %cst_170 [1] : vector<32x32xi32> to vector<32xi32>
    %230 = vector.shape_cast %229 : vector<32xi32> to vector<32x1xi32>
    %c0_171 = arith.constant 0 : index
    %c12 = arith.constant 12 : index
    %231 = vector.load %arg10[%c0_171, %c12] : memref<32x16xi32, #tpu.memory_space<vmem>>, vector<32x1xi32>
    tpu.vector_store %arg10[%c0_171, %c12], %230 {strides = array<i32>} : memref<32x16xi32, #tpu.memory_space<vmem>>, vector<32x1xi32>,
    %232 = vector.broadcast %230 : vector<32x1xi32> to vector<32x32xi32>
    %233 = arith.cmpi eq, %228, %232 : vector<32x32xi32>
    %234 = arith.extui %233 : vector<32x32xi1> to vector<32x32xi32>
    %235 = arith.sitofp %234 : vector<32x32xi32> to vector<32x32xf32>
    %cst_172 = arith.constant dense<0.000000e+00> : vector<3x32xf32>
    %236 = tpu.matmul %3, %235, %cst_172 {dimension_numbers = #tpu.dot_dimension_numbers<[1], [1], [0], [0], [0, 0, 1, 0], [], []>} : vector<3x32xf32>, vector<32x32xf32>, vector<3x32xf32> -> vector<3x32xf32>
    %c0_173 = arith.constant 0 : index
    %c12_174 = arith.constant 12 : index
    %c0_175 = arith.constant 0 : index
    %c0_176 = arith.constant 0 : index
    %237 = vector.load %arg8[%c0_173, %c12_174, %c0_175, %c0_176] : memref<1x16x3x32xf32, #tpu.memory_space<vmem>>, vector<1x1x3x32xf32>
    %238 = vector.shape_cast %237 : vector<1x1x3x32xf32> to vector<3x32xf32>
    %239 = vector.shape_cast %236 : vector<3x32xf32> to vector<1x1x3x32xf32>
    tpu.vector_store %arg8[%c0_173, %c12_174, %c0_175, %c0_176], %239 {strides = array<i32>} : memref<1x16x3x32xf32, #tpu.memory_space<vmem>>, vector<1x1x3x32xf32>,
    %cst_177 = arith.constant dense<0.000000e+00> : vector<3x32xf32>
    %240 = tpu.matmul %5, %235, %cst_177 {dimension_numbers = #tpu.dot_dimension_numbers<[1], [1], [0], [0], [0, 0, 1, 0], [], []>} : vector<3x32xf32>, vector<32x32xf32>, vector<3x32xf32> -> vector<3x32xf32>
    %c0_178 = arith.constant 0 : index
    %c12_179 = arith.constant 12 : index
    %c0_180 = arith.constant 0 : index
    %c0_181 = arith.constant 0 : index
    %241 = vector.load %arg9[%c0_178, %c12_179, %c0_180, %c0_181] : memref<1x16x3x32xf32, #tpu.memory_space<vmem>>, vector<1x1x3x32xf32>
    %242 = vector.shape_cast %241 : vector<1x1x3x32xf32> to vector<3x32xf32>
    %243 = vector.shape_cast %240 : vector<3x32xf32> to vector<1x1x3x32xf32>
    tpu.vector_store %arg9[%c0_178, %c12_179, %c0_180, %c0_181], %243 {strides = array<i32>} : memref<1x16x3x32xf32, #tpu.memory_space<vmem>>, vector<1x1x3x32xf32>,
    %c2147483647_i32_182 = arith.constant 2147483647 : i32
    %244 = vector.broadcast %c2147483647_i32_182 : i32 to vector<32x32xi32>
    %245 = arith.select %233, %244, %228 : vector<32x32xi1>, vector<32x32xi32>
    %cst_183 = arith.constant dense<2147483647> : vector<32xi32>
    %246 = vector.multi_reduction <minsi>, %245, %cst_183 [1] : vector<32x32xi32> to vector<32xi32>
    %247 = vector.shape_cast %246 : vector<32xi32> to vector<32x1xi32>
    %c0_184 = arith.constant 0 : index
    %c13 = arith.constant 13 : index
    %248 = vector.load %arg10[%c0_184, %c13] : memref<32x16xi32, #tpu.memory_space<vmem>>, vector<32x1xi32>
    tpu.vector_store %arg10[%c0_184, %c13], %247 {strides = array<i32>} : memref<32x16xi32, #tpu.memory_space<vmem>>, vector<32x1xi32>,
    %249 = vector.broadcast %247 : vector<32x1xi32> to vector<32x32xi32>
    %250 = arith.cmpi eq, %245, %249 : vector<32x32xi32>
    %251 = arith.extui %250 : vector<32x32xi1> to vector<32x32xi32>
    %252 = arith.sitofp %251 : vector<32x32xi32> to vector<32x32xf32>
    %cst_185 = arith.constant dense<0.000000e+00> : vector<3x32xf32>
    %253 = tpu.matmul %3, %252, %cst_185 {dimension_numbers = #tpu.dot_dimension_numbers<[1], [1], [0], [0], [0, 0, 1, 0], [], []>} : vector<3x32xf32>, vector<32x32xf32>, vector<3x32xf32> -> vector<3x32xf32>
    %c0_186 = arith.constant 0 : index
    %c13_187 = arith.constant 13 : index
    %c0_188 = arith.constant 0 : index
    %c0_189 = arith.constant 0 : index
    %254 = vector.load %arg8[%c0_186, %c13_187, %c0_188, %c0_189] : memref<1x16x3x32xf32, #tpu.memory_space<vmem>>, vector<1x1x3x32xf32>
    %255 = vector.shape_cast %254 : vector<1x1x3x32xf32> to vector<3x32xf32>
    %256 = vector.shape_cast %253 : vector<3x32xf32> to vector<1x1x3x32xf32>
    tpu.vector_store %arg8[%c0_186, %c13_187, %c0_188, %c0_189], %256 {strides = array<i32>} : memref<1x16x3x32xf32, #tpu.memory_space<vmem>>, vector<1x1x3x32xf32>,
    %cst_190 = arith.constant dense<0.000000e+00> : vector<3x32xf32>
    %257 = tpu.matmul %5, %252, %cst_190 {dimension_numbers = #tpu.dot_dimension_numbers<[1], [1], [0], [0], [0, 0, 1, 0], [], []>} : vector<3x32xf32>, vector<32x32xf32>, vector<3x32xf32> -> vector<3x32xf32>
    %c0_191 = arith.constant 0 : index
    %c13_192 = arith.constant 13 : index
    %c0_193 = arith.constant 0 : index
    %c0_194 = arith.constant 0 : index
    %258 = vector.load %arg9[%c0_191, %c13_192, %c0_193, %c0_194] : memref<1x16x3x32xf32, #tpu.memory_space<vmem>>, vector<1x1x3x32xf32>
    %259 = vector.shape_cast %258 : vector<1x1x3x32xf32> to vector<3x32xf32>
    %260 = vector.shape_cast %257 : vector<3x32xf32> to vector<1x1x3x32xf32>
    tpu.vector_store %arg9[%c0_191, %c13_192, %c0_193, %c0_194], %260 {strides = array<i32>} : memref<1x16x3x32xf32, #tpu.memory_space<vmem>>, vector<1x1x3x32xf32>,
    %c2147483647_i32_195 = arith.constant 2147483647 : i32
    %261 = vector.broadcast %c2147483647_i32_195 : i32 to vector<32x32xi32>
    %262 = arith.select %250, %261, %245 : vector<32x32xi1>, vector<32x32xi32>
    %cst_196 = arith.constant dense<2147483647> : vector<32xi32>
    %263 = vector.multi_reduction <minsi>, %262, %cst_196 [1] : vector<32x32xi32> to vector<32xi32>
    %264 = vector.shape_cast %263 : vector<32xi32> to vector<32x1xi32>
    %c0_197 = arith.constant 0 : index
    %c14 = arith.constant 14 : index
    %265 = vector.load %arg10[%c0_197, %c14] : memref<32x16xi32, #tpu.memory_space<vmem>>, vector<32x1xi32>
    tpu.vector_store %arg10[%c0_197, %c14], %264 {strides = array<i32>} : memref<32x16xi32, #tpu.memory_space<vmem>>, vector<32x1xi32>,
    %266 = vector.broadcast %264 : vector<32x1xi32> to vector<32x32xi32>
    %267 = arith.cmpi eq, %262, %266 : vector<32x32xi32>
    %268 = arith.extui %267 : vector<32x32xi1> to vector<32x32xi32>
    %269 = arith.sitofp %268 : vector<32x32xi32> to vector<32x32xf32>
    %cst_198 = arith.constant dense<0.000000e+00> : vector<3x32xf32>
    %270 = tpu.matmul %3, %269, %cst_198 {dimension_numbers = #tpu.dot_dimension_numbers<[1], [1], [0], [0], [0, 0, 1, 0], [], []>} : vector<3x32xf32>, vector<32x32xf32>, vector<3x32xf32> -> vector<3x32xf32>
    %c0_199 = arith.constant 0 : index
    %c14_200 = arith.constant 14 : index
    %c0_201 = arith.constant 0 : index
    %c0_202 = arith.constant 0 : index
    %271 = vector.load %arg8[%c0_199, %c14_200, %c0_201, %c0_202] : memref<1x16x3x32xf32, #tpu.memory_space<vmem>>, vector<1x1x3x32xf32>
    %272 = vector.shape_cast %271 : vector<1x1x3x32xf32> to vector<3x32xf32>
    %273 = vector.shape_cast %270 : vector<3x32xf32> to vector<1x1x3x32xf32>
    tpu.vector_store %arg8[%c0_199, %c14_200, %c0_201, %c0_202], %273 {strides = array<i32>} : memref<1x16x3x32xf32, #tpu.memory_space<vmem>>, vector<1x1x3x32xf32>,
    %cst_203 = arith.constant dense<0.000000e+00> : vector<3x32xf32>
    %274 = tpu.matmul %5, %269, %cst_203 {dimension_numbers = #tpu.dot_dimension_numbers<[1], [1], [0], [0], [0, 0, 1, 0], [], []>} : vector<3x32xf32>, vector<32x32xf32>, vector<3x32xf32> -> vector<3x32xf32>
    %c0_204 = arith.constant 0 : index
    %c14_205 = arith.constant 14 : index
    %c0_206 = arith.constant 0 : index
    %c0_207 = arith.constant 0 : index
    %275 = vector.load %arg9[%c0_204, %c14_205, %c0_206, %c0_207] : memref<1x16x3x32xf32, #tpu.memory_space<vmem>>, vector<1x1x3x32xf32>
    %276 = vector.shape_cast %275 : vector<1x1x3x32xf32> to vector<3x32xf32>
    %277 = vector.shape_cast %274 : vector<3x32xf32> to vector<1x1x3x32xf32>
    tpu.vector_store %arg9[%c0_204, %c14_205, %c0_206, %c0_207], %277 {strides = array<i32>} : memref<1x16x3x32xf32, #tpu.memory_space<vmem>>, vector<1x1x3x32xf32>,
    %c2147483647_i32_208 = arith.constant 2147483647 : i32
    %278 = vector.broadcast %c2147483647_i32_208 : i32 to vector<32x32xi32>
    %279 = arith.select %267, %278, %262 : vector<32x32xi1>, vector<32x32xi32>
    %cst_209 = arith.constant dense<2147483647> : vector<32xi32>
    %280 = vector.multi_reduction <minsi>, %279, %cst_209 [1] : vector<32x32xi32> to vector<32xi32>
    %281 = vector.shape_cast %280 : vector<32xi32> to vector<32x1xi32>
    %c0_210 = arith.constant 0 : index
    %c15 = arith.constant 15 : index
    %282 = vector.load %arg10[%c0_210, %c15] : memref<32x16xi32, #tpu.memory_space<vmem>>, vector<32x1xi32>
    tpu.vector_store %arg10[%c0_210, %c15], %281 {strides = array<i32>} : memref<32x16xi32, #tpu.memory_space<vmem>>, vector<32x1xi32>,
    %283 = vector.broadcast %281 : vector<32x1xi32> to vector<32x32xi32>
    %284 = arith.cmpi eq, %279, %283 : vector<32x32xi32>
    %285 = arith.extui %284 : vector<32x32xi1> to vector<32x32xi32>
    %286 = arith.sitofp %285 : vector<32x32xi32> to vector<32x32xf32>
    %cst_211 = arith.constant dense<0.000000e+00> : vector<3x32xf32>
    %287 = tpu.matmul %3, %286, %cst_211 {dimension_numbers = #tpu.dot_dimension_numbers<[1], [1], [0], [0], [0, 0, 1, 0], [], []>} : vector<3x32xf32>, vector<32x32xf32>, vector<3x32xf32> -> vector<3x32xf32>
    %c0_212 = arith.constant 0 : index
    %c15_213 = arith.constant 15 : index
    %c0_214 = arith.constant 0 : index
    %c0_215 = arith.constant 0 : index
    %288 = vector.load %arg8[%c0_212, %c15_213, %c0_214, %c0_215] : memref<1x16x3x32xf32, #tpu.memory_space<vmem>>, vector<1x1x3x32xf32>
    %289 = vector.shape_cast %288 : vector<1x1x3x32xf32> to vector<3x32xf32>
    %290 = vector.shape_cast %287 : vector<3x32xf32> to vector<1x1x3x32xf32>
    tpu.vector_store %arg8[%c0_212, %c15_213, %c0_214, %c0_215], %290 {strides = array<i32>} : memref<1x16x3x32xf32, #tpu.memory_space<vmem>>, vector<1x1x3x32xf32>,
    %cst_216 = arith.constant dense<0.000000e+00> : vector<3x32xf32>
    %291 = tpu.matmul %5, %286, %cst_216 {dimension_numbers = #tpu.dot_dimension_numbers<[1], [1], [0], [0], [0, 0, 1, 0], [], []>} : vector<3x32xf32>, vector<32x32xf32>, vector<3x32xf32> -> vector<3x32xf32>
    %c0_217 = arith.constant 0 : index
    %c15_218 = arith.constant 15 : index
    %c0_219 = arith.constant 0 : index
    %c0_220 = arith.constant 0 : index
    %292 = vector.load %arg9[%c0_217, %c15_218, %c0_219, %c0_220] : memref<1x16x3x32xf32, #tpu.memory_space<vmem>>, vector<1x1x3x32xf32>
    %293 = vector.shape_cast %292 : vector<1x1x3x32xf32> to vector<3x32xf32>
    %294 = vector.shape_cast %291 : vector<3x32xf32> to vector<1x1x3x32xf32>
    tpu.vector_store %arg9[%c0_217, %c15_218, %c0_219, %c0_220], %294 {strides = array<i32>} : memref<1x16x3x32xf32, #tpu.memory_space<vmem>>, vector<1x1x3x32xf32>,
    %c0_221 = arith.constant 0 : index
    %c0_222 = arith.constant 0 : index
    %295 = vector.load %arg10[%c0_221, %c0_222] : memref<32x16xi32, #tpu.memory_space<vmem>>, vector<32x16xi32>
    %296 = tpu.bitcast %295 : vector<32x16xi32> -> vector<32x16xf32>
    %297 = tpu.transpose %296, [1, 0] : vector<32x16xf32> -> vector<16x32xf32>
    %298 = tpu.bitcast %297 : vector<16x32xf32> -> vector<16x32xi32>
    %c31_i32 = arith.constant 31 : i32
    %299 = vector.broadcast %c31_i32 : i32 to vector<16x32xi32>
    %300 = arith.andi %298, %299 : vector<16x32xi32>
    %c0_223 = arith.constant 0 : index
    %c0_224 = arith.constant 0 : index
    %c0_225 = arith.constant 0 : index
    %301 = vector.load %arg7[%c0_223, %c0_224, %c0_225] : memref<1x16x32xi32, #tpu.memory_space<vmem>>, vector<1x16x32xi32>
    %302 = vector.shape_cast %301 : vector<1x16x32xi32> to vector<16x32xi32>
    %303 = vector.shape_cast %300 : vector<16x32xi32> to vector<1x16x32xi32>
    tpu.vector_store %arg7[%c0_223, %c0_224, %c0_225], %303 {strides = array<i32>} : memref<1x16x32xi32, #tpu.memory_space<vmem>>, vector<1x16x32xi32>,
    %c-32_i32_226 = arith.constant -32 : i32
    %304 = vector.broadcast %c-32_i32_226 : i32 to vector<16x32xi32>
    %305 = arith.andi %298, %304 : vector<16x32xi32>
    %306 = tpu.bitcast %305 : vector<16x32xi32> -> vector<16x32xf32>
    %c0_227 = arith.constant 0 : index
    %c0_228 = arith.constant 0 : index
    %c0_229 = arith.constant 0 : index
    %307 = vector.load %arg6[%c0_227, %c0_228, %c0_229] : memref<1x16x32xf32, #tpu.memory_space<vmem>>, vector<1x16x32xf32>
    %308 = vector.shape_cast %307 : vector<1x16x32xf32> to vector<16x32xf32>
    %309 = vector.shape_cast %306 : vector<16x32xf32> to vector<1x16x32xf32>
    tpu.vector_store %arg6[%c0_227, %c0_228, %c0_229], %309 {strides = array<i32>} : memref<1x16x32xf32, #tpu.memory_space<vmem>>, vector<1x16x32xf32>,
    return
  }
  func.func @transform_0(%arg0: i32, %arg1: i32) -> (i32, i32, i32) {
    %c0_i32 = arith.constant 0 : i32
    %c0_i32_0 = arith.constant 0 : i32
    return %arg0, %arg1, %c0_i32 : i32, i32, i32
  }
  func.func @transform_1(%arg0: i32, %arg1: i32) -> (i32, i32, i32) {
    %c0_i32 = arith.constant 0 : i32
    %c0_i32_0 = arith.constant 0 : i32
    %c0_i32_1 = arith.constant 0 : i32
    return %arg0, %c0_i32, %c0_i32_0 : i32, i32, i32
  }
  func.func @transform_2(%arg0: i32, %arg1: i32) -> (i32, i32, i32) {
    %c0_i32 = arith.constant 0 : i32
    %c0_i32_0 = arith.constant 0 : i32
    %c0_i32_1 = arith.constant 0 : i32
    return %arg0, %c0_i32, %c0_i32_0 : i32, i32, i32
  }
  func.func @transform_3(%arg0: i32, %arg1: i32) -> (i32, i32, i32) {
    %c0_i32 = arith.constant 0 : i32
    %c0_i32_0 = arith.constant 0 : i32
    %c0_i32_1 = arith.constant 0 : i32
    return %arg0, %c0_i32, %c0_i32_0 : i32, i32, i32
  }
  func.func @transform_4(%arg0: i32, %arg1: i32) -> (i32, i32, i32) {
    %c0_i32 = arith.constant 0 : i32
    %c0_i32_0 = arith.constant 0 : i32
    return %arg0, %c0_i32, %arg1 : i32, i32, i32
  }
  func.func @transform_5(%arg0: i32, %arg1: i32) -> (i32, i32, i32) {
    %c0_i32 = arith.constant 0 : i32
    %c0_i32_0 = arith.constant 0 : i32
    return %arg0, %c0_i32, %arg1 : i32, i32, i32
  }
  func.func @transform_6(%arg0: i32, %arg1: i32) -> (i32, i32, i32, i32) {
    %c0_i32 = arith.constant 0 : i32
    %c0_i32_0 = arith.constant 0 : i32
    %c0_i32_1 = arith.constant 0 : i32
    return %arg0, %c0_i32, %c0_i32_0, %arg1 : i32, i32, i32, i32
  }
  func.func @transform_7(%arg0: i32, %arg1: i32) -> (i32, i32, i32, i32) {
    %c0_i32 = arith.constant 0 : i32
    %c0_i32_0 = arith.constant 0 : i32
    %c0_i32_1 = arith.constant 0 : i32
    return %arg0, %c0_i32, %c0_i32_0, %arg1 : i32, i32, i32, i32
  }
}

</mosaic_0001>

<llo_original>
// kernel: tpu_custom_call.1
$region0: #{tpu_custom_call.1}
  #allocation0 [shape = 'u32[]', space=smem, size = 0x4, offset = 0x4, fixed_abs, tag = 'smem constant byte address 0x4 - core index']
  #allocation1 [shape = 'u32[144,128]{1,0:T(1,128)}', space=vmem, size = 0x12000, scoped, tag = 'internal scratch']
  #allocation2 [shape = 's32[32,16]{1,0:T(8,128)}', space=vmem, size = 0x4000, scoped, tag = 'scratch operand']
  %s0 = inlined_call_operand.vmem [shape: f32[2,32,3], index: 0, kind: input, shape index: {}]
  %s1 = inlined_call_operand.vmem [shape: f32[2,3,32], index: 1, kind: input, shape index: {}]
  %s2 = inlined_call_operand.vmem [shape: f32[2,3,32], index: 2, kind: input, shape index: {}]
  %s3 = inlined_call_operand.vmem [shape: f32[2,1,32], index: 3, kind: input, shape index: {}]
  %s4 = inlined_call_operand.hbm [shape: f32[2,16,32], index: 4, kind: output, shape index: {0}]
  %s5 = inlined_call_operand.hbm [shape: s32[2,16,32], index: 5, kind: output, shape index: {1}]
  %s6 = inlined_call_operand.vmem [shape: f32[2,16,3,32], index: 6, kind: output, shape index: {2}]
  %s7 = inlined_call_operand.vmem [shape: f32[2,16,3,32], index: 7, kind: output, shape index: {3}]
  %8 = xla_tuple %s4, %s5, %s6, %s7
  %s9 = sld [smem:[#allocation0]]
  $region73: #{tpu_custom_call.1} parent=0
    _
  %s11 = ssub.s32 1, %s9
  %s12 = scalar_select 0, %s11, %s9
  $region1: #{tpu_custom_call.1} parent=0
    #allocation3 [shape = 'u8[16384]{0}', space=vmem, size = 0x4000, scoped, tag = 'output window, operand 0']
    #allocation4 [shape = 's32[2]{0}', space=sflag, size = 0x8, scoped, tag = 'scoped memory for tpu_custom_call.1']
    #allocation5 [shape = 'u8[16384]{0}', space=vmem, size = 0x4000, scoped, tag = 'output window, operand 1']
    #allocation6 [shape = 's32[2]{0}', space=sflag, size = 0x8, scoped, tag = 'scoped memory for tpu_custom_call.1']
    %13 = vsyncpa [#allocation4], 0
    %s14 = scalar_lea.sflag [#allocation4], 1
    %15 = vsyncpa %s14, 0
    %16 = vsyncpa [#allocation6], 0
    %s17 = scalar_lea.sflag [#allocation6], 1
    %18 = vsyncpa %s17, 0
    loop: start=0, step=1, limit=4
    $region2: #{tpu_custom_call.1} parent=1 // loop_pre_header
      _
    $region3: #{tpu_custom_call.1} parent=1 // loop_header
      %s20 = sphi 0, %s24
      %p21 = scmp.ge.s32.totalorder %s20, 4
      %s27 = sphi 0, %s39
      %s28 = sphi 0, %s35
      %s29 = sphi 0, %s27
      %s30 = sphi 0, %s28
      %s31 = sphi 0, %s29
      %s32 = sphi 0, %s30
      %s44 = sphi 0, %s46
      %s47 = sphi 0, %s44
      %s48 = sphi 0, %s47
      %s64 = sphi 0, %s48
      %s70 = sphi 0, %s72
      %s73 = sphi 0, %s70
      %s74 = sphi 0, %s73
      %s90 = sphi 0, %s74
      %s96 = sphi 0, %s98
      %s99 = sphi 0, %s96
      %s100 = sphi 0, %s99
      %s116 = sphi 0, %s100
      %s122 = sphi 0, %s124
      %s125 = sphi 0, %s122
      %s126 = sphi 0, %s125
      %s142 = sphi 0, %s126
      %s150 = sphi 0, %s152
      %s153 = sphi 0, %s150
      %s154 = sphi 0, %s153
      %s170 = sphi 0, %s154
      %s178 = sphi 0, %s180
      %s181 = sphi 0, %s178
      %s182 = sphi 0, %s181
      %s198 = sphi 0, %s182
      %s206 = sphi 0, %s208
      %s209 = sphi 0, %s206
      %s210 = sphi 0, %s209
      %s226 = sphi 0, %s210
      %s234 = sphi 0, %s236
      %s237 = sphi 0, %s234
      %s238 = sphi 0, %s237
      %s254 = sphi 0, %s238
    $region4: #{tpu_custom_call.1} parent=1 // loop_header_branch
      %23 = sbr.rel (%p21) target = $region8
    $region5: #{tpu_custom_call.1} parent=1 // loop_body
      %s25 = ssub.s32 %s20, 1
      %s26 = ssub.s32 %s20, 2
      %s33 = sadd.s32 1, %s28
      %p34 = scmp.ge.s32.totalorder %s33, 1
      %s35 = scalar_select %p34, 0, %s33
      %s36 = sadd.s32 1, %s27
      %s37 = scalar_select %p34, %s36, %s27
      %p38 = scmp.ge.s32.totalorder %s37, 2
      %s39 = scalar_select %p38, 0, %s37
      %s40 = ssub.s32 %s27, %s39
      %s41 = ssub.s32 %s28, %s35
      %s42 = sor.u32 %s40, %s41
      %p43 = scmp.eq.s32.totalorder %s42, 0
      %s45 = sadd.s32 %s44, 1
      %s46 = scalar_select %p43, %s44, %s45
      %p49 = pneg %p43
      %p50 = scmp.eq.s32.totalorder %s20, 1
      %p51 = por %p49, %p50
      %p52 = scmp.ne.s32.totalorder %s44, %s47
      %p53 = scmp.eq.s32.totalorder %s20, 0
      %p54 = por %p52, %p53
      %p55 = scmp.ne.s32.totalorder %s44, %s47
      %p56 = scmp.eq.s32.totalorder %s25, 1
      %p57 = por %p55, %p56
      %p58 = scmp.ne.s32.totalorder %s47, %s48
      %p59 = scmp.eq.s32.totalorder %s25, 0
      %p60 = por %p58, %p59
      %p61 = scmp.ne.s32.totalorder %s47, %s48
      %p62 = scmp.eq.s32.totalorder %s26, 1
      %p63 = por %p61, %p62
      %p65 = scmp.ne.s32.totalorder %s48, %s64
      %p66 = scmp.eq.s32.totalorder %s26, 0
      %p67 = por %p65, %p66
      %s68 = ssub.s32 %s27, %s39
      %p69 = scmp.eq.s32.totalorder %s68, 0
      %s71 = sadd.s32 %s70, 1
      %s72 = scalar_select %p69, %s70, %s71
      %p75 = pneg %p69
      %p76 = scmp.eq.s32.totalorder %s20, 1
      %p77 = por %p75, %p76
      %p78 = scmp.ne.s32.totalorder %s70, %s73
      %p79 = scmp.eq.s32.totalorder %s20, 0
      %p80 = por %p78, %p79
      %p81 = scmp.ne.s32.totalorder %s70, %s73
      %p82 = scmp.eq.s32.totalorder %s25, 1
      %p83 = por %p81, %p82
      %p84 = scmp.ne.s32.totalorder %s73, %s74
      %p85 = scmp.eq.s32.totalorder %s25, 0
      %p86 = por %p84, %p85
      %p87 = scmp.ne.s32.totalorder %s73, %s74
      %p88 = scmp.eq.s32.totalorder %s26, 1
      %p89 = por %p87, %p88
      %p91 = scmp.ne.s32.totalorder %s74, %s90
      %p92 = scmp.eq.s32.totalorder %s26, 0
      %p93 = por %p91, %p92
      %s94 = ssub.s32 %s27, %s39
      %p95 = scmp.eq.s32.totalorder %s94, 0
      %s97 = sadd.s32 %s96, 1
      %s98 = scalar_select %p95, %s96, %s97
      %p101 = pneg %p95
      %p102 = scmp.eq.s32.totalorder %s20, 1
      %p103 = por %p101, %p102
      %p104 = scmp.ne.s32.totalorder %s96, %s99
      %p105 = scmp.eq.s32.totalorder %s20, 0
      %p106 = por %p104, %p105
      %p107 = scmp.ne.s32.totalorder %s96, %s99
      %p108 = scmp.eq.s32.totalorder %s25, 1
      %p109 = por %p107, %p108
      %p110 = scmp.ne.s32.totalorder %s99, %s100
      %p111 = scmp.eq.s32.totalorder %s25, 0
      %p112 = por %p110, %p111
      %p113 = scmp.ne.s32.totalorder %s99, %s100
      %p114 = scmp.eq.s32.totalorder %s26, 1
      %p115 = por %p113, %p114
      %p117 = scmp.ne.s32.totalorder %s100, %s116
      %p118 = scmp.eq.s32.totalorder %s26, 0
      %p119 = por %p117, %p118
      %s120 = ssub.s32 %s27, %s39
      %p121 = scmp.eq.s32.totalorder %s120, 0
      %s123 = sadd.s32 %s122, 1
      %s124 = scalar_select %p121, %s122, %s123
      %p127 = pneg %p121
      %p128 = scmp.eq.s32.totalorder %s20, 1
      %p129 = por %p127, %p128
      %p130 = scmp.ne.s32.totalorder %s122, %s125
      %p131 = scmp.eq.s32.totalorder %s20, 0
      %p132 = por %p130, %p131
      %p133 = scmp.ne.s32.totalorder %s122, %s125
      %p134 = scmp.eq.s32.totalorder %s25, 1
      %p135 = por %p133, %p134
      %p136 = scmp.ne.s32.totalorder %s125, %s126
      %p137 = scmp.eq.s32.totalorder %s25, 0
      %p138 = por %p136, %p137
      %p139 = scmp.ne.s32.totalorder %s125, %s126
      %p140 = scmp.eq.s32.totalorder %s26, 1
      %p141 = por %p139, %p140
      %p143 = scmp.ne.s32.totalorder %s126, %s142
      %p144 = scmp.eq.s32.totalorder %s26, 0
      %p145 = por %p143, %p144
      %s146 = ssub.s32 %s27, %s39
      %s147 = ssub.s32 %s28, %s35
      %s148 = sor.u32 %s146, %s147
      %p149 = scmp.eq.s32.totalorder %s148, 0
      %s151 = sadd.s32 %s150, 1
      %s152 = scalar_select %p149, %s150, %s151
      %p155 = pneg %p149
      %p156 = scmp.eq.s32.totalorder %s20, 1
      %p157 = por %p155, %p156
      %p158 = scmp.ne.s32.totalorder %s150, %s153
      %p159 = scmp.eq.s32.totalorder %s20, 0
      %p160 = por %p158, %p159
      %p161 = scmp.ne.s32.totalorder %s150, %s153
      %p162 = scmp.eq.s32.totalorder %s25, 1
      %p163 = por %p161, %p162
      %p164 = scmp.ne.s32.totalorder %s153, %s154
      %p165 = scmp.eq.s32.totalorder %s25, 0
      %p166 = por %p164, %p165
      %p167 = scmp.ne.s32.totalorder %s153, %s154
      %p168 = scmp.eq.s32.totalorder %s26, 1
      %p169 = por %p167, %p168
      %p171 = scmp.ne.s32.totalorder %s154, %s170
      %p172 = scmp.eq.s32.totalorder %s26, 0
      %p173 = por %p171, %p172
      %s174 = ssub.s32 %s27, %s39
      %s175 = ssub.s32 %s28, %s35
      %s176 = sor.u32 %s174, %s175
      %p177 = scmp.eq.s32.totalorder %s176, 0
      %s179 = sadd.s32 %s178, 1
      %s180 = scalar_select %p177, %s178, %s179
      %p183 = pneg %p177
      %p184 = scmp.eq.s32.totalorder %s20, 1
      %p185 = por %p183, %p184
      %p186 = scmp.ne.s32.totalorder %s178, %s181
      %p187 = scmp.eq.s32.totalorder %s20, 0
      %p188 = por %p186, %p187
      %p189 = scmp.ne.s32.totalorder %s178, %s181
      %p190 = scmp.eq.s32.totalorder %s25, 1
      %p191 = por %p189, %p190
      %p192 = scmp.ne.s32.totalorder %s181, %s182
      %p193 = scmp.eq.s32.totalorder %s25, 0
      %p194 = por %p192, %p193
      %p195 = scmp.ne.s32.totalorder %s181, %s182
      %p196 = scmp.eq.s32.totalorder %s26, 1
      %p197 = por %p195, %p196
      %p199 = scmp.ne.s32.totalorder %s182, %s198
      %p200 = scmp.eq.s32.totalorder %s26, 0
      %p201 = por %p199, %p200
      %s202 = ssub.s32 %s27, %s39
      %s203 = ssub.s32 %s28, %s35
      %s204 = sor.u32 %s202, %s203
      %p205 = scmp.eq.s32.totalorder %s204, 0
      %s207 = sadd.s32 %s206, 1
      %s208 = scalar_select %p205, %s206, %s207
      %p211 = pneg %p205
      %p212 = scmp.eq.s32.totalorder %s20, 1
      %p213 = por %p211, %p212
      %p214 = scmp.ne.s32.totalorder %s206, %s209
      %p215 = scmp.eq.s32.totalorder %s20, 0
      %p216 = por %p214, %p215
      %p217 = scmp.ne.s32.totalorder %s206, %s209
      %p218 = scmp.eq.s32.totalorder %s25, 1
      %p219 = por %p217, %p218
      %p220 = scmp.ne.s32.totalorder %s209, %s210
      %p221 = scmp.eq.s32.totalorder %s25, 0
      %p222 = por %p220, %p221
      %p223 = scmp.ne.s32.totalorder %s209, %s210
      %p224 = scmp.eq.s32.totalorder %s26, 1
      %p225 = por %p223, %p224
      %p227 = scmp.ne.s32.totalorder %s210, %s226
      %p228 = scmp.eq.s32.totalorder %s26, 0
      %p229 = por %p227, %p228
      %s230 = ssub.s32 %s27, %s39
      %s231 = ssub.s32 %s28, %s35
      %s232 = sor.u32 %s230, %s231
      %p233 = scmp.eq.s32.totalorder %s232, 0
      %s235 = sadd.s32 %s234, 1
      %s236 = scalar_select %p233, %s234, %s235
      %p239 = pneg %p233
      %p240 = scmp.eq.s32.totalorder %s20, 1
      %p241 = por %p239, %p240
      %p242 = scmp.ne.s32.totalorder %s234, %s237
      %p243 = scmp.eq.s32.totalorder %s20, 0
      %p244 = por %p242, %p243
      %p245 = scmp.ne.s32.totalorder %s234, %s237
      %p246 = scmp.eq.s32.totalorder %s25, 1
      %p247 = por %p245, %p246
      %p248 = scmp.ne.s32.totalorder %s237, %s238
      %p249 = scmp.eq.s32.totalorder %s25, 0
      %p250 = por %p248, %p249
      %p251 = scmp.ne.s32.totalorder %s237, %s238
      %p252 = scmp.eq.s32.totalorder %s26, 1
      %p253 = por %p251, %p252
      %p255 = scmp.ne.s32.totalorder %s238, %s254
      %p256 = scmp.eq.s32.totalorder %s26, 0
      %p257 = por %p255, %p256
      %p258 = scmp.le.s32.totalorder 1, %s20
      %p259 = scmp.lt.s32.totalorder %s20, 3
      %p260 = pnand %p258, %p259
      %p261 = pneg %p260
      // Predicated region
      $region9: #{tpu_custom_call.1} parent=5 // pred_check
        _
      $region10: #{tpu_custom_call.1} parent=5 // pred_check_branch
        %263 = sbr.rel (%p260) target = $region12
      $region11: #{tpu_custom_call.1} parent=5 // pred_region
        %s264 = ssub.s32 %s20, 1
      $region12: #{tpu_custom_call.1} parent=5 // pred_fallthru
        _
      %p265 = scmp.lt.s32.totalorder %s20, 2
      // Predicated region
      $region13: #{tpu_custom_call.1} parent=5 // pred_check
        %p266 = pneg %p265
      $region14: #{tpu_custom_call.1} parent=5 // pred_check_branch
        %268 = sbr.rel (%p266) target = $region16
      $region15: #{tpu_custom_call.1} parent=5 // pred_region
        // Predicated region
        $region17: #{tpu_custom_call.1} parent=15 // pred_check
          %p269 = pneg %p54
        $region18: #{tpu_custom_call.1} parent=15 // pred_check_branch
          %271 = sbr.rel (%p269) target = $region20
        $region19: #{tpu_custom_call.1} parent=15 // pred_region
          %s272 = smul.u32 4, %s28
          %p273 = scmp.lt.s32.totalorder %s27, 1
          %s274 = scalar_select %p273, %s27, 1
          %p275 = scmp.lt.s32.totalorder %s272, 3
          %s276 = scalar_select %p275, %s272, 3
          %s277 = smul.addr %s274, 4
          %s278 = sadd.s32 %s276, %s277
          %s279 = smul.addr %s278, 8
          %s280 = scalar_lea.vmem %s0, %s279
          %s281 = smul.u32 4, %s28
        $region20: #{tpu_custom_call.1} parent=15 // pred_fallthru
          _
        // Predicated region
        $region21: #{tpu_custom_call.1} parent=15 // pred_check
          %p282 = pneg %p80
        $region22: #{tpu_custom_call.1} parent=15 // pred_check_branch
          %284 = sbr.rel (%p282) target = $region24
        $region23: #{tpu_custom_call.1} parent=15 // pred_region
          %p285 = scmp.lt.s32.totalorder %s27, 1
          %s286 = scalar_select %p285, %s27, 1
          %s287 = smul.addr %s286, 4
          %s288 = scalar_lea.vmem %s1, %s287
        $region24: #{tpu_custom_call.1} parent=15 // pred_fallthru
          _
        // Predicated region
        $region25: #{tpu_custom_call.1} parent=15 // pred_check
          %p289 = pneg %p106
        $region26: #{tpu_custom_call.1} parent=15 // pred_check_branch
          %291 = sbr.rel (%p289) target = $region28
        $region27: #{tpu_custom_call.1} parent=15 // pred_region
          %p292 = scmp.lt.s32.totalorder %s27, 1
          %s293 = scalar_select %p292, %s27, 1
          %s294 = smul.addr %s293, 4
          %s295 = scalar_lea.vmem %s2, %s294
        $region28: #{tpu_custom_call.1} parent=15 // pred_fallthru
          _
        // Predicated region
        $region29: #{tpu_custom_call.1} parent=15 // pred_check
          %p296 = pneg %p132
        $region30: #{tpu_custom_call.1} parent=15 // pred_check_branch
          %298 = sbr.rel (%p296) target = $region32
        $region31: #{tpu_custom_call.1} parent=15 // pred_region
          %p299 = scmp.lt.s32.totalorder %s27, 1
          %s300 = scalar_select %p299, %s27, 1
          %s301 = scalar_lea.vmem %s3, %s300
        $region32: #{tpu_custom_call.1} parent=15 // pred_fallthru
          _
      $region16: #{tpu_custom_call.1} parent=5 // pred_fallthru
        _
      %p302 = scmp.le.s32.totalorder 1, %s20
      %p303 = scmp.lt.s32.totalorder %s20, 3
      %p304 = pnand %p302, %p303
      %p305 = pneg %p304
      // Predicated region
      $region33: #{tpu_custom_call.1} parent=5 // pred_check
        _
      $region34: #{tpu_custom_call.1} parent=5 // pred_check_branch
        %307 = sbr.rel (%p304) target = $region36
      $region35: #{tpu_custom_call.1} parent=5 // pred_region
        %s308 = ssub.s32 %s20, 1
        %s309 = smul.u32 4, %s30
        %p310 = scmp.lt.s32.totalorder %s29, 1
        %s311 = scalar_select %p310, %s29, 1
        %p312 = scmp.lt.s32.totalorder %s309, 3
        %s313 = scalar_select %p312, %s309, 3
        %s314 = smul.addr %s311, 4
        %s315 = sadd.s32 %s313, %s314
        %s316 = smul.addr %s315, 8
        %s317 = scalar_lea.vmem %s0, %s316
        %p318 = pneg %p60
        %p319 = pneg %p57
        %p320 = scmp.lt.s32.totalorder %s29, 1
        %s321 = scalar_select %p320, %s29, 1
        %s322 = smul.addr %s321, 4
        %s323 = scalar_lea.vmem %s1, %s322
        %p324 = pneg %p86
        %p325 = pneg %p83
        %p326 = scmp.lt.s32.totalorder %s29, 1
        %s327 = scalar_select %p326, %s29, 1
        %s328 = smul.addr %s327, 4
        %s329 = scalar_lea.vmem %s2, %s328
        %p330 = pneg %p112
        %p331 = pneg %p109
        %p332 = scmp.lt.s32.totalorder %s29, 1
        %s333 = scalar_select %p332, %s29, 1
        %s334 = scalar_lea.vmem %s3, %s333
        %p335 = pneg %p138
        %p336 = pneg %p135
        %p337 = pneg %p166
        %p338 = pneg %p163
        %s339 = sand.u32 %s153, 1
        %s340 = scalar_lea.sflag [#allocation4], %s339
        %s341 = sand.u32 %s153, 1
        %s342 = smul.addr %s341, 16
        %s343 = scalar_lea.vmem [#allocation3], %s342
        %p344 = pneg %p194
        %p345 = pneg %p191
        %s346 = sand.u32 %s181, 1
        %s347 = scalar_lea.sflag [#allocation6], %s346
        %s348 = sand.u32 %s181, 1
        %s349 = smul.addr %s348, 16
        %s350 = scalar_lea.vmem [#allocation5], %s349
        %p351 = pneg %p222
        %p352 = pneg %p219
        %p353 = scmp.lt.s32.totalorder %s29, 1
        %s354 = scalar_select %p353, %s29, 1
        %p355 = scmp.lt.s32.totalorder %s30, 0
        %s356 = scalar_select %p355, %s30, 0
        %s357 = smul.addr %s354, 16
        %s358 = sadd.s32 %s356, %s357
        %s359 = smul.addr %s358, 4
        %s360 = scalar_lea.vmem %s6, %s359
        %p361 = pneg %p250
        %p362 = pneg %p247
        %p363 = scmp.lt.s32.totalorder %s29, 1
        %s364 = scalar_select %p363, %s29, 1
        %p365 = scmp.lt.s32.totalorder %s30, 0
        %s366 = scalar_select %p365, %s30, 0
        %s367 = smul.addr %s364, 16
        %s368 = sadd.s32 %s366, %s367
        %s369 = smul.addr %s368, 4
        %s370 = scalar_lea.vmem %s7, %s369
        %s371 = smul.u32 4, %s30
        %p372 = scmp.lt.s32.totalorder %s29, 1
        %s373 = scalar_select %p372, %s29, 1
        %p374 = scmp.lt.s32.totalorder %s371, 3
        %s375 = scalar_select %p374, %s371, 3
        %s376 = smul.addr %s373, 4
        %s377 = sadd.s32 %s375, %s376
        %s378 = smul.addr %s377, 8
        %s379 = scalar_lea.vmem %s0, %s378
        %s380 = smul.u32 4, %s30
        %p381 = scmp.lt.s32.totalorder %s29, 1
        %s382 = scalar_select %p381, %s29, 1
        %s383 = smul.addr %s382, 4
        %s384 = scalar_lea.vmem %s1, %s383
        %p385 = scmp.lt.s32.totalorder %s29, 1
        %s386 = scalar_select %p385, %s29, 1
        %s387 = smul.addr %s386, 4
        %s388 = scalar_lea.vmem %s2, %s387
        %p389 = scmp.lt.s32.totalorder %s29, 1
        %s390 = scalar_select %p389, %s29, 1
        %s391 = scalar_lea.vmem %s3, %s390
        %p392 = scmp.lt.s32.totalorder %s29, 1
        %s393 = scalar_select %p392, %s29, 1
        %p394 = scmp.lt.s32.totalorder %s30, 0
        %s395 = scalar_select %p394, %s30, 0
        %s396 = smul.addr %s393, 16
        %s397 = sadd.s32 %s395, %s396
        %s398 = smul.addr %s397, 4
        %s399 = scalar_lea.vmem %s6, %s398
        %p400 = scmp.lt.s32.totalorder %s29, 1
        %s401 = scalar_select %p400, %s29, 1
        %p402 = scmp.lt.s32.totalorder %s30, 0
        %s403 = scalar_select %p402, %s30, 0
        %s404 = smul.addr %s401, 16
        %s405 = sadd.s32 %s403, %s404
        %s406 = smul.addr %s405, 4
        %s407 = scalar_lea.vmem %s7, %s406
        %v408 = vld [vmem:[%s379] sm:$0xff]
        %v409 = vld [vmem:[%s379 + $0x8] sm:$0xff]
        %v410 = vld [vmem:[%s379 + $0x10] sm:$0xff]
        %v411 = vld [vmem:[%s379 + $0x18] sm:$0xff]
        %v412 = vld [vmem:[%s384] sm:$0x7]
        %v413 = vld [vmem:[%s388] sm:$0x7]
        %v414 = vld [vmem:[%s391] sm:$0x1]
        %vm415 = vcmask 23552
        %v417 = vsel %vm415, %v408, 0
        %v420 = vsel %vm415, %v409, 0
        %v423 = vsel %vm415, %v410, 0
        %v426 = vsel %vm415, %v411, 0
        %vm428 = vcmask 1042432
        %v430 = vsel %vm428, %v412, 0
        %432 = vmatprep.subr.mxu0 0.0
        %433 = vmatpush1.msra.mxu0 %v430
        %434 = vmatprep.subr.mxu0 0.0
        %435 = vmatpush1.msra.mxu0 0.0
        %436 = vmatprep.subr.mxu0 0.0
        %437 = vmatpush1.msra.mxu0 0.0
        %438 = vmatprep.subr.mxu0 0.0
        %439 = vmatpush1.msra.mxu0 0.0
        %440 = vmatprep.subr.mxu0 0.0
        %441 = vmatpush1.msra.mxu0 0.0
        %442 = vmatprep.subr.mxu0 0.0
        %443 = vmatpush1.msra.mxu0 0.0
        %444 = vmatprep.subr.mxu0 0.0
        %445 = vmatpush1.msra.mxu0 0.0
        %446 = vmatprep.subr.mxu0 0.0
        %447 = vmatpush1.msra.mxu0 0.0
        %448 = vmatprep.subr.mxu0 0.0
        %449 = vmatpush1.msra.mxu0 0.0
        %450 = vmatprep.subr.mxu0 0.0
        %451 = vmatpush1.msra.mxu0 0.0
        %452 = vmatprep.subr.mxu0 0.0
        %453 = vmatpush1.msra.mxu0 0.0
        %454 = vmatprep.subr.mxu0 0.0
        %455 = vmatpush1.msra.mxu0 0.0
        %456 = vmatprep.subr.mxu0 0.0
        %457 = vmatpush1.msra.mxu0 0.0
        %458 = vmatprep.subr.mxu0 0.0
        %459 = vmatpush1.msra.mxu0 0.0
        %460 = vmatprep.subr.mxu0 0.0
        %461 = vmatpush1.msra.mxu0 0.0
        %462 = vmatprep.subr.mxu0 0.0
        %463 = vmatpush1.msra.mxu0 0.0
        %464 = vmatprep.subr.mxu0 0.0
        %465 = vmatpush1.msra.mxu0 0.0
        %466 = vmatprep.subr.mxu0 0.0
        %467 = vmatpush1.msra.mxu0 0.0
        %468 = vmatprep.subr.mxu0 0.0
        %469 = vmatpush1.msra.mxu0 0.0
        %470 = vmatprep.subr.mxu0 0.0
        %471 = vmatpush1.msra.mxu0 0.0
        %472 = vmatprep.subr.mxu0 0.0
        %473 = vmatpush1.msra.mxu0 0.0
        %474 = vmatprep.subr.mxu0 0.0
        %475 = vmatpush1.msra.mxu0 0.0
        %476 = vmatprep.subr.mxu0 0.0
        %477 = vmatpush1.msra.mxu0 0.0
        %478 = vmatprep.subr.mxu0 0.0
        %479 = vmatpush1.msra.mxu0 0.0
        %480 = vmatprep.subr.mxu0 0.0
        %481 = vmatpush1.msra.mxu0 0.0
        %482 = vmatprep.subr.mxu0 0.0
        %483 = vmatpush1.msra.mxu0 0.0
        %484 = vmatprep.subr.mxu0 0.0
        %485 = vmatpush1.msra.mxu0 0.0
        %486 = vmatprep.subr.mxu0 0.0
        %487 = vmatpush1.msra.mxu0 0.0
        %488 = vmatprep.subr.mxu0 0.0
        %489 = vmatpush1.msra.mxu0 0.0
        %490 = vmatprep.subr.mxu0 0.0
        %491 = vmatpush1.msra.mxu0 0.0
        %492 = vmatprep.subr.mxu0 0.0
        %493 = vmatpush1.msra.mxu0 0.0
        %494 = vmatprep.subr.mxu0 0.0
        %495 = vmatpush1.msra.mxu0 0.0
        %496 = vmatprep.mubr.f32.mxu0 0.0
        %497 = vmatmul.mubr.f32.gmra.mrb[0].mxu0 %v417
        %v498 = vpop.f32.mrb[0].mxu0
        %v499 = vadd.f32 0.0, %v498
        %v500 = vpop.f32.mrb[0].mxu0
        %501 = vmatprep.mubr.f32.mxu0 0.0
        %502 = vmatmul.mubr.f32.gmra.mrb[0].mxu0 %v420
        %v503 = vpop.f32.mrb[0].mxu0
        %v504 = vadd.f32 0.0, %v503
        %v505 = vpop.f32.mrb[0].mxu0
        %506 = vmatprep.mubr.f32.mxu0 0.0
        %507 = vmatmul.mubr.f32.gmra.mrb[0].mxu0 %v423
        %v508 = vpop.f32.mrb[0].mxu0
        %v509 = vadd.f32 0.0, %v508
        %v510 = vpop.f32.mrb[0].mxu0
        %511 = vmatprep.mubr.f32.mxu0 0.0
        %512 = vmatmul.mubr.f32.gmra.mrb[0].mxu0 %v426
        %v513 = vpop.f32.mrb[0].mxu0
        %v514 = vadd.f32 0.0, %v513
        %v515 = vpop.f32.mrb[0].mxu0
        %516 = vdwg.mxu0
        %v517 = vmul.f32 %v408, %v408
        %v518 = vmul.f32 %v409, %v409
        %v519 = vmul.f32 %v410, %v410
        %v520 = vmul.f32 %v411, %v411
        %v521 = vsel %vm415, %v517, 0.0
        %522 = vadd.xlane.f32.xlu0 %v521
        %v523 = vpop.xlane.xlu0 %522
        %v524 = vsel %vm415, %v518, 0.0
        %525 = vadd.xlane.f32.xlu0 %v524
        %v526 = vpop.xlane.xlu0 %525
        %v527 = vsel %vm415, %v519, 0.0
        %528 = vadd.xlane.f32.xlu0 %v527
        %v529 = vpop.xlane.xlu0 %528
        %v530 = vsel %vm415, %v520, 0.0
        %531 = vadd.xlane.f32.xlu0 %v530
        %v532 = vpop.xlane.xlu0 %531
        %v534 = vlaneseq
        %v535 = vshrl.u32 %v534, 7
        %v536 = vsub.s32 0, %v535
        %v537 = vrot.slane %v414, %v536
        %v539 = vadd.f32 %v523, %v537
        %v540 = vadd.f32 %v526, %v537
        %v541 = vadd.f32 %v529, %v537
        %v542 = vadd.f32 %v532, %v537
        %v543 = vmul.f32 %v499, 2.0
        %v544 = vmul.f32 %v504, 2.0
        %v545 = vmul.f32 %v509, 2.0
        %v546 = vmul.f32 %v514, 2.0
        %v547 = vsub.f32 %v539, %v543
        %v548 = vsub.f32 %v540, %v544
        %v549 = vsub.f32 %v541, %v545
        %v550 = vsub.f32 %v542, %v546
        %v551 = vmax.f32 %v547, 0.0
        %v552 = vmax.f32 %v548, 0.0
        %v553 = vmax.f32 %v549, 0.0
        %v554 = vmax.f32 %v550, 0.0
        %v555 = vlaneseq
        %v556 = vand.u32 %v555, 127
        %v561 = vand.u32 %v551, 4294967264
        %v562 = vand.u32 %v552, 4294967264
        %v563 = vand.u32 %v553, 4294967264
        %v564 = vand.u32 %v554, 4294967264
        %v565 = vor.u32 %v561, %v556
        %v566 = vor.u32 %v562, %v556
        %v567 = vor.u32 %v563, %v556
        %v568 = vor.u32 %v564, %v556
        %vm569 = vcmask 261120
        %v570 = vsel %vm569, %v565, 2147483647
        %v571 = vand.u32 %v570, 65535
        %v572 = vshra.s32 %v570, 16
        %v573 = vcvt.s32.f32 %v571
        %v574 = vcvt.s32.f32 %v572
        %575 = vmin.xlane.f32.xlu0 %v574
        %v576 = vpop.xlane.xlu0 %575
        %vm577 = vcmp.eq.f32.partialorder %v574, %v576
        %v578 = vsel %vm577, %v573, inf
        %579 = vmin.xlane.f32.xlu0 %v578
        %v580 = vpop.xlane.xlu0 %579
        %v581 = vcvt.f32.s32 %v580
        %v582 = vcvt.f32.s32 %v576
        %v583 = vshll.u32 %v582, 16
        %v584 = vadd.s32 %v583, %v581
        %v585 = vsel %vm569, %v566, 2147483647
        %v586 = vand.u32 %v585, 65535
        %v587 = vshra.s32 %v585, 16
        %v588 = vcvt.s32.f32 %v586
        %v589 = vcvt.s32.f32 %v587
        %590 = vmin.xlane.f32.xlu0 %v589
        %v591 = vpop.xlane.xlu0 %590
        %vm592 = vcmp.eq.f32.partialorder %v589, %v591
        %v593 = vsel %vm592, %v588, inf
        %594 = vmin.xlane.f32.xlu0 %v593
        %v595 = vpop.xlane.xlu0 %594
        %v596 = vcvt.f32.s32 %v595
        %v597 = vcvt.f32.s32 %v591
        %v598 = vshll.u32 %v597, 16
        %v599 = vadd.s32 %v598, %v596
        %v600 = vsel %vm569, %v567, 2147483647
        %v601 = vand.u32 %v600, 65535
        %v602 = vshra.s32 %v600, 16
        %v603 = vcvt.s32.f32 %v601
        %v604 = vcvt.s32.f32 %v602
        %605 = vmin.xlane.f32.xlu0 %v604
        %v606 = vpop.xlane.xlu0 %605
        %vm607 = vcmp.eq.f32.partialorder %v604, %v606
        %v608 = vsel %vm607, %v603, inf
        %609 = vmin.xlane.f32.xlu0 %v608
        %v610 = vpop.xlane.xlu0 %609
        %v611 = vcvt.f32.s32 %v610
        %v612 = vcvt.f32.s32 %v606
        %v613 = vshll.u32 %v612, 16
        %v614 = vadd.s32 %v613, %v611
        %v615 = vsel %vm569, %v568, 2147483647
        %v616 = vand.u32 %v615, 65535
        %v617 = vshra.s32 %v615, 16
        %v618 = vcvt.s32.f32 %v616
        %v619 = vcvt.s32.f32 %v617
        %620 = vmin.xlane.f32.xlu0 %v619
        %v621 = vpop.xlane.xlu0 %620
        %vm622 = vcmp.eq.f32.partialorder %v619, %v621
        %v623 = vsel %vm622, %v618, inf
        %624 = vmin.xlane.f32.xlu0 %v623
        %v625 = vpop.xlane.xlu0 %624
        %v626 = vcvt.f32.s32 %v625
        %v627 = vcvt.f32.s32 %v621
        %v628 = vshll.u32 %v627, 16
        %v629 = vadd.s32 %v628, %v626
        %vm630 = vcmask 7168
        %631 = vst.msk [vmem:[#allocation2] sm:$0xff] %vm630, %v584
        %632 = vst.msk [vmem:[#allocation2 + $0x8] sm:$0xff] %vm630, %v599
        %633 = vst.msk [vmem:[#allocation2 + $0x10] sm:$0xff] %vm630, %v614
        %634 = vst.msk [vmem:[#allocation2 + $0x18] sm:$0xff] %vm630, %v629
        %vm635 = vcmp.eq.s32.totalorder %v565, %v584
        %vm636 = vcmp.eq.s32.totalorder %v566, %v599
        %vm637 = vcmp.eq.s32.totalorder %v567, %v614
        %vm638 = vcmp.eq.s32.totalorder %v568, %v629
        %v639 = vsel %vm635, 1, 0
        %v640 = vsel %vm636, 1, 0
        %v641 = vsel %vm637, 1, 0
        %v642 = vsel %vm638, 1, 0
        %v643 = vcvt.s32.f32 %v639
        %v644 = vcvt.s32.f32 %v640
        %v645 = vcvt.s32.f32 %v641
        %v646 = vcvt.s32.f32 %v642
        %v647 = vsel %vm569, %v412, 0
        %v650 = vsel %vm569, %v643, 0
        %v653 = vsel %vm569, %v644, 0
        %v656 = vsel %vm569, %v645, 0
        %v659 = vsel %vm569, %v646, 0
        %661 = vmatprep.subr.mxu0 0.0
        %662 = vmatpush1.xpose.msra.mxu0 %v650
        %663 = vmatprep.subr.mxu0 0.0
        %664 = vmatpush1.xpose.msra.mxu0 %v653
        %665 = vmatprep.subr.mxu0 0.0
        %666 = vmatpush1.xpose.msra.mxu0 %v656
        %667 = vmatprep.subr.mxu0 0.0
        %668 = vmatpush1.xpose.msra.mxu0 %v659
        %669 = vmatprep.subr.mxu0 0.0
        %670 = vmatpush1.xpose.msra.mxu0 0.0
        %671 = vmatprep.subr.mxu0 0.0
        %672 = vmatpush1.xpose.msra.mxu0 0.0
        %673 = vmatprep.subr.mxu0 0.0
        %674 = vmatpush1.xpose.msra.mxu0 0.0
        %675 = vmatprep.subr.mxu0 0.0
        %676 = vmatpush1.xpose.msra.mxu0 0.0
        %677 = vmatprep.subr.mxu0 0.0
        %678 = vmatpush1.xpose.msra.mxu0 0.0
        %679 = vmatprep.subr.mxu0 0.0
        %680 = vmatpush1.xpose.msra.mxu0 0.0
        %681 = vmatprep.subr.mxu0 0.0
        %682 = vmatpush1.xpose.msra.mxu0 0.0
        %683 = vmatprep.subr.mxu0 0.0
        %684 = vmatpush1.xpose.msra.mxu0 0.0
        %685 = vmatprep.subr.mxu0 0.0
        %686 = vmatpush1.xpose.msra.mxu0 0.0
        %687 = vmatprep.subr.mxu0 0.0
        %688 = vmatpush1.xpose.msra.mxu0 0.0
        %689 = vmatprep.subr.mxu0 0.0
        %690 = vmatpush1.xpose.msra.mxu0 0.0
        %691 = vmatprep.subr.mxu0 0.0
        %692 = vmatpush1.xpose.msra.mxu0 0.0
        %693 = vmatprep.subr.mxu0 0.0
        %694 = vmatpush1.xpose.msra.mxu0 0.0
        %695 = vmatprep.subr.mxu0 0.0
        %696 = vmatpush1.xpose.msra.mxu0 0.0
        %697 = vmatprep.subr.mxu0 0.0
        %698 = vmatpush1.xpose.msra.mxu0 0.0
        %699 = vmatprep.subr.mxu0 0.0
        %700 = vmatpush1.xpose.msra.mxu0 0.0
        %701 = vmatprep.subr.mxu0 0.0
        %702 = vmatpush1.xpose.msra.mxu0 0.0
        %703 = vmatprep.subr.mxu0 0.0
        %704 = vmatpush1.xpose.msra.mxu0 0.0
        %705 = vmatprep.subr.mxu0 0.0
        %706 = vmatpush1.xpose.msra.mxu0 0.0
        %707 = vmatprep.subr.mxu0 0.0
        %708 = vmatpush1.xpose.msra.mxu0 0.0
        %709 = vmatprep.subr.mxu0 0.0
        %710 = vmatpush1.xpose.msra.mxu0 0.0
        %711 = vmatprep.subr.mxu0 0.0
        %712 = vmatpush1.xpose.msra.mxu0 0.0
        %713 = vmatprep.subr.mxu0 0.0
        %714 = vmatpush1.xpose.msra.mxu0 0.0
        %715 = vmatprep.subr.mxu0 0.0
        %716 = vmatpush1.xpose.msra.mxu0 0.0
        %717 = vmatprep.subr.mxu0 0.0
        %718 = vmatpush1.xpose.msra.mxu0 0.0
        %719 = vmatprep.subr.mxu0 0.0
        %720 = vmatpush1.xpose.msra.mxu0 0.0
        %721 = vmatprep.subr.mxu0 0.0
        %722 = vmatpush1.xpose.msra.mxu0 0.0
        %723 = vmatprep.subr.mxu0 0.0
        %724 = vmatpush1.xpose.msra.mxu0 0.0
        %725 = vmatprep.mubr.f32.mxu0 0.0
        %726 = vmatmul.mubr.f32.gmra.mrb[0].mxu0 %v647
        %v727 = vpop.f32.mrb[0].mxu0
        %v728 = vadd.f32 0.0, %v727
        %v729 = vpop.f32.mrb[0].mxu0
        %730 = vdwg.mxu0
        %vm731 = vcmask 256000
        %732 = vst.msk [vmem:[%s399] sm:$0x7] %vm731, %v728
        %v734 = vsel %vm569, %v413, 0
        %736 = vmatprep.subr.mxu0 0.0
        %737 = vmatpush1.xpose.msra.mxu0 %v650
        %738 = vmatprep.subr.mxu0 0.0
        %739 = vmatpush1.xpose.msra.mxu0 %v653
        %740 = vmatprep.subr.mxu0 0.0
        %741 = vmatpush1.xpose.msra.mxu0 %v656
        %742 = vmatprep.subr.mxu0 0.0
        %743 = vmatpush1.xpose.msra.mxu0 %v659
        %744 = vmatprep.subr.mxu0 0.0
        %745 = vmatpush1.xpose.msra.mxu0 0.0
        %746 = vmatprep.subr.mxu0 0.0
        %747 = vmatpush1.xpose.msra.mxu0 0.0
        %748 = vmatprep.subr.mxu0 0.0
        %749 = vmatpush1.xpose.msra.mxu0 0.0
        %750 = vmatprep.subr.mxu0 0.0
        %751 = vmatpush1.xpose.msra.mxu0 0.0
        %752 = vmatprep.subr.mxu0 0.0
        %753 = vmatpush1.xpose.msra.mxu0 0.0
        %754 = vmatprep.subr.mxu0 0.0
        %755 = vmatpush1.xpose.msra.mxu0 0.0
        %756 = vmatprep.subr.mxu0 0.0
        %757 = vmatpush1.xpose.msra.mxu0 0.0
        %758 = vmatprep.subr.mxu0 0.0
        %759 = vmatpush1.xpose.msra.mxu0 0.0
        %760 = vmatprep.subr.mxu0 0.0
        %761 = vmatpush1.xpose.msra.mxu0 0.0
        %762 = vmatprep.subr.mxu0 0.0
        %763 = vmatpush1.xpose.msra.mxu0 0.0
        %764 = vmatprep.subr.mxu0 0.0
        %765 = vmatpush1.xpose.msra.mxu0 0.0
        %766 = vmatprep.subr.mxu0 0.0
        %767 = vmatpush1.xpose.msra.mxu0 0.0
        %768 = vmatprep.subr.mxu0 0.0
        %769 = vmatpush1.xpose.msra.mxu0 0.0
        %770 = vmatprep.subr.mxu0 0.0
        %771 = vmatpush1.xpose.msra.mxu0 0.0
        %772 = vmatprep.subr.mxu0 0.0
        %773 = vmatpush1.xpose.msra.mxu0 0.0
        %774 = vmatprep.subr.mxu0 0.0
        %775 = vmatpush1.xpose.msra.mxu0 0.0
        %776 = vmatprep.subr.mxu0 0.0
        %777 = vmatpush1.xpose.msra.mxu0 0.0
        %778 = vmatprep.subr.mxu0 0.0
        %779 = vmatpush1.xpose.msra.mxu0 0.0
        %780 = vmatprep.subr.mxu0 0.0
        %781 = vmatpush1.xpose.msra.mxu0 0.0
        %782 = vmatprep.subr.mxu0 0.0
        %783 = vmatpush1.xpose.msra.mxu0 0.0
        %784 = vmatprep.subr.mxu0 0.0
        %785 = vmatpush1.xpose.msra.mxu0 0.0
        %786 = vmatprep.subr.mxu0 0.0
        %787 = vmatpush1.xpose.msra.mxu0 0.0
        %788 = vmatprep.subr.mxu0 0.0
        %789 = vmatpush1.xpose.msra.mxu0 0.0
        %790 = vmatprep.subr.mxu0 0.0
        %791 = vmatpush1.xpose.msra.mxu0 0.0
        %792 = vmatprep.subr.mxu0 0.0
        %793 = vmatpush1.xpose.msra.mxu0 0.0
        %794 = vmatprep.subr.mxu0 0.0
        %795 = vmatpush1.xpose.msra.mxu0 0.0
        %796 = vmatprep.subr.mxu0 0.0
        %797 = vmatpush1.xpose.msra.mxu0 0.0
        %798 = vmatprep.subr.mxu0 0.0
        %799 = vmatpush1.xpose.msra.mxu0 0.0
        %800 = vmatprep.mubr.f32.mxu0 0.0
        %801 = vmatmul.mubr.f32.gmra.mrb[0].mxu0 %v734
        %v802 = vpop.f32.mrb[0].mxu0
        %v803 = vadd.f32 0.0, %v802
        %v804 = vpop.f32.mrb[0].mxu0
        %805 = vdwg.mxu0
        %806 = vst.msk [vmem:[%s407] sm:$0x7] %vm731, %v803
        %v807 = vsel %vm635, 2147483647, %v565
        %v808 = vsel %vm636, 2147483647, %v566
        %v809 = vsel %vm637, 2147483647, %v567
        %v810 = vsel %vm638, 2147483647, %v568
        %v811 = vsel %vm569, %v807, 2147483647
        %v812 = vand.u32 %v811, 65535
        %v813 = vshra.s32 %v811, 16
        %v814 = vcvt.s32.f32 %v812
        %v815 = vcvt.s32.f32 %v813
        %816 = vmin.xlane.f32.xlu0 %v815
        %v817 = vpop.xlane.xlu0 %816
        %vm818 = vcmp.eq.f32.partialorder %v815, %v817
        %v819 = vsel %vm818, %v814, inf
        %820 = vmin.xlane.f32.xlu0 %v819
        %v821 = vpop.xlane.xlu0 %820
        %v822 = vcvt.f32.s32 %v821
        %v823 = vcvt.f32.s32 %v817
        %v824 = vshll.u32 %v823, 16
        %v825 = vadd.s32 %v824, %v822
        %v826 = vsel %vm569, %v808, 2147483647
        %v827 = vand.u32 %v826, 65535
        %v828 = vshra.s32 %v826, 16
        %v829 = vcvt.s32.f32 %v827
        %v830 = vcvt.s32.f32 %v828
        %831 = vmin.xlane.f32.xlu0 %v830
        %v832 = vpop.xlane.xlu0 %831
        %vm833 = vcmp.eq.f32.partialorder %v830, %v832
        %v834 = vsel %vm833, %v829, inf
        %835 = vmin.xlane.f32.xlu0 %v834
        %v836 = vpop.xlane.xlu0 %835
        %v837 = vcvt.f32.s32 %v836
        %v838 = vcvt.f32.s32 %v832
        %v839 = vshll.u32 %v838, 16
        %v840 = vadd.s32 %v839, %v837
        %v841 = vsel %vm569, %v809, 2147483647
        %v842 = vand.u32 %v841, 65535
        %v843 = vshra.s32 %v841, 16
        %v844 = vcvt.s32.f32 %v842
        %v845 = vcvt.s32.f32 %v843
        %846 = vmin.xlane.f32.xlu0 %v845
        %v847 = vpop.xlane.xlu0 %846
        %vm848 = vcmp.eq.f32.partialorder %v845, %v847
        %v849 = vsel %vm848, %v844, inf
        %850 = vmin.xlane.f32.xlu0 %v849
        %v851 = vpop.xlane.xlu0 %850
        %v852 = vcvt.f32.s32 %v851
        %v853 = vcvt.f32.s32 %v847
        %v854 = vshll.u32 %v853, 16
        %v855 = vadd.s32 %v854, %v852
        %v856 = vsel %vm569, %v810, 2147483647
        %v857 = vand.u32 %v856, 65535
        %v858 = vshra.s32 %v856, 16
        %v859 = vcvt.s32.f32 %v857
        %v860 = vcvt.s32.f32 %v858
        %861 = vmin.xlane.f32.xlu0 %v860
        %v862 = vpop.xlane.xlu0 %861
        %vm863 = vcmp.eq.f32.partialorder %v860, %v862
        %v864 = vsel %vm863, %v859, inf
        %865 = vmin.xlane.f32.xlu0 %v864
        %v866 = vpop.xlane.xlu0 %865
        %v867 = vcvt.f32.s32 %v866
        %v868 = vcvt.f32.s32 %v862
        %v869 = vshll.u32 %v868, 16
        %v870 = vadd.s32 %v869, %v867
        %vm871 = vcmask 15368
        %872 = vst.msk [vmem:[#allocation2] sm:$0xff] %vm871, %v825
        %873 = vst.msk [vmem:[#allocation2 + $0x8] sm:$0xff] %vm871, %v840
        %874 = vst.msk [vmem:[#allocation2 + $0x10] sm:$0xff] %vm871, %v855
        %875 = vst.msk [vmem:[#allocation2 + $0x18] sm:$0xff] %vm871, %v870
        %vm876 = vcmp.eq.s32.totalorder %v807, %v825
        %vm877 = vcmp.eq.s32.totalorder %v808, %v840
        %vm878 = vcmp.eq.s32.totalorder %v809, %v855
        %vm879 = vcmp.eq.s32.totalorder %v810, %v870
        %v880 = vsel %vm876, 1, 0
        %v881 = vsel %vm877, 1, 0
        %v882 = vsel %vm878, 1, 0
        %v883 = vsel %vm879, 1, 0
        %v884 = vcvt.s32.f32 %v880
        %v885 = vcvt.s32.f32 %v881
        %v886 = vcvt.s32.f32 %v882
        %v887 = vcvt.s32.f32 %v883
        %v889 = vsel %vm569, %v884, 0
        %v892 = vsel %vm569, %v885, 0
        %v895 = vsel %vm569, %v886, 0
        %v898 = vsel %vm569, %v887, 0
        %900 = vmatprep.subr.mxu0 0.0
        %901 = vmatpush1.xpose.msra.mxu0 %v889
        %902 = vmatprep.subr.mxu0 0.0
        %903 = vmatpush1.xpose.msra.mxu0 %v892
        %904 = vmatprep.subr.mxu0 0.0
        %905 = vmatpush1.xpose.msra.mxu0 %v895
        %906 = vmatprep.subr.mxu0 0.0
        %907 = vmatpush1.xpose.msra.mxu0 %v898
        %908 = vmatprep.subr.mxu0 0.0
        %909 = vmatpush1.xpose.msra.mxu0 0.0
        %910 = vmatprep.subr.mxu0 0.0
        %911 = vmatpush1.xpose.msra.mxu0 0.0
        %912 = vmatprep.subr.mxu0 0.0
        %913 = vmatpush1.xpose.msra.mxu0 0.0
        %914 = vmatprep.subr.mxu0 0.0
        %915 = vmatpush1.xpose.msra.mxu0 0.0
        %916 = vmatprep.subr.mxu0 0.0
        %917 = vmatpush1.xpose.msra.mxu0 0.0
        %918 = vmatprep.subr.mxu0 0.0
        %919 = vmatpush1.xpose.msra.mxu0 0.0
        %920 = vmatprep.subr.mxu0 0.0
        %921 = vmatpush1.xpose.msra.mxu0 0.0
        %922 = vmatprep.subr.mxu0 0.0
        %923 = vmatpush1.xpose.msra.mxu0 0.0
        %924 = vmatprep.subr.mxu0 0.0
        %925 = vmatpush1.xpose.msra.mxu0 0.0
        %926 = vmatprep.subr.mxu0 0.0
        %927 = vmatpush1.xpose.msra.mxu0 0.0
        %928 = vmatprep.subr.mxu0 0.0
        %929 = vmatpush1.xpose.msra.mxu0 0.0
        %930 = vmatprep.subr.mxu0 0.0
        %931 = vmatpush1.xpose.msra.mxu0 0.0
        %932 = vmatprep.subr.mxu0 0.0
        %933 = vmatpush1.xpose.msra.mxu0 0.0
        %934 = vmatprep.subr.mxu0 0.0
        %935 = vmatpush1.xpose.msra.mxu0 0.0
        %936 = vmatprep.subr.mxu0 0.0
        %937 = vmatpush1.xpose.msra.mxu0 0.0
        %938 = vmatprep.subr.mxu0 0.0
        %939 = vmatpush1.xpose.msra.mxu0 0.0
        %940 = vmatprep.subr.mxu0 0.0
        %941 = vmatpush1.xpose.msra.mxu0 0.0
        %942 = vmatprep.subr.mxu0 0.0
        %943 = vmatpush1.xpose.msra.mxu0 0.0
        %944 = vmatprep.subr.mxu0 0.0
        %945 = vmatpush1.xpose.msra.mxu0 0.0
        %946 = vmatprep.subr.mxu0 0.0
        %947 = vmatpush1.xpose.msra.mxu0 0.0
        %948 = vmatprep.subr.mxu0 0.0
        %949 = vmatpush1.xpose.msra.mxu0 0.0
        %950 = vmatprep.subr.mxu0 0.0
        %951 = vmatpush1.xpose.msra.mxu0 0.0
        %952 = vmatprep.subr.mxu0 0.0
        %953 = vmatpush1.xpose.msra.mxu0 0.0
        %954 = vmatprep.subr.mxu0 0.0
        %955 = vmatpush1.xpose.msra.mxu0 0.0
        %956 = vmatprep.subr.mxu0 0.0
        %957 = vmatpush1.xpose.msra.mxu0 0.0
        %958 = vmatprep.subr.mxu0 0.0
        %959 = vmatpush1.xpose.msra.mxu0 0.0
        %960 = vmatprep.subr.mxu0 0.0
        %961 = vmatpush1.xpose.msra.mxu0 0.0
        %962 = vmatprep.subr.mxu0 0.0
        %963 = vmatpush1.xpose.msra.mxu0 0.0
        %964 = vmatprep.mubr.f32.mxu0 0.0
        %965 = vmatmul.mubr.f32.gmra.mrb[0].mxu0 %v647
        %v966 = vpop.f32.mrb[0].mxu0
        %v967 = vadd.f32 0.0, %v966
        %v968 = vpop.f32.mrb[0].mxu0
        %969 = vdwg.mxu0
        %s970 = scalar_lea.vmem %s399, 4
        %971 = vst.msk [vmem:[%s970] sm:$0x7] %vm731, %v967
        %972 = vmatprep.subr.mxu0 0.0
        %973 = vmatpush1.xpose.msra.mxu0 %v889
        %974 = vmatprep.subr.mxu0 0.0
        %975 = vmatpush1.xpose.msra.mxu0 %v892
        %976 = vmatprep.subr.mxu0 0.0
        %977 = vmatpush1.xpose.msra.mxu0 %v895
        %978 = vmatprep.subr.mxu0 0.0
        %979 = vmatpush1.xpose.msra.mxu0 %v898
        %980 = vmatprep.subr.mxu0 0.0
        %981 = vmatpush1.xpose.msra.mxu0 0.0
        %982 = vmatprep.subr.mxu0 0.0
        %983 = vmatpush1.xpose.msra.mxu0 0.0
        %984 = vmatprep.subr.mxu0 0.0
        %985 = vmatpush1.xpose.msra.mxu0 0.0
        %986 = vmatprep.subr.mxu0 0.0
        %987 = vmatpush1.xpose.msra.mxu0 0.0
        %988 = vmatprep.subr.mxu0 0.0
        %989 = vmatpush1.xpose.msra.mxu0 0.0
        %990 = vmatprep.subr.mxu0 0.0
        %991 = vmatpush1.xpose.msra.mxu0 0.0
        %992 = vmatprep.subr.mxu0 0.0
        %993 = vmatpush1.xpose.msra.mxu0 0.0
        %994 = vmatprep.subr.mxu0 0.0
        %995 = vmatpush1.xpose.msra.mxu0 0.0
        %996 = vmatprep.subr.mxu0 0.0
        %997 = vmatpush1.xpose.msra.mxu0 0.0
        %998 = vmatprep.subr.mxu0 0.0
        %999 = vmatpush1.xpose.msra.mxu0 0.0
        %1000 = vmatprep.subr.mxu0 0.0
        %1001 = vmatpush1.xpose.msra.mxu0 0.0
        %1002 = vmatprep.subr.mxu0 0.0
        %1003 = vmatpush1.xpose.msra.mxu0 0.0
        %1004 = vmatprep.subr.mxu0 0.0
        %1005 = vmatpush1.xpose.msra.mxu0 0.0
        %1006 = vmatprep.subr.mxu0 0.0
        %1007 = vmatpush1.xpose.msra.mxu0 0.0
        %1008 = vmatprep.subr.mxu0 0.0
        %1009 = vmatpush1.xpose.msra.mxu0 0.0
        %1010 = vmatprep.subr.mxu0 0.0
        %1011 = vmatpush1.xpose.msra.mxu0 0.0
        %1012 = vmatprep.subr.mxu0 0.0
        %1013 = vmatpush1.xpose.msra.mxu0 0.0
        %1014 = vmatprep.subr.mxu0 0.0
        %1015 = vmatpush1.xpose.msra.mxu0 0.0
        %1016 = vmatprep.subr.mxu0 0.0
        %1017 = vmatpush1.xpose.msra.mxu0 0.0
        %1018 = vmatprep.subr.mxu0 0.0
        %1019 = vmatpush1.xpose.msra.mxu0 0.0
        %1020 = vmatprep.subr.mxu0 0.0
        %1021 = vmatpush1.xpose.msra.mxu0 0.0
        %1022 = vmatprep.subr.mxu0 0.0
        %1023 = vmatpush1.xpose.msra.mxu0 0.0
        %1024 = vmatprep.subr.mxu0 0.0
        %1025 = vmatpush1.xpose.msra.mxu0 0.0
        %1026 = vmatprep.subr.mxu0 0.0
        %1027 = vmatpush1.xpose.msra.mxu0 0.0
        %1028 = vmatprep.subr.mxu0 0.0
        %1029 = vmatpush1.xpose.msra.mxu0 0.0
        %1030 = vmatprep.subr.mxu0 0.0
        %1031 = vmatpush1.xpose.msra.mxu0 0.0
        %1032 = vmatprep.subr.mxu0 0.0
        %1033 = vmatpush1.xpose.msra.mxu0 0.0
        %1034 = vmatprep.subr.mxu0 0.0
        %1035 = vmatpush1.xpose.msra.mxu0 0.0
        %1036 = vmatprep.mubr.f32.mxu0 0.0
        %1037 = vmatmul.mubr.f32.gmra.mrb[0].mxu0 %v734
        %v1038 = vpop.f32.mrb[0].mxu0
        %v1039 = vadd.f32 0.0, %v1038
        %v1040 = vpop.f32.mrb[0].mxu0
        %1041 = vdwg.mxu0
        %s1042 = scalar_lea.vmem %s407, 4
        %1043 = vst.msk [vmem:[%s1042] sm:$0x7] %vm731, %v1039
        %v1044 = vsel %vm876, 2147483647, %v807
        %v1045 = vsel %vm877, 2147483647, %v808
        %v1046 = vsel %vm878, 2147483647, %v809
        %v1047 = vsel %vm879, 2147483647, %v810
        %v1048 = vsel %vm569, %v1044, 2147483647
        %v1049 = vand.u32 %v1048, 65535
        %v1050 = vshra.s32 %v1048, 16
        %v1051 = vcvt.s32.f32 %v1049
        %v1052 = vcvt.s32.f32 %v1050
        %1053 = vmin.xlane.f32.xlu0 %v1052
        %v1054 = vpop.xlane.xlu0 %1053
        %vm1055 = vcmp.eq.f32.partialorder %v1052, %v1054
        %v1056 = vsel %vm1055, %v1051, inf
        %1057 = vmin.xlane.f32.xlu0 %v1056
        %v1058 = vpop.xlane.xlu0 %1057
        %v1059 = vcvt.f32.s32 %v1058
        %v1060 = vcvt.f32.s32 %v1054
        %v1061 = vshll.u32 %v1060, 16
        %v1062 = vadd.s32 %v1061, %v1059
        %v1063 = vsel %vm569, %v1045, 2147483647
        %v1064 = vand.u32 %v1063, 65535
        %v1065 = vshra.s32 %v1063, 16
        %v1066 = vcvt.s32.f32 %v1064
        %v1067 = vcvt.s32.f32 %v1065
        %1068 = vmin.xlane.f32.xlu0 %v1067
        %v1069 = vpop.xlane.xlu0 %1068
        %vm1070 = vcmp.eq.f32.partialorder %v1067, %v1069
        %v1071 = vsel %vm1070, %v1066, inf
        %1072 = vmin.xlane.f32.xlu0 %v1071
        %v1073 = vpop.xlane.xlu0 %1072
        %v1074 = vcvt.f32.s32 %v1073
        %v1075 = vcvt.f32.s32 %v1069
        %v1076 = vshll.u32 %v1075, 16
        %v1077 = vadd.s32 %v1076, %v1074
        %v1078 = vsel %vm569, %v1046, 2147483647
        %v1079 = vand.u32 %v1078, 65535
        %v1080 = vshra.s32 %v1078, 16
        %v1081 = vcvt.s32.f32 %v1079
        %v1082 = vcvt.s32.f32 %v1080
        %1083 = vmin.xlane.f32.xlu0 %v1082
        %v1084 = vpop.xlane.xlu0 %1083
        %vm1085 = vcmp.eq.f32.partialorder %v1082, %v1084
        %v1086 = vsel %vm1085, %v1081, inf
        %1087 = vmin.xlane.f32.xlu0 %v1086
        %v1088 = vpop.xlane.xlu0 %1087
        %v1089 = vcvt.f32.s32 %v1088
        %v1090 = vcvt.f32.s32 %v1084
        %v1091 = vshll.u32 %v1090, 16
        %v1092 = vadd.s32 %v1091, %v1089
        %v1093 = vsel %vm569, %v1047, 2147483647
        %v1094 = vand.u32 %v1093, 65535
        %v1095 = vshra.s32 %v1093, 16
        %v1096 = vcvt.s32.f32 %v1094
        %v1097 = vcvt.s32.f32 %v1095
        %1098 = vmin.xlane.f32.xlu0 %v1097
        %v1099 = vpop.xlane.xlu0 %1098
        %vm1100 = vcmp.eq.f32.partialorder %v1097, %v1099
        %v1101 = vsel %vm1100, %v1096, inf
        %1102 = vmin.xlane.f32.xlu0 %v1101
        %v1103 = vpop.xlane.xlu0 %1102
        %v1104 = vcvt.f32.s32 %v1103
        %v1105 = vcvt.f32.s32 %v1099
        %v1106 = vshll.u32 %v1105, 16
        %v1107 = vadd.s32 %v1106, %v1104
        %vm1108 = vcmask 23568
        %1109 = vst.msk [vmem:[#allocation2] sm:$0xff] %vm1108, %v1062
        %1110 = vst.msk [vmem:[#allocation2 + $0x8] sm:$0xff] %vm1108, %v1077
        %1111 = vst.msk [vmem:[#allocation2 + $0x10] sm:$0xff] %vm1108, %v1092
        %1112 = vst.msk [vmem:[#allocation2 + $0x18] sm:$0xff] %vm1108, %v1107
        %vm1113 = vcmp.eq.s32.totalorder %v1044, %v1062
        %vm1114 = vcmp.eq.s32.totalorder %v1045, %v1077
        %vm1115 = vcmp.eq.s32.totalorder %v1046, %v1092
        %vm1116 = vcmp.eq.s32.totalorder %v1047, %v1107
        %v1117 = vsel %vm1113, 1, 0
        %v1118 = vsel %vm1114, 1, 0
        %v1119 = vsel %vm1115, 1, 0
        %v1120 = vsel %vm1116, 1, 0
        %v1121 = vcvt.s32.f32 %v1117
        %v1122 = vcvt.s32.f32 %v1118
        %v1123 = vcvt.s32.f32 %v1119
        %v1124 = vcvt.s32.f32 %v1120
        %v1126 = vsel %vm569, %v1121, 0
        %v1129 = vsel %vm569, %v1122, 0
        %v1132 = vsel %vm569, %v1123, 0
        %v1135 = vsel %vm569, %v1124, 0
        %1137 = vmatprep.subr.mxu0 0.0
        %1138 = vmatpush1.xpose.msra.mxu0 %v1126
        %1139 = vmatprep.subr.mxu0 0.0
        %1140 = vmatpush1.xpose.msra.mxu0 %v1129
        %1141 = vmatprep.subr.mxu0 0.0
        %1142 = vmatpush1.xpose.msra.mxu0 %v1132
        %1143 = vmatprep.subr.mxu0 0.0
        %1144 = vmatpush1.xpose.msra.mxu0 %v1135
        %1145 = vmatprep.subr.mxu0 0.0
        %1146 = vmatpush1.xpose.msra.mxu0 0.0
        %1147 = vmatprep.subr.mxu0 0.0
        %1148 = vmatpush1.xpose.msra.mxu0 0.0
        %1149 = vmatprep.subr.mxu0 0.0
        %1150 = vmatpush1.xpose.msra.mxu0 0.0
        %1151 = vmatprep.subr.mxu0 0.0
        %1152 = vmatpush1.xpose.msra.mxu0 0.0
        %1153 = vmatprep.subr.mxu0 0.0
        %1154 = vmatpush1.xpose.msra.mxu0 0.0
        %1155 = vmatprep.subr.mxu0 0.0
        %1156 = vmatpush1.xpose.msra.mxu0 0.0
        %1157 = vmatprep.subr.mxu0 0.0
        %1158 = vmatpush1.xpose.msra.mxu0 0.0
        %1159 = vmatprep.subr.mxu0 0.0
        %1160 = vmatpush1.xpose.msra.mxu0 0.0
        %1161 = vmatprep.subr.mxu0 0.0
        %1162 = vmatpush1.xpose.msra.mxu0 0.0
        %1163 = vmatprep.subr.mxu0 0.0
        %1164 = vmatpush1.xpose.msra.mxu0 0.0
        %1165 = vmatprep.subr.mxu0 0.0
        %1166 = vmatpush1.xpose.msra.mxu0 0.0
        %1167 = vmatprep.subr.mxu0 0.0
        %1168 = vmatpush1.xpose.msra.mxu0 0.0
        %1169 = vmatprep.subr.mxu0 0.0
        %1170 = vmatpush1.xpose.msra.mxu0 0.0
        %1171 = vmatprep.subr.mxu0 0.0
        %1172 = vmatpush1.xpose.msra.mxu0 0.0
        %1173 = vmatprep.subr.mxu0 0.0
        %1174 = vmatpush1.xpose.msra.mxu0 0.0
        %1175 = vmatprep.subr.mxu0 0.0
        %1176 = vmatpush1.xpose.msra.mxu0 0.0
        %1177 = vmatprep.subr.mxu0 0.0
        %1178 = vmatpush1.xpose.msra.mxu0 0.0
        %1179 = vmatprep.subr.mxu0 0.0
        %1180 = vmatpush1.xpose.msra.mxu0 0.0
        %1181 = vmatprep.subr.mxu0 0.0
        %1182 = vmatpush1.xpose.msra.mxu0 0.0
        %1183 = vmatprep.subr.mxu0 0.0
        %1184 = vmatpush1.xpose.msra.mxu0 0.0
        %1185 = vmatprep.subr.mxu0 0.0
        %1186 = vmatpush1.xpose.msra.mxu0 0.0
        %1187 = vmatprep.subr.mxu0 0.0
        %1188 = vmatpush1.xpose.msra.mxu0 0.0
        %1189 = vmatprep.subr.mxu0 0.0
        %1190 = vmatpush1.xpose.msra.mxu0 0.0
        %1191 = vmatprep.subr.mxu0 0.0
        %1192 = vmatpush1.xpose.msra.mxu0 0.0
        %1193 = vmatprep.subr.mxu0 0.0
        %1194 = vmatpush1.xpose.msra.mxu0 0.0
        %1195 = vmatprep.subr.mxu0 0.0
        %1196 = vmatpush1.xpose.msra.mxu0 0.0
        %1197 = vmatprep.subr.mxu0 0.0
        %1198 = vmatpush1.xpose.msra.mxu0 0.0
        %1199 = vmatprep.subr.mxu0 0.0
        %1200 = vmatpush1.xpose.msra.mxu0 0.0
        %1201 = vmatprep.mubr.f32.mxu0 0.0
        %1202 = vmatmul.mubr.f32.gmra.mrb[0].mxu0 %v647
        %v1203 = vpop.f32.mrb[0].mxu0
        %v1204 = vadd.f32 0.0, %v1203
        %v1205 = vpop.f32.mrb[0].mxu0
        %1206 = vdwg.mxu0
        %s1207 = scalar_lea.vmem %s399, 8
        %1208 = vst.msk [vmem:[%s1207] sm:$0x7] %vm731, %v1204
        %1209 = vmatprep.subr.mxu0 0.0
        %1210 = vmatpush1.xpose.msra.mxu0 %v1126
        %1211 = vmatprep.subr.mxu0 0.0
        %1212 = vmatpush1.xpose.msra.mxu0 %v1129
        %1213 = vmatprep.subr.mxu0 0.0
        %1214 = vmatpush1.xpose.msra.mxu0 %v1132
        %1215 = vmatprep.subr.mxu0 0.0
        %1216 = vmatpush1.xpose.msra.mxu0 %v1135
        %1217 = vmatprep.subr.mxu0 0.0
        %1218 = vmatpush1.xpose.msra.mxu0 0.0
        %1219 = vmatprep.subr.mxu0 0.0
        %1220 = vmatpush1.xpose.msra.mxu0 0.0
        %1221 = vmatprep.subr.mxu0 0.0
        %1222 = vmatpush1.xpose.msra.mxu0 0.0
        %1223 = vmatprep.subr.mxu0 0.0
        %1224 = vmatpush1.xpose.msra.mxu0 0.0
        %1225 = vmatprep.subr.mxu0 0.0
        %1226 = vmatpush1.xpose.msra.mxu0 0.0
        %1227 = vmatprep.subr.mxu0 0.0
        %1228 = vmatpush1.xpose.msra.mxu0 0.0
        %1229 = vmatprep.subr.mxu0 0.0
        %1230 = vmatpush1.xpose.msra.mxu0 0.0
        %1231 = vmatprep.subr.mxu0 0.0
        %1232 = vmatpush1.xpose.msra.mxu0 0.0
        %1233 = vmatprep.subr.mxu0 0.0
        %1234 = vmatpush1.xpose.msra.mxu0 0.0
        %1235 = vmatprep.subr.mxu0 0.0
        %1236 = vmatpush1.xpose.msra.mxu0 0.0
        %1237 = vmatprep.subr.mxu0 0.0
        %1238 = vmatpush1.xpose.msra.mxu0 0.0
        %1239 = vmatprep.subr.mxu0 0.0
        %1240 = vmatpush1.xpose.msra.mxu0 0.0
        %1241 = vmatprep.subr.mxu0 0.0
        %1242 = vmatpush1.xpose.msra.mxu0 0.0
        %1243 = vmatprep.subr.mxu0 0.0
        %1244 = vmatpush1.xpose.msra.mxu0 0.0
        %1245 = vmatprep.subr.mxu0 0.0
        %1246 = vmatpush1.xpose.msra.mxu0 0.0
        %1247 = vmatprep.subr.mxu0 0.0
        %1248 = vmatpush1.xpose.msra.mxu0 0.0
        %1249 = vmatprep.subr.mxu0 0.0
        %1250 = vmatpush1.xpose.msra.mxu0 0.0
        %1251 = vmatprep.subr.mxu0 0.0
        %1252 = vmatpush1.xpose.msra.mxu0 0.0
        %1253 = vmatprep.subr.mxu0 0.0
        %1254 = vmatpush1.xpose.msra.mxu0 0.0
        %1255 = vmatprep.subr.mxu0 0.0
        %1256 = vmatpush1.xpose.msra.mxu0 0.0
        %1257 = vmatprep.subr.mxu0 0.0
        %1258 = vmatpush1.xpose.msra.mxu0 0.0
        %1259 = vmatprep.subr.mxu0 0.0
        %1260 = vmatpush1.xpose.msra.mxu0 0.0
        %1261 = vmatprep.subr.mxu0 0.0
        %1262 = vmatpush1.xpose.msra.mxu0 0.0
        %1263 = vmatprep.subr.mxu0 0.0
        %1264 = vmatpush1.xpose.msra.mxu0 0.0
        %1265 = vmatprep.subr.mxu0 0.0
        %1266 = vmatpush1.xpose.msra.mxu0 0.0
        %1267 = vmatprep.subr.mxu0 0.0
        %1268 = vmatpush1.xpose.msra.mxu0 0.0
        %1269 = vmatprep.subr.mxu0 0.0
        %1270 = vmatpush1.xpose.msra.mxu0 0.0
        %1271 = vmatprep.subr.mxu0 0.0
        %1272 = vmatpush1.xpose.msra.mxu0 0.0
        %1273 = vmatprep.mubr.f32.mxu0 0.0
        %1274 = vmatmul.mubr.f32.gmra.mrb[0].mxu0 %v734
        %v1275 = vpop.f32.mrb[0].mxu0
        %v1276 = vadd.f32 0.0, %v1275
        %v1277 = vpop.f32.mrb[0].mxu0
        %1278 = vdwg.mxu0
        %s1279 = scalar_lea.vmem %s407, 8
        %1280 = vst.msk [vmem:[%s1279] sm:$0x7] %vm731, %v1276
        %v1281 = vsel %vm1113, 2147483647, %v1044
        %v1282 = vsel %vm1114, 2147483647, %v1045
        %v1283 = vsel %vm1115, 2147483647, %v1046
        %v1284 = vsel %vm1116, 2147483647, %v1047
        %v1285 = vsel %vm569, %v1281, 2147483647
        %v1286 = vand.u32 %v1285, 65535
        %v1287 = vshra.s32 %v1285, 16
        %v1288 = vcvt.s32.f32 %v1286
        %v1289 = vcvt.s32.f32 %v1287
        %1290 = vmin.xlane.f32.xlu0 %v1289
        %v1291 = vpop.xlane.xlu0 %1290
        %vm1292 = vcmp.eq.f32.partialorder %v1289, %v1291
        %v1293 = vsel %vm1292, %v1288, inf
        %1294 = vmin.xlane.f32.xlu0 %v1293
        %v1295 = vpop.xlane.xlu0 %1294
        %v1296 = vcvt.f32.s32 %v1295
        %v1297 = vcvt.f32.s32 %v1291
        %v1298 = vshll.u32 %v1297, 16
        %v1299 = vadd.s32 %v1298, %v1296
        %v1300 = vsel %vm569, %v1282, 2147483647
        %v1301 = vand.u32 %v1300, 65535
        %v1302 = vshra.s32 %v1300, 16
        %v1303 = vcvt.s32.f32 %v1301
        %v1304 = vcvt.s32.f32 %v1302
        %1305 = vmin.xlane.f32.xlu0 %v1304
        %v1306 = vpop.xlane.xlu0 %1305
        %vm1307 = vcmp.eq.f32.partialorder %v1304, %v1306
        %v1308 = vsel %vm1307, %v1303, inf
        %1309 = vmin.xlane.f32.xlu0 %v1308
        %v1310 = vpop.xlane.xlu0 %1309
        %v1311 = vcvt.f32.s32 %v1310
        %v1312 = vcvt.f32.s32 %v1306
        %v1313 = vshll.u32 %v1312, 16
        %v1314 = vadd.s32 %v1313, %v1311
        %v1315 = vsel %vm569, %v1283, 2147483647
        %v1316 = vand.u32 %v1315, 65535
        %v1317 = vshra.s32 %v1315, 16
        %v1318 = vcvt.s32.f32 %v1316
        %v1319 = vcvt.s32.f32 %v1317
        %1320 = vmin.xlane.f32.xlu0 %v1319
        %v1321 = vpop.xlane.xlu0 %1320
        %vm1322 = vcmp.eq.f32.partialorder %v1319, %v1321
        %v1323 = vsel %vm1322, %v1318, inf
        %1324 = vmin.xlane.f32.xlu0 %v1323
        %v1325 = vpop.xlane.xlu0 %1324
        %v1326 = vcvt.f32.s32 %v1325
        %v1327 = vcvt.f32.s32 %v1321
        %v1328 = vshll.u32 %v1327, 16
        %v1329 = vadd.s32 %v1328, %v1326
        %v1330 = vsel %vm569, %v1284, 2147483647
        %v1331 = vand.u32 %v1330, 65535
        %v1332 = vshra.s32 %v1330, 16
        %v1333 = vcvt.s32.f32 %v1331
        %v1334 = vcvt.s32.f32 %v1332
        %1335 = vmin.xlane.f32.xlu0 %v1334
        %v1336 = vpop.xlane.xlu0 %1335
        %vm1337 = vcmp.eq.f32.partialorder %v1334, %v1336
        %v1338 = vsel %vm1337, %v1333, inf
        %1339 = vmin.xlane.f32.xlu0 %v1338
        %v1340 = vpop.xlane.xlu0 %1339
        %v1341 = vcvt.f32.s32 %v1340
        %v1342 = vcvt.f32.s32 %v1336
        %v1343 = vshll.u32 %v1342, 16
        %v1344 = vadd.s32 %v1343, %v1341
        %vm1345 = vcmask 31768
        %1346 = vst.msk [vmem:[#allocation2] sm:$0xff] %vm1345, %v1299
        %1347 = vst.msk [vmem:[#allocation2 + $0x8] sm:$0xff] %vm1345, %v1314
        %1348 = vst.msk [vmem:[#allocation2 + $0x10] sm:$0xff] %vm1345, %v1329
        %1349 = vst.msk [vmem:[#allocation2 + $0x18] sm:$0xff] %vm1345, %v1344
        %vm1350 = vcmp.eq.s32.totalorder %v1281, %v1299
        %vm1351 = vcmp.eq.s32.totalorder %v1282, %v1314
        %vm1352 = vcmp.eq.s32.totalorder %v1283, %v1329
        %vm1353 = vcmp.eq.s32.totalorder %v1284, %v1344
        %v1354 = vsel %vm1350, 1, 0
        %v1355 = vsel %vm1351, 1, 0
        %v1356 = vsel %vm1352, 1, 0
        %v1357 = vsel %vm1353, 1, 0
        %v1358 = vcvt.s32.f32 %v1354
        %v1359 = vcvt.s32.f32 %v1355
        %v1360 = vcvt.s32.f32 %v1356
        %v1361 = vcvt.s32.f32 %v1357
        %v1363 = vsel %vm569, %v1358, 0
        %v1366 = vsel %vm569, %v1359, 0
        %v1369 = vsel %vm569, %v1360, 0
        %v1372 = vsel %vm569, %v1361, 0
        %1374 = vmatprep.subr.mxu0 0.0
        %1375 = vmatpush1.xpose.msra.mxu0 %v1363
        %1376 = vmatprep.subr.mxu0 0.0
        %1377 = vmatpush1.xpose.msra.mxu0 %v1366
        %1378 = vmatprep.subr.mxu0 0.0
        %1379 = vmatpush1.xpose.msra.mxu0 %v1369
        %1380 = vmatprep.subr.mxu0 0.0
        %1381 = vmatpush1.xpose.msra.mxu0 %v1372
        %1382 = vmatprep.subr.mxu0 0.0
        %1383 = vmatpush1.xpose.msra.mxu0 0.0
        %1384 = vmatprep.subr.mxu0 0.0
        %1385 = vmatpush1.xpose.msra.mxu0 0.0
        %1386 = vmatprep.subr.mxu0 0.0
        %1387 = vmatpush1.xpose.msra.mxu0 0.0
        %1388 = vmatprep.subr.mxu0 0.0
        %1389 = vmatpush1.xpose.msra.mxu0 0.0
        %1390 = vmatprep.subr.mxu0 0.0
        %1391 = vmatpush1.xpose.msra.mxu0 0.0
        %1392 = vmatprep.subr.mxu0 0.0
        %1393 = vmatpush1.xpose.msra.mxu0 0.0
        %1394 = vmatprep.subr.mxu0 0.0
        %1395 = vmatpush1.xpose.msra.mxu0 0.0
        %1396 = vmatprep.subr.mxu0 0.0
        %1397 = vmatpush1.xpose.msra.mxu0 0.0
        %1398 = vmatprep.subr.mxu0 0.0
        %1399 = vmatpush1.xpose.msra.mxu0 0.0
        %1400 = vmatprep.subr.mxu0 0.0
        %1401 = vmatpush1.xpose.msra.mxu0 0.0
        %1402 = vmatprep.subr.mxu0 0.0
        %1403 = vmatpush1.xpose.msra.mxu0 0.0
        %1404 = vmatprep.subr.mxu0 0.0
        %1405 = vmatpush1.xpose.msra.mxu0 0.0
        %1406 = vmatprep.subr.mxu0 0.0
        %1407 = vmatpush1.xpose.msra.mxu0 0.0
        %1408 = vmatprep.subr.mxu0 0.0
        %1409 = vmatpush1.xpose.msra.mxu0 0.0
        %1410 = vmatprep.subr.mxu0 0.0
        %1411 = vmatpush1.xpose.msra.mxu0 0.0
        %1412 = vmatprep.subr.mxu0 0.0
        %1413 = vmatpush1.xpose.msra.mxu0 0.0
        %1414 = vmatprep.subr.mxu0 0.0
        %1415 = vmatpush1.xpose.msra.mxu0 0.0
        %1416 = vmatprep.subr.mxu0 0.0
        %1417 = vmatpush1.xpose.msra.mxu0 0.0
        %1418 = vmatprep.subr.mxu0 0.0
        %1419 = vmatpush1.xpose.msra.mxu0 0.0
        %1420 = vmatprep.subr.mxu0 0.0
        %1421 = vmatpush1.xpose.msra.mxu0 0.0
        %1422 = vmatprep.subr.mxu0 0.0
        %1423 = vmatpush1.xpose.msra.mxu0 0.0
        %1424 = vmatprep.subr.mxu0 0.0
        %1425 = vmatpush1.xpose.msra.mxu0 0.0
        %1426 = vmatprep.subr.mxu0 0.0
        %1427 = vmatpush1.xpose.msra.mxu0 0.0
        %1428 = vmatprep.subr.mxu0 0.0
        %1429 = vmatpush1.xpose.msra.mxu0 0.0
        %1430 = vmatprep.subr.mxu0 0.0
        %1431 = vmatpush1.xpose.msra.mxu0 0.0
        %1432 = vmatprep.subr.mxu0 0.0
        %1433 = vmatpush1.xpose.msra.mxu0 0.0
        %1434 = vmatprep.subr.mxu0 0.0
        %1435 = vmatpush1.xpose.msra.mxu0 0.0
        %1436 = vmatprep.subr.mxu0 0.0
        %1437 = vmatpush1.xpose.msra.mxu0 0.0
        %1438 = vmatprep.mubr.f32.mxu0 0.0
        %1439 = vmatmul.mubr.f32.gmra.mrb[0].mxu0 %v647
        %v1440 = vpop.f32.mrb[0].mxu0
        %v1441 = vadd.f32 0.0, %v1440
        %v1442 = vpop.f32.mrb[0].mxu0
        %1443 = vdwg.mxu0
        %s1444 = scalar_lea.vmem %s399, 12
        %1445 = vst.msk [vmem:[%s1444] sm:$0x7] %vm731, %v1441
        %1446 = vmatprep.subr.mxu0 0.0
        %1447 = vmatpush1.xpose.msra.mxu0 %v1363
        %1448 = vmatprep.subr.mxu0 0.0
        %1449 = vmatpush1.xpose.msra.mxu0 %v1366
        %1450 = vmatprep.subr.mxu0 0.0
        %1451 = vmatpush1.xpose.msra.mxu0 %v1369
        %1452 = vmatprep.subr.mxu0 0.0
        %1453 = vmatpush1.xpose.msra.mxu0 %v1372
        %1454 = vmatprep.subr.mxu0 0.0
        %1455 = vmatpush1.xpose.msra.mxu0 0.0
        %1456 = vmatprep.subr.mxu0 0.0
        %1457 = vmatpush1.xpose.msra.mxu0 0.0
        %1458 = vmatprep.subr.mxu0 0.0
        %1459 = vmatpush1.xpose.msra.mxu0 0.0
        %1460 = vmatprep.subr.mxu0 0.0
        %1461 = vmatpush1.xpose.msra.mxu0 0.0
        %1462 = vmatprep.subr.mxu0 0.0
        %1463 = vmatpush1.xpose.msra.mxu0 0.0
        %1464 = vmatprep.subr.mxu0 0.0
        %1465 = vmatpush1.xpose.msra.mxu0 0.0
        %1466 = vmatprep.subr.mxu0 0.0
        %1467 = vmatpush1.xpose.msra.mxu0 0.0
        %1468 = vmatprep.subr.mxu0 0.0
        %1469 = vmatpush1.xpose.msra.mxu0 0.0
        %1470 = vmatprep.subr.mxu0 0.0
        %1471 = vmatpush1.xpose.msra.mxu0 0.0
        %1472 = vmatprep.subr.mxu0 0.0
        %1473 = vmatpush1.xpose.msra.mxu0 0.0
        %1474 = vmatprep.subr.mxu0 0.0
        %1475 = vmatpush1.xpose.msra.mxu0 0.0
        %1476 = vmatprep.subr.mxu0 0.0
        %1477 = vmatpush1.xpose.msra.mxu0 0.0
        %1478 = vmatprep.subr.mxu0 0.0
        %1479 = vmatpush1.xpose.msra.mxu0 0.0
        %1480 = vmatprep.subr.mxu0 0.0
        %1481 = vmatpush1.xpose.msra.mxu0 0.0
        %1482 = vmatprep.subr.mxu0 0.0
        %1483 = vmatpush1.xpose.msra.mxu0 0.0
        %1484 = vmatprep.subr.mxu0 0.0
        %1485 = vmatpush1.xpose.msra.mxu0 0.0
        %1486 = vmatprep.subr.mxu0 0.0
        %1487 = vmatpush1.xpose.msra.mxu0 0.0
        %1488 = vmatprep.subr.mxu0 0.0
        %1489 = vmatpush1.xpose.msra.mxu0 0.0
        %1490 = vmatprep.subr.mxu0 0.0
        %1491 = vmatpush1.xpose.msra.mxu0 0.0
        %1492 = vmatprep.subr.mxu0 0.0
        %1493 = vmatpush1.xpose.msra.mxu0 0.0
        %1494 = vmatprep.subr.mxu0 0.0
        %1495 = vmatpush1.xpose.msra.mxu0 0.0
        %1496 = vmatprep.subr.mxu0 0.0
        %1497 = vmatpush1.xpose.msra.mxu0 0.0
        %1498 = vmatprep.subr.mxu0 0.0
        %1499 = vmatpush1.xpose.msra.mxu0 0.0
        %1500 = vmatprep.subr.mxu0 0.0
        %1501 = vmatpush1.xpose.msra.mxu0 0.0
        %1502 = vmatprep.subr.mxu0 0.0
        %1503 = vmatpush1.xpose.msra.mxu0 0.0
        %1504 = vmatprep.subr.mxu0 0.0
        %1505 = vmatpush1.xpose.msra.mxu0 0.0
        %1506 = vmatprep.subr.mxu0 0.0
        %1507 = vmatpush1.xpose.msra.mxu0 0.0
        %1508 = vmatprep.subr.mxu0 0.0
        %1509 = vmatpush1.xpose.msra.mxu0 0.0
        %1510 = vmatprep.mubr.f32.mxu0 0.0
        %1511 = vmatmul.mubr.f32.gmra.mrb[0].mxu0 %v734
        %v1512 = vpop.f32.mrb[0].mxu0
        %v1513 = vadd.f32 0.0, %v1512
        %v1514 = vpop.f32.mrb[0].mxu0
        %1515 = vdwg.mxu0
        %s1516 = scalar_lea.vmem %s407, 12
        %1517 = vst.msk [vmem:[%s1516] sm:$0x7] %vm731, %v1513
        %v1518 = vsel %vm1350, 2147483647, %v1281
        %v1519 = vsel %vm1351, 2147483647, %v1282
        %v1520 = vsel %vm1352, 2147483647, %v1283
        %v1521 = vsel %vm1353, 2147483647, %v1284
        %v1522 = vsel %vm569, %v1518, 2147483647
        %v1523 = vand.u32 %v1522, 65535
        %v1524 = vshra.s32 %v1522, 16
        %v1525 = vcvt.s32.f32 %v1523
        %v1526 = vcvt.s32.f32 %v1524
        %1527 = vmin.xlane.f32.xlu0 %v1526
        %v1528 = vpop.xlane.xlu0 %1527
        %vm1529 = vcmp.eq.f32.partialorder %v1526, %v1528
        %v1530 = vsel %vm1529, %v1525, inf
        %1531 = vmin.xlane.f32.xlu0 %v1530
        %v1532 = vpop.xlane.xlu0 %1531
        %v1533 = vcvt.f32.s32 %v1532
        %v1534 = vcvt.f32.s32 %v1528
        %v1535 = vshll.u32 %v1534, 16
        %v1536 = vadd.s32 %v1535, %v1533
        %v1537 = vsel %vm569, %v1519, 2147483647
        %v1538 = vand.u32 %v1537, 65535
        %v1539 = vshra.s32 %v1537, 16
        %v1540 = vcvt.s32.f32 %v1538
        %v1541 = vcvt.s32.f32 %v1539
        %1542 = vmin.xlane.f32.xlu0 %v1541
        %v1543 = vpop.xlane.xlu0 %1542
        %vm1544 = vcmp.eq.f32.partialorder %v1541, %v1543
        %v1545 = vsel %vm1544, %v1540, inf
        %1546 = vmin.xlane.f32.xlu0 %v1545
        %v1547 = vpop.xlane.xlu0 %1546
        %v1548 = vcvt.f32.s32 %v1547
        %v1549 = vcvt.f32.s32 %v1543
        %v1550 = vshll.u32 %v1549, 16
        %v1551 = vadd.s32 %v1550, %v1548
        %v1552 = vsel %vm569, %v1520, 2147483647
        %v1553 = vand.u32 %v1552, 65535
        %v1554 = vshra.s32 %v1552, 16
        %v1555 = vcvt.s32.f32 %v1553
        %v1556 = vcvt.s32.f32 %v1554
        %1557 = vmin.xlane.f32.xlu0 %v1556
        %v1558 = vpop.xlane.xlu0 %1557
        %vm1559 = vcmp.eq.f32.partialorder %v1556, %v1558
        %v1560 = vsel %vm1559, %v1555, inf
        %1561 = vmin.xlane.f32.xlu0 %v1560
        %v1562 = vpop.xlane.xlu0 %1561
        %v1563 = vcvt.f32.s32 %v1562
        %v1564 = vcvt.f32.s32 %v1558
        %v1565 = vshll.u32 %v1564, 16
        %v1566 = vadd.s32 %v1565, %v1563
        %v1567 = vsel %vm569, %v1521, 2147483647
        %v1568 = vand.u32 %v1567, 65535
        %v1569 = vshra.s32 %v1567, 16
        %v1570 = vcvt.s32.f32 %v1568
        %v1571 = vcvt.s32.f32 %v1569
        %1572 = vmin.xlane.f32.xlu0 %v1571
        %v1573 = vpop.xlane.xlu0 %1572
        %vm1574 = vcmp.eq.f32.partialorder %v1571, %v1573
        %v1575 = vsel %vm1574, %v1570, inf
        %1576 = vmin.xlane.f32.xlu0 %v1575
        %v1577 = vpop.xlane.xlu0 %1576
        %v1578 = vcvt.f32.s32 %v1577
        %v1579 = vcvt.f32.s32 %v1573
        %v1580 = vshll.u32 %v1579, 16
        %v1581 = vadd.s32 %v1580, %v1578
        %vm1582 = vcmask 39968
        %1583 = vst.msk [vmem:[#allocation2] sm:$0xff] %vm1582, %v1536
        %1584 = vst.msk [vmem:[#allocation2 + $0x8] sm:$0xff] %vm1582, %v1551
        %1585 = vst.msk [vmem:[#allocation2 + $0x10] sm:$0xff] %vm1582, %v1566
        %1586 = vst.msk [vmem:[#allocation2 + $0x18] sm:$0xff] %vm1582, %v1581
        %vm1587 = vcmp.eq.s32.totalorder %v1518, %v1536
        %vm1588 = vcmp.eq.s32.totalorder %v1519, %v1551
        %vm1589 = vcmp.eq.s32.totalorder %v1520, %v1566
        %vm1590 = vcmp.eq.s32.totalorder %v1521, %v1581
        %v1591 = vsel %vm1587, 1, 0
        %v1592 = vsel %vm1588, 1, 0
        %v1593 = vsel %vm1589, 1, 0
        %v1594 = vsel %vm1590, 1, 0
        %v1595 = vcvt.s32.f32 %v1591
        %v1596 = vcvt.s32.f32 %v1592
        %v1597 = vcvt.s32.f32 %v1593
        %v1598 = vcvt.s32.f32 %v1594
        %v1600 = vsel %vm569, %v1595, 0
        %v1603 = vsel %vm569, %v1596, 0
        %v1606 = vsel %vm569, %v1597, 0
        %v1609 = vsel %vm569, %v1598, 0
        %1611 = vmatprep.subr.mxu0 0.0
        %1612 = vmatpush1.xpose.msra.mxu0 %v1600
        %1613 = vmatprep.subr.mxu0 0.0
        %1614 = vmatpush1.xpose.msra.mxu0 %v1603
        %1615 = vmatprep.subr.mxu0 0.0
        %1616 = vmatpush1.xpose.msra.mxu0 %v1606
        %1617 = vmatprep.subr.mxu0 0.0
        %1618 = vmatpush1.xpose.msra.mxu0 %v1609
        %1619 = vmatprep.subr.mxu0 0.0
        %1620 = vmatpush1.xpose.msra.mxu0 0.0
        %1621 = vmatprep.subr.mxu0 0.0
        %1622 = vmatpush1.xpose.msra.mxu0 0.0
        %1623 = vmatprep.subr.mxu0 0.0
        %1624 = vmatpush1.xpose.msra.mxu0 0.0
        %1625 = vmatprep.subr.mxu0 0.0
        %1626 = vmatpush1.xpose.msra.mxu0 0.0
        %1627 = vmatprep.subr.mxu0 0.0
        %1628 = vmatpush1.xpose.msra.mxu0 0.0
        %1629 = vmatprep.subr.mxu0 0.0
        %1630 = vmatpush1.xpose.msra.mxu0 0.0
        %1631 = vmatprep.subr.mxu0 0.0
        %1632 = vmatpush1.xpose.msra.mxu0 0.0
        %1633 = vmatprep.subr.mxu0 0.0
        %1634 = vmatpush1.xpose.msra.mxu0 0.0
        %1635 = vmatprep.subr.mxu0 0.0
        %1636 = vmatpush1.xpose.msra.mxu0 0.0
        %1637 = vmatprep.subr.mxu0 0.0
        %1638 = vmatpush1.xpose.msra.mxu0 0.0
        %1639 = vmatprep.subr.mxu0 0.0
        %1640 = vmatpush1.xpose.msra.mxu0 0.0
        %1641 = vmatprep.subr.mxu0 0.0
        %1642 = vmatpush1.xpose.msra.mxu0 0.0
        %1643 = vmatprep.subr.mxu0 0.0
        %1644 = vmatpush1.xpose.msra.mxu0 0.0
        %1645 = vmatprep.subr.mxu0 0.0
        %1646 = vmatpush1.xpose.msra.mxu0 0.0
        %1647 = vmatprep.subr.mxu0 0.0
        %1648 = vmatpush1.xpose.msra.mxu0 0.0
        %1649 = vmatprep.subr.mxu0 0.0
        %1650 = vmatpush1.xpose.msra.mxu0 0.0
        %1651 = vmatprep.subr.mxu0 0.0
        %1652 = vmatpush1.xpose.msra.mxu0 0.0
        %1653 = vmatprep.subr.mxu0 0.0
        %1654 = vmatpush1.xpose.msra.mxu0 0.0
        %1655 = vmatprep.subr.mxu0 0.0
        %1656 = vmatpush1.xpose.msra.mxu0 0.0
        %1657 = vmatprep.subr.mxu0 0.0
        %1658 = vmatpush1.xpose.msra.mxu0 0.0
        %1659 = vmatprep.subr.mxu0 0.0
        %1660 = vmatpush1.xpose.msra.mxu0 0.0
        %1661 = vmatprep.subr.mxu0 0.0
        %1662 = vmatpush1.xpose.msra.mxu0 0.0
        %1663 = vmatprep.subr.mxu0 0.0
        %1664 = vmatpush1.xpose.msra.mxu0 0.0
        %1665 = vmatprep.subr.mxu0 0.0
        %1666 = vmatpush1.xpose.msra.mxu0 0.0
        %1667 = vmatprep.subr.mxu0 0.0
        %1668 = vmatpush1.xpose.msra.mxu0 0.0
        %1669 = vmatprep.subr.mxu0 0.0
        %1670 = vmatpush1.xpose.msra.mxu0 0.0
        %1671 = vmatprep.subr.mxu0 0.0
        %1672 = vmatpush1.xpose.msra.mxu0 0.0
        %1673 = vmatprep.subr.mxu0 0.0
        %1674 = vmatpush1.xpose.msra.mxu0 0.0
        %1675 = vmatprep.mubr.f32.mxu0 0.0
        %1676 = vmatmul.mubr.f32.gmra.mrb[0].mxu0 %v647
        %v1677 = vpop.f32.mrb[0].mxu0
        %v1678 = vadd.f32 0.0, %v1677
        %v1679 = vpop.f32.mrb[0].mxu0
        %1680 = vdwg.mxu0
        %s1681 = scalar_lea.vmem %s399, 16
        %1682 = vst.msk [vmem:[%s1681] sm:$0x7] %vm731, %v1678
        %1683 = vmatprep.subr.mxu0 0.0
        %1684 = vmatpush1.xpose.msra.mxu0 %v1600
        %1685 = vmatprep.subr.mxu0 0.0
        %1686 = vmatpush1.xpose.msra.mxu0 %v1603
        %1687 = vmatprep.subr.mxu0 0.0
        %1688 = vmatpush1.xpose.msra.mxu0 %v1606
        %1689 = vmatprep.subr.mxu0 0.0
        %1690 = vmatpush1.xpose.msra.mxu0 %v1609
        %1691 = vmatprep.subr.mxu0 0.0
        %1692 = vmatpush1.xpose.msra.mxu0 0.0
        %1693 = vmatprep.subr.mxu0 0.0
        %1694 = vmatpush1.xpose.msra.mxu0 0.0
        %1695 = vmatprep.subr.mxu0 0.0
        %1696 = vmatpush1.xpose.msra.mxu0 0.0
        %1697 = vmatprep.subr.mxu0 0.0
        %1698 = vmatpush1.xpose.msra.mxu0 0.0
        %1699 = vmatprep.subr.mxu0 0.0
        %1700 = vmatpush1.xpose.msra.mxu0 0.0
        %1701 = vmatprep.subr.mxu0 0.0
        %1702 = vmatpush1.xpose.msra.mxu0 0.0
        %1703 = vmatprep.subr.mxu0 0.0
        %1704 = vmatpush1.xpose.msra.mxu0 0.0
        %1705 = vmatprep.subr.mxu0 0.0
        %1706 = vmatpush1.xpose.msra.mxu0 0.0
        %1707 = vmatprep.subr.mxu0 0.0
        %1708 = vmatpush1.xpose.msra.mxu0 0.0
        %1709 = vmatprep.subr.mxu0 0.0
        %1710 = vmatpush1.xpose.msra.mxu0 0.0
        %1711 = vmatprep.subr.mxu0 0.0
        %1712 = vmatpush1.xpose.msra.mxu0 0.0
        %1713 = vmatprep.subr.mxu0 0.0
        %1714 = vmatpush1.xpose.msra.mxu0 0.0
        %1715 = vmatprep.subr.mxu0 0.0
        %1716 = vmatpush1.xpose.msra.mxu0 0.0
        %1717 = vmatprep.subr.mxu0 0.0
        %1718 = vmatpush1.xpose.msra.mxu0 0.0
        %1719 = vmatprep.subr.mxu0 0.0
        %1720 = vmatpush1.xpose.msra.mxu0 0.0
        %1721 = vmatprep.subr.mxu0 0.0
        %1722 = vmatpush1.xpose.msra.mxu0 0.0
        %1723 = vmatprep.subr.mxu0 0.0
        %1724 = vmatpush1.xpose.msra.mxu0 0.0
        %1725 = vmatprep.subr.mxu0 0.0
        %1726 = vmatpush1.xpose.msra.mxu0 0.0
        %1727 = vmatprep.subr.mxu0 0.0
        %1728 = vmatpush1.xpose.msra.mxu0 0.0
        %1729 = vmatprep.subr.mxu0 0.0
        %1730 = vmatpush1.xpose.msra.mxu0 0.0
        %1731 = vmatprep.subr.mxu0 0.0
        %1732 = vmatpush1.xpose.msra.mxu0 0.0
        %1733 = vmatprep.subr.mxu0 0.0
        %1734 = vmatpush1.xpose.msra.mxu0 0.0
        %1735 = vmatprep.subr.mxu0 0.0
        %1736 = vmatpush1.xpose.msra.mxu0 0.0
        %1737 = vmatprep.subr.mxu0 0.0
        %1738 = vmatpush1.xpose.msra.mxu0 0.0
        %1739 = vmatprep.subr.mxu0 0.0
        %1740 = vmatpush1.xpose.msra.mxu0 0.0
        %1741 = vmatprep.subr.mxu0 0.0
        %1742 = vmatpush1.xpose.msra.mxu0 0.0
        %1743 = vmatprep.subr.mxu0 0.0
        %1744 = vmatpush1.xpose.msra.mxu0 0.0
        %1745 = vmatprep.subr.mxu0 0.0
        %1746 = vmatpush1.xpose.msra.mxu0 0.0
        %1747 = vmatprep.mubr.f32.mxu0 0.0
        %1748 = vmatmul.mubr.f32.gmra.mrb[0].mxu0 %v734
        %v1749 = vpop.f32.mrb[0].mxu0
        %v1750 = vadd.f32 0.0, %v1749
        %v1751 = vpop.f32.mrb[0].mxu0
        %1752 = vdwg.mxu0
        %s1753 = scalar_lea.vmem %s407, 16
        %1754 = vst.msk [vmem:[%s1753] sm:$0x7] %vm731, %v1750
        %v1755 = vsel %vm1587, 2147483647, %v1518
        %v1756 = vsel %vm1588, 2147483647, %v1519
        %v1757 = vsel %vm1589, 2147483647, %v1520
        %v1758 = vsel %vm1590, 2147483647, %v1521
        %v1759 = vsel %vm569, %v1755, 2147483647
        %v1760 = vand.u32 %v1759, 65535
        %v1761 = vshra.s32 %v1759, 16
        %v1762 = vcvt.s32.f32 %v1760
        %v1763 = vcvt.s32.f32 %v1761
        %1764 = vmin.xlane.f32.xlu0 %v1763
        %v1765 = vpop.xlane.xlu0 %1764
        %vm1766 = vcmp.eq.f32.partialorder %v1763, %v1765
        %v1767 = vsel %vm1766, %v1762, inf
        %1768 = vmin.xlane.f32.xlu0 %v1767
        %v1769 = vpop.xlane.xlu0 %1768
        %v1770 = vcvt.f32.s32 %v1769
        %v1771 = vcvt.f32.s32 %v1765
        %v1772 = vshll.u32 %v1771, 16
        %v1773 = vadd.s32 %v1772, %v1770
        %v1774 = vsel %vm569, %v1756, 2147483647
        %v1775 = vand.u32 %v1774, 65535
        %v1776 = vshra.s32 %v1774, 16
        %v1777 = vcvt.s32.f32 %v1775
        %v1778 = vcvt.s32.f32 %v1776
        %1779 = vmin.xlane.f32.xlu0 %v1778
        %v1780 = vpop.xlane.xlu0 %1779
        %vm1781 = vcmp.eq.f32.partialorder %v1778, %v1780
        %v1782 = vsel %vm1781, %v1777, inf
        %1783 = vmin.xlane.f32.xlu0 %v1782
        %v1784 = vpop.xlane.xlu0 %1783
        %v1785 = vcvt.f32.s32 %v1784
        %v1786 = vcvt.f32.s32 %v1780
        %v1787 = vshll.u32 %v1786, 16
        %v1788 = vadd.s32 %v1787, %v1785
        %v1789 = vsel %vm569, %v1757, 2147483647
        %v1790 = vand.u32 %v1789, 65535
        %v1791 = vshra.s32 %v1789, 16
        %v1792 = vcvt.s32.f32 %v1790
        %v1793 = vcvt.s32.f32 %v1791
        %1794 = vmin.xlane.f32.xlu0 %v1793
        %v1795 = vpop.xlane.xlu0 %1794
        %vm1796 = vcmp.eq.f32.partialorder %v1793, %v1795
        %v1797 = vsel %vm1796, %v1792, inf
        %1798 = vmin.xlane.f32.xlu0 %v1797
        %v1799 = vpop.xlane.xlu0 %1798
        %v1800 = vcvt.f32.s32 %v1799
        %v1801 = vcvt.f32.s32 %v1795
        %v1802 = vshll.u32 %v1801, 16
        %v1803 = vadd.s32 %v1802, %v1800
        %v1804 = vsel %vm569, %v1758, 2147483647
        %v1805 = vand.u32 %v1804, 65535
        %v1806 = vshra.s32 %v1804, 16
        %v1807 = vcvt.s32.f32 %v1805
        %v1808 = vcvt.s32.f32 %v1806
        %1809 = vmin.xlane.f32.xlu0 %v1808
        %v1810 = vpop.xlane.xlu0 %1809
        %vm1811 = vcmp.eq.f32.partialorder %v1808, %v1810
        %v1812 = vsel %vm1811, %v1807, inf
        %1813 = vmin.xlane.f32.xlu0 %v1812
        %v1814 = vpop.xlane.xlu0 %1813
        %v1815 = vcvt.f32.s32 %v1814
        %v1816 = vcvt.f32.s32 %v1810
        %v1817 = vshll.u32 %v1816, 16
        %v1818 = vadd.s32 %v1817, %v1815
        %vm1819 = vcmask 48168
        %1820 = vst.msk [vmem:[#allocation2] sm:$0xff] %vm1819, %v1773
        %1821 = vst.msk [vmem:[#allocation2 + $0x8] sm:$0xff] %vm1819, %v1788
        %1822 = vst.msk [vmem:[#allocation2 + $0x10] sm:$0xff] %vm1819, %v1803
        %1823 = vst.msk [vmem:[#allocation2 + $0x18] sm:$0xff] %vm1819, %v1818
        %vm1824 = vcmp.eq.s32.totalorder %v1755, %v1773
        %vm1825 = vcmp.eq.s32.totalorder %v1756, %v1788
        %vm1826 = vcmp.eq.s32.totalorder %v1757, %v1803
        %vm1827 = vcmp.eq.s32.totalorder %v1758, %v1818
        %v1828 = vsel %vm1824, 1, 0
        %v1829 = vsel %vm1825, 1, 0
        %v1830 = vsel %vm1826, 1, 0
        %v1831 = vsel %vm1827, 1, 0
        %v1832 = vcvt.s32.f32 %v1828
        %v1833 = vcvt.s32.f32 %v1829
        %v1834 = vcvt.s32.f32 %v1830
        %v1835 = vcvt.s32.f32 %v1831
        %v1837 = vsel %vm569, %v1832, 0
        %v1840 = vsel %vm569, %v1833, 0
        %v1843 = vsel %vm569, %v1834, 0
        %v1846 = vsel %vm569, %v1835, 0
        %1848 = vmatprep.subr.mxu0 0.0
        %1849 = vmatpush1.xpose.msra.mxu0 %v1837
        %1850 = vmatprep.subr.mxu0 0.0
        %1851 = vmatpush1.xpose.msra.mxu0 %v1840
        %1852 = vmatprep.subr.mxu0 0.0
        %1853 = vmatpush1.xpose.msra.mxu0 %v1843
        %1854 = vmatprep.subr.mxu0 0.0
        %1855 = vmatpush1.xpose.msra.mxu0 %v1846
        %1856 = vmatprep.subr.mxu0 0.0
        %1857 = vmatpush1.xpose.msra.mxu0 0.0
        %1858 = vmatprep.subr.mxu0 0.0
        %1859 = vmatpush1.xpose.msra.mxu0 0.0
        %1860 = vmatprep.subr.mxu0 0.0
        %1861 = vmatpush1.xpose.msra.mxu0 0.0
        %1862 = vmatprep.subr.mxu0 0.0
        %1863 = vmatpush1.xpose.msra.mxu0 0.0
        %1864 = vmatprep.subr.mxu0 0.0
        %1865 = vmatpush1.xpose.msra.mxu0 0.0
        %1866 = vmatprep.subr.mxu0 0.0
        %1867 = vmatpush1.xpose.msra.mxu0 0.0
        %1868 = vmatprep.subr.mxu0 0.0
        %1869 = vmatpush1.xpose.msra.mxu0 0.0
        %1870 = vmatprep.subr.mxu0 0.0
        %1871 = vmatpush1.xpose.msra.mxu0 0.0
        %1872 = vmatprep.subr.mxu0 0.0
        %1873 = vmatpush1.xpose.msra.mxu0 0.0
        %1874 = vmatprep.subr.mxu0 0.0
        %1875 = vmatpush1.xpose.msra.mxu0 0.0
        %1876 = vmatprep.subr.mxu0 0.0
        %1877 = vmatpush1.xpose.msra.mxu0 0.0
        %1878 = vmatprep.subr.mxu0 0.0
        %1879 = vmatpush1.xpose.msra.mxu0 0.0
        %1880 = vmatprep.subr.mxu0 0.0
        %1881 = vmatpush1.xpose.msra.mxu0 0.0
        %1882 = vmatprep.subr.mxu0 0.0
        %1883 = vmatpush1.xpose.msra.mxu0 0.0
        %1884 = vmatprep.subr.mxu0 0.0
        %1885 = vmatpush1.xpose.msra.mxu0 0.0
        %1886 = vmatprep.subr.mxu0 0.0
        %1887 = vmatpush1.xpose.msra.mxu0 0.0
        %1888 = vmatprep.subr.mxu0 0.0
        %1889 = vmatpush1.xpose.msra.mxu0 0.0
        %1890 = vmatprep.subr.mxu0 0.0
        %1891 = vmatpush1.xpose.msra.mxu0 0.0
        %1892 = vmatprep.subr.mxu0 0.0
        %1893 = vmatpush1.xpose.msra.mxu0 0.0
        %1894 = vmatprep.subr.mxu0 0.0
        %1895 = vmatpush1.xpose.msra.mxu0 0.0
        %1896 = vmatprep.subr.mxu0 0.0
        %1897 = vmatpush1.xpose.msra.mxu0 0.0
        %1898 = vmatprep.subr.mxu0 0.0
        %1899 = vmatpush1.xpose.msra.mxu0 0.0
        %1900 = vmatprep.subr.mxu0 0.0
        %1901 = vmatpush1.xpose.msra.mxu0 0.0
        %1902 = vmatprep.subr.mxu0 0.0
        %1903 = vmatpush1.xpose.msra.mxu0 0.0
        %1904 = vmatprep.subr.mxu0 0.0
        %1905 = vmatpush1.xpose.msra.mxu0 0.0
        %1906 = vmatprep.subr.mxu0 0.0
        %1907 = vmatpush1.xpose.msra.mxu0 0.0
        %1908 = vmatprep.subr.mxu0 0.0
        %1909 = vmatpush1.xpose.msra.mxu0 0.0
        %1910 = vmatprep.subr.mxu0 0.0
        %1911 = vmatpush1.xpose.msra.mxu0 0.0
        %1912 = vmatprep.mubr.f32.mxu0 0.0
        %1913 = vmatmul.mubr.f32.gmra.mrb[0].mxu0 %v647
        %v1914 = vpop.f32.mrb[0].mxu0
        %v1915 = vadd.f32 0.0, %v1914
        %v1916 = vpop.f32.mrb[0].mxu0
        %1917 = vdwg.mxu0
        %s1918 = scalar_lea.vmem %s399, 20
        %1919 = vst.msk [vmem:[%s1918] sm:$0x7] %vm731, %v1915
        %1920 = vmatprep.subr.mxu0 0.0
        %1921 = vmatpush1.xpose.msra.mxu0 %v1837
        %1922 = vmatprep.subr.mxu0 0.0
        %1923 = vmatpush1.xpose.msra.mxu0 %v1840
        %1924 = vmatprep.subr.mxu0 0.0
        %1925 = vmatpush1.xpose.msra.mxu0 %v1843
        %1926 = vmatprep.subr.mxu0 0.0
        %1927 = vmatpush1.xpose.msra.mxu0 %v1846
        %1928 = vmatprep.subr.mxu0 0.0
        %1929 = vmatpush1.xpose.msra.mxu0 0.0
        %1930 = vmatprep.subr.mxu0 0.0
        %1931 = vmatpush1.xpose.msra.mxu0 0.0
        %1932 = vmatprep.subr.mxu0 0.0
        %1933 = vmatpush1.xpose.msra.mxu0 0.0
        %1934 = vmatprep.subr.mxu0 0.0
        %1935 = vmatpush1.xpose.msra.mxu0 0.0
        %1936 = vmatprep.subr.mxu0 0.0
        %1937 = vmatpush1.xpose.msra.mxu0 0.0
        %1938 = vmatprep.subr.mxu0 0.0
        %1939 = vmatpush1.xpose.msra.mxu0 0.0
        %1940 = vmatprep.subr.mxu0 0.0
        %1941 = vmatpush1.xpose.msra.mxu0 0.0
        %1942 = vmatprep.subr.mxu0 0.0
        %1943 = vmatpush1.xpose.msra.mxu0 0.0
        %1944 = vmatprep.subr.mxu0 0.0
        %1945 = vmatpush1.xpose.msra.mxu0 0.0
        %1946 = vmatprep.subr.mxu0 0.0
        %1947 = vmatpush1.xpose.msra.mxu0 0.0
        %1948 = vmatprep.subr.mxu0 0.0
        %1949 = vmatpush1.xpose.msra.mxu0 0.0
        %1950 = vmatprep.subr.mxu0 0.0
        %1951 = vmatpush1.xpose.msra.mxu0 0.0
        %1952 = vmatprep.subr.mxu0 0.0
        %1953 = vmatpush1.xpose.msra.mxu0 0.0
        %1954 = vmatprep.subr.mxu0 0.0
        %1955 = vmatpush1.xpose.msra.mxu0 0.0
        %1956 = vmatprep.subr.mxu0 0.0
        %1957 = vmatpush1.xpose.msra.mxu0 0.0
        %1958 = vmatprep.subr.mxu0 0.0
        %1959 = vmatpush1.xpose.msra.mxu0 0.0
        %1960 = vmatprep.subr.mxu0 0.0
        %1961 = vmatpush1.xpose.msra.mxu0 0.0
        %1962 = vmatprep.subr.mxu0 0.0
        %1963 = vmatpush1.xpose.msra.mxu0 0.0
        %1964 = vmatprep.subr.mxu0 0.0
        %1965 = vmatpush1.xpose.msra.mxu0 0.0
        %1966 = vmatprep.subr.mxu0 0.0
        %1967 = vmatpush1.xpose.msra.mxu0 0.0
        %1968 = vmatprep.subr.mxu0 0.0
        %1969 = vmatpush1.xpose.msra.mxu0 0.0
        %1970 = vmatprep.subr.mxu0 0.0
        %1971 = vmatpush1.xpose.msra.mxu0 0.0
        %1972 = vmatprep.subr.mxu0 0.0
        %1973 = vmatpush1.xpose.msra.mxu0 0.0
        %1974 = vmatprep.subr.mxu0 0.0
        %1975 = vmatpush1.xpose.msra.mxu0 0.0
        %1976 = vmatprep.subr.mxu0 0.0
        %1977 = vmatpush1.xpose.msra.mxu0 0.0
        %1978 = vmatprep.subr.mxu0 0.0
        %1979 = vmatpush1.xpose.msra.mxu0 0.0
        %1980 = vmatprep.subr.mxu0 0.0
        %1981 = vmatpush1.xpose.msra.mxu0 0.0
        %1982 = vmatprep.subr.mxu0 0.0
        %1983 = vmatpush1.xpose.msra.mxu0 0.0
        %1984 = vmatprep.mubr.f32.mxu0 0.0
        %1985 = vmatmul.mubr.f32.gmra.mrb[0].mxu0 %v734
        %v1986 = vpop.f32.mrb[0].mxu0
        %v1987 = vadd.f32 0.0, %v1986
        %v1988 = vpop.f32.mrb[0].mxu0
        %1989 = vdwg.mxu0
        %s1990 = scalar_lea.vmem %s407, 20
        %1991 = vst.msk [vmem:[%s1990] sm:$0x7] %vm731, %v1987
        %v1992 = vsel %vm1824, 2147483647, %v1755
        %v1993 = vsel %vm1825, 2147483647, %v1756
        %v1994 = vsel %vm1826, 2147483647, %v1757
        %v1995 = vsel %vm1827, 2147483647, %v1758
        %v1996 = vsel %vm569, %v1992, 2147483647
        %v1997 = vand.u32 %v1996, 65535
        %v1998 = vshra.s32 %v1996, 16
        %v1999 = vcvt.s32.f32 %v1997
        %v2000 = vcvt.s32.f32 %v1998
        %2001 = vmin.xlane.f32.xlu0 %v2000
        %v2002 = vpop.xlane.xlu0 %2001
        %vm2003 = vcmp.eq.f32.partialorder %v2000, %v2002
        %v2004 = vsel %vm2003, %v1999, inf
        %2005 = vmin.xlane.f32.xlu0 %v2004
        %v2006 = vpop.xlane.xlu0 %2005
        %v2007 = vcvt.f32.s32 %v2006
        %v2008 = vcvt.f32.s32 %v2002
        %v2009 = vshll.u32 %v2008, 16
        %v2010 = vadd.s32 %v2009, %v2007
        %v2011 = vsel %vm569, %v1993, 2147483647
        %v2012 = vand.u32 %v2011, 65535
        %v2013 = vshra.s32 %v2011, 16
        %v2014 = vcvt.s32.f32 %v2012
        %v2015 = vcvt.s32.f32 %v2013
        %2016 = vmin.xlane.f32.xlu0 %v2015
        %v2017 = vpop.xlane.xlu0 %2016
        %vm2018 = vcmp.eq.f32.partialorder %v2015, %v2017
        %v2019 = vsel %vm2018, %v2014, inf
        %2020 = vmin.xlane.f32.xlu0 %v2019
        %v2021 = vpop.xlane.xlu0 %2020
        %v2022 = vcvt.f32.s32 %v2021
        %v2023 = vcvt.f32.s32 %v2017
        %v2024 = vshll.u32 %v2023, 16
        %v2025 = vadd.s32 %v2024, %v2022
        %v2026 = vsel %vm569, %v1994, 2147483647
        %v2027 = vand.u32 %v2026, 65535
        %v2028 = vshra.s32 %v2026, 16
        %v2029 = vcvt.s32.f32 %v2027
        %v2030 = vcvt.s32.f32 %v2028
        %2031 = vmin.xlane.f32.xlu0 %v2030
        %v2032 = vpop.xlane.xlu0 %2031
        %vm2033 = vcmp.eq.f32.partialorder %v2030, %v2032
        %v2034 = vsel %vm2033, %v2029, inf
        %2035 = vmin.xlane.f32.xlu0 %v2034
        %v2036 = vpop.xlane.xlu0 %2035
        %v2037 = vcvt.f32.s32 %v2036
        %v2038 = vcvt.f32.s32 %v2032
        %v2039 = vshll.u32 %v2038, 16
        %v2040 = vadd.s32 %v2039, %v2037
        %v2041 = vsel %vm569, %v1995, 2147483647
        %v2042 = vand.u32 %v2041, 65535
        %v2043 = vshra.s32 %v2041, 16
        %v2044 = vcvt.s32.f32 %v2042
        %v2045 = vcvt.s32.f32 %v2043
        %2046 = vmin.xlane.f32.xlu0 %v2045
        %v2047 = vpop.xlane.xlu0 %2046
        %vm2048 = vcmp.eq.f32.partialorder %v2045, %v2047
        %v2049 = vsel %vm2048, %v2044, inf
        %2050 = vmin.xlane.f32.xlu0 %v2049
        %v2051 = vpop.xlane.xlu0 %2050
        %v2052 = vcvt.f32.s32 %v2051
        %v2053 = vcvt.f32.s32 %v2047
        %v2054 = vshll.u32 %v2053, 16
        %v2055 = vadd.s32 %v2054, %v2052
        %vm2056 = vcmask 56368
        %2057 = vst.msk [vmem:[#allocation2] sm:$0xff] %vm2056, %v2010
        %2058 = vst.msk [vmem:[#allocation2 + $0x8] sm:$0xff] %vm2056, %v2025
        %2059 = vst.msk [vmem:[#allocation2 + $0x10] sm:$0xff] %vm2056, %v2040
        %2060 = vst.msk [vmem:[#allocation2 + $0x18] sm:$0xff] %vm2056, %v2055
        %vm2061 = vcmp.eq.s32.totalorder %v1992, %v2010
        %vm2062 = vcmp.eq.s32.totalorder %v1993, %v2025
        %vm2063 = vcmp.eq.s32.totalorder %v1994, %v2040
        %vm2064 = vcmp.eq.s32.totalorder %v1995, %v2055
        %v2065 = vsel %vm2061, 1, 0
        %v2066 = vsel %vm2062, 1, 0
        %v2067 = vsel %vm2063, 1, 0
        %v2068 = vsel %vm2064, 1, 0
        %v2069 = vcvt.s32.f32 %v2065
        %v2070 = vcvt.s32.f32 %v2066
        %v2071 = vcvt.s32.f32 %v2067
        %v2072 = vcvt.s32.f32 %v2068
        %v2074 = vsel %vm569, %v2069, 0
        %v2077 = vsel %vm569, %v2070, 0
        %v2080 = vsel %vm569, %v2071, 0
        %v2083 = vsel %vm569, %v2072, 0
        %2085 = vmatprep.subr.mxu0 0.0
        %2086 = vmatpush1.xpose.msra.mxu0 %v2074
        %2087 = vmatprep.subr.mxu0 0.0
        %2088 = vmatpush1.xpose.msra.mxu0 %v2077
        %2089 = vmatprep.subr.mxu0 0.0
        %2090 = vmatpush1.xpose.msra.mxu0 %v2080
        %2091 = vmatprep.subr.mxu0 0.0
        %2092 = vmatpush1.xpose.msra.mxu0 %v2083
        %2093 = vmatprep.subr.mxu0 0.0
        %2094 = vmatpush1.xpose.msra.mxu0 0.0
        %2095 = vmatprep.subr.mxu0 0.0
        %2096 = vmatpush1.xpose.msra.mxu0 0.0
        %2097 = vmatprep.subr.mxu0 0.0
        %2098 = vmatpush1.xpose.msra.mxu0 0.0
        %2099 = vmatprep.subr.mxu0 0.0
        %2100 = vmatpush1.xpose.msra.mxu0 0.0
        %2101 = vmatprep.subr.mxu0 0.0
        %2102 = vmatpush1.xpose.msra.mxu0 0.0
        %2103 = vmatprep.subr.mxu0 0.0
        %2104 = vmatpush1.xpose.msra.mxu0 0.0
        %2105 = vmatprep.subr.mxu0 0.0
        %2106 = vmatpush1.xpose.msra.mxu0 0.0
        %2107 = vmatprep.subr.mxu0 0.0
        %2108 = vmatpush1.xpose.msra.mxu0 0.0
        %2109 = vmatprep.subr.mxu0 0.0
        %2110 = vmatpush1.xpose.msra.mxu0 0.0
        %2111 = vmatprep.subr.mxu0 0.0
        %2112 = vmatpush1.xpose.msra.mxu0 0.0
        %2113 = vmatprep.subr.mxu0 0.0
        %2114 = vmatpush1.xpose.msra.mxu0 0.0
        %2115 = vmatprep.subr.mxu0 0.0
        %2116 = vmatpush1.xpose.msra.mxu0 0.0
        %2117 = vmatprep.subr.mxu0 0.0
        %2118 = vmatpush1.xpose.msra.mxu0 0.0
        %2119 = vmatprep.subr.mxu0 0.0
        %2120 = vmatpush1.xpose.msra.mxu0 0.0
        %2121 = vmatprep.subr.mxu0 0.0
        %2122 = vmatpush1.xpose.msra.mxu0 0.0
        %2123 = vmatprep.subr.mxu0 0.0
        %2124 = vmatpush1.xpose.msra.mxu0 0.0
        %2125 = vmatprep.subr.mxu0 0.0
        %2126 = vmatpush1.xpose.msra.mxu0 0.0
        %2127 = vmatprep.subr.mxu0 0.0
        %2128 = vmatpush1.xpose.msra.mxu0 0.0
        %2129 = vmatprep.subr.mxu0 0.0
        %2130 = vmatpush1.xpose.msra.mxu0 0.0
        %2131 = vmatprep.subr.mxu0 0.0
        %2132 = vmatpush1.xpose.msra.mxu0 0.0
        %2133 = vmatprep.subr.mxu0 0.0
        %2134 = vmatpush1.xpose.msra.mxu0 0.0
        %2135 = vmatprep.subr.mxu0 0.0
        %2136 = vmatpush1.xpose.msra.mxu0 0.0
        %2137 = vmatprep.subr.mxu0 0.0
        %2138 = vmatpush1.xpose.msra.mxu0 0.0
        %2139 = vmatprep.subr.mxu0 0.0
        %2140 = vmatpush1.xpose.msra.mxu0 0.0
        %2141 = vmatprep.subr.mxu0 0.0
        %2142 = vmatpush1.xpose.msra.mxu0 0.0
        %2143 = vmatprep.subr.mxu0 0.0
        %2144 = vmatpush1.xpose.msra.mxu0 0.0
        %2145 = vmatprep.subr.mxu0 0.0
        %2146 = vmatpush1.xpose.msra.mxu0 0.0
        %2147 = vmatprep.subr.mxu0 0.0
        %2148 = vmatpush1.xpose.msra.mxu0 0.0
        %2149 = vmatprep.mubr.f32.mxu0 0.0
        %2150 = vmatmul.mubr.f32.gmra.mrb[0].mxu0 %v647
        %v2151 = vpop.f32.mrb[0].mxu0
        %v2152 = vadd.f32 0.0, %v2151
        %v2153 = vpop.f32.mrb[0].mxu0
        %2154 = vdwg.mxu0
        %s2155 = scalar_lea.vmem %s399, 24
        %2156 = vst.msk [vmem:[%s2155] sm:$0x7] %vm731, %v2152
        %2157 = vmatprep.subr.mxu0 0.0
        %2158 = vmatpush1.xpose.msra.mxu0 %v2074
        %2159 = vmatprep.subr.mxu0 0.0
        %2160 = vmatpush1.xpose.msra.mxu0 %v2077
        %2161 = vmatprep.subr.mxu0 0.0
        %2162 = vmatpush1.xpose.msra.mxu0 %v2080
        %2163 = vmatprep.subr.mxu0 0.0
        %2164 = vmatpush1.xpose.msra.mxu0 %v2083
        %2165 = vmatprep.subr.mxu0 0.0
        %2166 = vmatpush1.xpose.msra.mxu0 0.0
        %2167 = vmatprep.subr.mxu0 0.0
        %2168 = vmatpush1.xpose.msra.mxu0 0.0
        %2169 = vmatprep.subr.mxu0 0.0
        %2170 = vmatpush1.xpose.msra.mxu0 0.0
        %2171 = vmatprep.subr.mxu0 0.0
        %2172 = vmatpush1.xpose.msra.mxu0 0.0
        %2173 = vmatprep.subr.mxu0 0.0
        %2174 = vmatpush1.xpose.msra.mxu0 0.0
        %2175 = vmatprep.subr.mxu0 0.0
        %2176 = vmatpush1.xpose.msra.mxu0 0.0
        %2177 = vmatprep.subr.mxu0 0.0
        %2178 = vmatpush1.xpose.msra.mxu0 0.0
        %2179 = vmatprep.subr.mxu0 0.0
        %2180 = vmatpush1.xpose.msra.mxu0 0.0
        %2181 = vmatprep.subr.mxu0 0.0
        %2182 = vmatpush1.xpose.msra.mxu0 0.0
        %2183 = vmatprep.subr.mxu0 0.0
        %2184 = vmatpush1.xpose.msra.mxu0 0.0
        %2185 = vmatprep.subr.mxu0 0.0
        %2186 = vmatpush1.xpose.msra.mxu0 0.0
        %2187 = vmatprep.subr.mxu0 0.0
        %2188 = vmatpush1.xpose.msra.mxu0 0.0
        %2189 = vmatprep.subr.mxu0 0.0
        %2190 = vmatpush1.xpose.msra.mxu0 0.0
        %2191 = vmatprep.subr.mxu0 0.0
        %2192 = vmatpush1.xpose.msra.mxu0 0.0
        %2193 = vmatprep.subr.mxu0 0.0
        %2194 = vmatpush1.xpose.msra.mxu0 0.0
        %2195 = vmatprep.subr.mxu0 0.0
        %2196 = vmatpush1.xpose.msra.mxu0 0.0
        %2197 = vmatprep.subr.mxu0 0.0
        %2198 = vmatpush1.xpose.msra.mxu0 0.0
        %2199 = vmatprep.subr.mxu0 0.0
        %2200 = vmatpush1.xpose.msra.mxu0 0.0
        %2201 = vmatprep.subr.mxu0 0.0
        %2202 = vmatpush1.xpose.msra.mxu0 0.0
        %2203 = vmatprep.subr.mxu0 0.0
        %2204 = vmatpush1.xpose.msra.mxu0 0.0
        %2205 = vmatprep.subr.mxu0 0.0
        %2206 = vmatpush1.xpose.msra.mxu0 0.0
        %2207 = vmatprep.subr.mxu0 0.0
        %2208 = vmatpush1.xpose.msra.mxu0 0.0
        %2209 = vmatprep.subr.mxu0 0.0
        %2210 = vmatpush1.xpose.msra.mxu0 0.0
        %2211 = vmatprep.subr.mxu0 0.0
        %2212 = vmatpush1.xpose.msra.mxu0 0.0
        %2213 = vmatprep.subr.mxu0 0.0
        %2214 = vmatpush1.xpose.msra.mxu0 0.0
        %2215 = vmatprep.subr.mxu0 0.0
        %2216 = vmatpush1.xpose.msra.mxu0 0.0
        %2217 = vmatprep.subr.mxu0 0.0
        %2218 = vmatpush1.xpose.msra.mxu0 0.0
        %2219 = vmatprep.subr.mxu0 0.0
        %2220 = vmatpush1.xpose.msra.mxu0 0.0
        %2221 = vmatprep.mubr.f32.mxu0 0.0
        %2222 = vmatmul.mubr.f32.gmra.mrb[0].mxu0 %v734
        %v2223 = vpop.f32.mrb[0].mxu0
        %v2224 = vadd.f32 0.0, %v2223
        %v2225 = vpop.f32.mrb[0].mxu0
        %2226 = vdwg.mxu0
        %s2227 = scalar_lea.vmem %s407, 24
        %2228 = vst.msk [vmem:[%s2227] sm:$0x7] %vm731, %v2224
        %v2229 = vsel %vm2061, 2147483647, %v1992
        %v2230 = vsel %vm2062, 2147483647, %v1993
        %v2231 = vsel %vm2063, 2147483647, %v1994
        %v2232 = vsel %vm2064, 2147483647, %v1995
        %v2233 = vsel %vm569, %v2229, 2147483647
        %v2234 = vand.u32 %v2233, 65535
        %v2235 = vshra.s32 %v2233, 16
        %v2236 = vcvt.s32.f32 %v2234
        %v2237 = vcvt.s32.f32 %v2235
        %2238 = vmin.xlane.f32.xlu0 %v2237
        %v2239 = vpop.xlane.xlu0 %2238
        %vm2240 = vcmp.eq.f32.partialorder %v2237, %v2239
        %v2241 = vsel %vm2240, %v2236, inf
        %2242 = vmin.xlane.f32.xlu0 %v2241
        %v2243 = vpop.xlane.xlu0 %2242
        %v2244 = vcvt.f32.s32 %v2243
        %v2245 = vcvt.f32.s32 %v2239
        %v2246 = vshll.u32 %v2245, 16
        %v2247 = vadd.s32 %v2246, %v2244
        %v2248 = vsel %vm569, %v2230, 2147483647
        %v2249 = vand.u32 %v2248, 65535
        %v2250 = vshra.s32 %v2248, 16
        %v2251 = vcvt.s32.f32 %v2249
        %v2252 = vcvt.s32.f32 %v2250
        %2253 = vmin.xlane.f32.xlu0 %v2252
        %v2254 = vpop.xlane.xlu0 %2253
        %vm2255 = vcmp.eq.f32.partialorder %v2252, %v2254
        %v2256 = vsel %vm2255, %v2251, inf
        %2257 = vmin.xlane.f32.xlu0 %v2256
        %v2258 = vpop.xlane.xlu0 %2257
        %v2259 = vcvt.f32.s32 %v2258
        %v2260 = vcvt.f32.s32 %v2254
        %v2261 = vshll.u32 %v2260, 16
        %v2262 = vadd.s32 %v2261, %v2259
        %v2263 = vsel %vm569, %v2231, 2147483647
        %v2264 = vand.u32 %v2263, 65535
        %v2265 = vshra.s32 %v2263, 16
        %v2266 = vcvt.s32.f32 %v2264
        %v2267 = vcvt.s32.f32 %v2265
        %2268 = vmin.xlane.f32.xlu0 %v2267
        %v2269 = vpop.xlane.xlu0 %2268
        %vm2270 = vcmp.eq.f32.partialorder %v2267, %v2269
        %v2271 = vsel %vm2270, %v2266, inf
        %2272 = vmin.xlane.f32.xlu0 %v2271
        %v2273 = vpop.xlane.xlu0 %2272
        %v2274 = vcvt.f32.s32 %v2273
        %v2275 = vcvt.f32.s32 %v2269
        %v2276 = vshll.u32 %v2275, 16
        %v2277 = vadd.s32 %v2276, %v2274
        %v2278 = vsel %vm569, %v2232, 2147483647
        %v2279 = vand.u32 %v2278, 65535
        %v2280 = vshra.s32 %v2278, 16
        %v2281 = vcvt.s32.f32 %v2279
        %v2282 = vcvt.s32.f32 %v2280
        %2283 = vmin.xlane.f32.xlu0 %v2282
        %v2284 = vpop.xlane.xlu0 %2283
        %vm2285 = vcmp.eq.f32.partialorder %v2282, %v2284
        %v2286 = vsel %vm2285, %v2281, inf
        %2287 = vmin.xlane.f32.xlu0 %v2286
        %v2288 = vpop.xlane.xlu0 %2287
        %v2289 = vcvt.f32.s32 %v2288
        %v2290 = vcvt.f32.s32 %v2284
        %v2291 = vshll.u32 %v2290, 16
        %v2292 = vadd.s32 %v2291, %v2289
        %vm2293 = vcmask 64568
        %2294 = vst.msk [vmem:[#allocation2] sm:$0xff] %vm2293, %v2247
        %2295 = vst.msk [vmem:[#allocation2 + $0x8] sm:$0xff] %vm2293, %v2262
        %2296 = vst.msk [vmem:[#allocation2 + $0x10] sm:$0xff] %vm2293, %v2277
        %2297 = vst.msk [vmem:[#allocation2 + $0x18] sm:$0xff] %vm2293, %v2292
        %vm2298 = vcmp.eq.s32.totalorder %v2229, %v2247
        %vm2299 = vcmp.eq.s32.totalorder %v2230, %v2262
        %vm2300 = vcmp.eq.s32.totalorder %v2231, %v2277
        %vm2301 = vcmp.eq.s32.totalorder %v2232, %v2292
        %v2302 = vsel %vm2298, 1, 0
        %v2303 = vsel %vm2299, 1, 0
        %v2304 = vsel %vm2300, 1, 0
        %v2305 = vsel %vm2301, 1, 0
        %v2306 = vcvt.s32.f32 %v2302
        %v2307 = vcvt.s32.f32 %v2303
        %v2308 = vcvt.s32.f32 %v2304
        %v2309 = vcvt.s32.f32 %v2305
        %v2311 = vsel %vm569, %v2306, 0
        %v2314 = vsel %vm569, %v2307, 0
        %v2317 = vsel %vm569, %v2308, 0
        %v2320 = vsel %vm569, %v2309, 0
        %2322 = vmatprep.subr.mxu0 0.0
        %2323 = vmatpush1.xpose.msra.mxu0 %v2311
        %2324 = vmatprep.subr.mxu0 0.0
        %2325 = vmatpush1.xpose.msra.mxu0 %v2314
        %2326 = vmatprep.subr.mxu0 0.0
        %2327 = vmatpush1.xpose.msra.mxu0 %v2317
        %2328 = vmatprep.subr.mxu0 0.0
        %2329 = vmatpush1.xpose.msra.mxu0 %v2320
        %2330 = vmatprep.subr.mxu0 0.0
        %2331 = vmatpush1.xpose.msra.mxu0 0.0
        %2332 = vmatprep.subr.mxu0 0.0
        %2333 = vmatpush1.xpose.msra.mxu0 0.0
        %2334 = vmatprep.subr.mxu0 0.0
        %2335 = vmatpush1.xpose.msra.mxu0 0.0
        %2336 = vmatprep.subr.mxu0 0.0
        %2337 = vmatpush1.xpose.msra.mxu0 0.0
        %2338 = vmatprep.subr.mxu0 0.0
        %2339 = vmatpush1.xpose.msra.mxu0 0.0
        %2340 = vmatprep.subr.mxu0 0.0
        %2341 = vmatpush1.xpose.msra.mxu0 0.0
        %2342 = vmatprep.subr.mxu0 0.0
        %2343 = vmatpush1.xpose.msra.mxu0 0.0
        %2344 = vmatprep.subr.mxu0 0.0
        %2345 = vmatpush1.xpose.msra.mxu0 0.0
        %2346 = vmatprep.subr.mxu0 0.0
        %2347 = vmatpush1.xpose.msra.mxu0 0.0
        %2348 = vmatprep.subr.mxu0 0.0
        %2349 = vmatpush1.xpose.msra.mxu0 0.0
        %2350 = vmatprep.subr.mxu0 0.0
        %2351 = vmatpush1.xpose.msra.mxu0 0.0
        %2352 = vmatprep.subr.mxu0 0.0
        %2353 = vmatpush1.xpose.msra.mxu0 0.0
        %2354 = vmatprep.subr.mxu0 0.0
        %2355 = vmatpush1.xpose.msra.mxu0 0.0
        %2356 = vmatprep.subr.mxu0 0.0
        %2357 = vmatpush1.xpose.msra.mxu0 0.0
        %2358 = vmatprep.subr.mxu0 0.0
        %2359 = vmatpush1.xpose.msra.mxu0 0.0
        %2360 = vmatprep.subr.mxu0 0.0
        %2361 = vmatpush1.xpose.msra.mxu0 0.0
        %2362 = vmatprep.subr.mxu0 0.0
        %2363 = vmatpush1.xpose.msra.mxu0 0.0
        %2364 = vmatprep.subr.mxu0 0.0
        %2365 = vmatpush1.xpose.msra.mxu0 0.0
        %2366 = vmatprep.subr.mxu0 0.0
        %2367 = vmatpush1.xpose.msra.mxu0 0.0
        %2368 = vmatprep.subr.mxu0 0.0
        %2369 = vmatpush1.xpose.msra.mxu0 0.0
        %2370 = vmatprep.subr.mxu0 0.0
        %2371 = vmatpush1.xpose.msra.mxu0 0.0
        %2372 = vmatprep.subr.mxu0 0.0
        %2373 = vmatpush1.xpose.msra.mxu0 0.0
        %2374 = vmatprep.subr.mxu0 0.0
        %2375 = vmatpush1.xpose.msra.mxu0 0.0
        %2376 = vmatprep.subr.mxu0 0.0
        %2377 = vmatpush1.xpose.msra.mxu0 0.0
        %2378 = vmatprep.subr.mxu0 0.0
        %2379 = vmatpush1.xpose.msra.mxu0 0.0
        %2380 = vmatprep.subr.mxu0 0.0
        %2381 = vmatpush1.xpose.msra.mxu0 0.0
        %2382 = vmatprep.subr.mxu0 0.0
        %2383 = vmatpush1.xpose.msra.mxu0 0.0
        %2384 = vmatprep.subr.mxu0 0.0
        %2385 = vmatpush1.xpose.msra.mxu0 0.0
        %2386 = vmatprep.mubr.f32.mxu0 0.0
        %2387 = vmatmul.mubr.f32.gmra.mrb[0].mxu0 %v647
        %v2388 = vpop.f32.mrb[0].mxu0
        %v2389 = vadd.f32 0.0, %v2388
        %v2390 = vpop.f32.mrb[0].mxu0
        %2391 = vdwg.mxu0
        %s2392 = scalar_lea.vmem %s399, 28
        %2393 = vst.msk [vmem:[%s2392] sm:$0x7] %vm731, %v2389
        %2394 = vmatprep.subr.mxu0 0.0
        %2395 = vmatpush1.xpose.msra.mxu0 %v2311
        %2396 = vmatprep.subr.mxu0 0.0
        %2397 = vmatpush1.xpose.msra.mxu0 %v2314
        %2398 = vmatprep.subr.mxu0 0.0
        %2399 = vmatpush1.xpose.msra.mxu0 %v2317
        %2400 = vmatprep.subr.mxu0 0.0
        %2401 = vmatpush1.xpose.msra.mxu0 %v2320
        %2402 = vmatprep.subr.mxu0 0.0
        %2403 = vmatpush1.xpose.msra.mxu0 0.0
        %2404 = vmatprep.subr.mxu0 0.0
        %2405 = vmatpush1.xpose.msra.mxu0 0.0
        %2406 = vmatprep.subr.mxu0 0.0
        %2407 = vmatpush1.xpose.msra.mxu0 0.0
        %2408 = vmatprep.subr.mxu0 0.0
        %2409 = vmatpush1.xpose.msra.mxu0 0.0
        %2410 = vmatprep.subr.mxu0 0.0
        %2411 = vmatpush1.xpose.msra.mxu0 0.0
        %2412 = vmatprep.subr.mxu0 0.0
        %2413 = vmatpush1.xpose.msra.mxu0 0.0
        %2414 = vmatprep.subr.mxu0 0.0
        %2415 = vmatpush1.xpose.msra.mxu0 0.0
        %2416 = vmatprep.subr.mxu0 0.0
        %2417 = vmatpush1.xpose.msra.mxu0 0.0
        %2418 = vmatprep.subr.mxu0 0.0
        %2419 = vmatpush1.xpose.msra.mxu0 0.0
        %2420 = vmatprep.subr.mxu0 0.0
        %2421 = vmatpush1.xpose.msra.mxu0 0.0
        %2422 = vmatprep.subr.mxu0 0.0
        %2423 = vmatpush1.xpose.msra.mxu0 0.0
        %2424 = vmatprep.subr.mxu0 0.0
        %2425 = vmatpush1.xpose.msra.mxu0 0.0
        %2426 = vmatprep.subr.mxu0 0.0
        %2427 = vmatpush1.xpose.msra.mxu0 0.0
        %2428 = vmatprep.subr.mxu0 0.0
        %2429 = vmatpush1.xpose.msra.mxu0 0.0
        %2430 = vmatprep.subr.mxu0 0.0
        %2431 = vmatpush1.xpose.msra.mxu0 0.0
        %2432 = vmatprep.subr.mxu0 0.0
        %2433 = vmatpush1.xpose.msra.mxu0 0.0
        %2434 = vmatprep.subr.mxu0 0.0
        %2435 = vmatpush1.xpose.msra.mxu0 0.0
        %2436 = vmatprep.subr.mxu0 0.0
        %2437 = vmatpush1.xpose.msra.mxu0 0.0
        %2438 = vmatprep.subr.mxu0 0.0
        %2439 = vmatpush1.xpose.msra.mxu0 0.0
        %2440 = vmatprep.subr.mxu0 0.0
        %2441 = vmatpush1.xpose.msra.mxu0 0.0
        %2442 = vmatprep.subr.mxu0 0.0
        %2443 = vmatpush1.xpose.msra.mxu0 0.0
        %2444 = vmatprep.subr.mxu0 0.0
        %2445 = vmatpush1.xpose.msra.mxu0 0.0
        %2446 = vmatprep.subr.mxu0 0.0
        %2447 = vmatpush1.xpose.msra.mxu0 0.0
        %2448 = vmatprep.subr.mxu0 0.0
        %2449 = vmatpush1.xpose.msra.mxu0 0.0
        %2450 = vmatprep.subr.mxu0 0.0
        %2451 = vmatpush1.xpose.msra.mxu0 0.0
        %2452 = vmatprep.subr.mxu0 0.0
        %2453 = vmatpush1.xpose.msra.mxu0 0.0
        %2454 = vmatprep.subr.mxu0 0.0
        %2455 = vmatpush1.xpose.msra.mxu0 0.0
        %2456 = vmatprep.subr.mxu0 0.0
        %2457 = vmatpush1.xpose.msra.mxu0 0.0
        %2458 = vmatprep.mubr.f32.mxu0 0.0
        %2459 = vmatmul.mubr.f32.gmra.mrb[0].mxu0 %v734
        %v2460 = vpop.f32.mrb[0].mxu0
        %v2461 = vadd.f32 0.0, %v2460
        %v2462 = vpop.f32.mrb[0].mxu0
        %2463 = vdwg.mxu0
        %s2464 = scalar_lea.vmem %s407, 28
        %2465 = vst.msk [vmem:[%s2464] sm:$0x7] %vm731, %v2461
        %v2466 = vsel %vm2298, 2147483647, %v2229
        %v2467 = vsel %vm2299, 2147483647, %v2230
        %v2468 = vsel %vm2300, 2147483647, %v2231
        %v2469 = vsel %vm2301, 2147483647, %v2232
        %v2470 = vsel %vm569, %v2466, 2147483647
        %v2471 = vand.u32 %v2470, 65535
        %v2472 = vshra.s32 %v2470, 16
        %v2473 = vcvt.s32.f32 %v2471
        %v2474 = vcvt.s32.f32 %v2472
        %2475 = vmin.xlane.f32.xlu0 %v2474
        %v2476 = vpop.xlane.xlu0 %2475
        %vm2477 = vcmp.eq.f32.partialorder %v2474, %v2476
        %v2478 = vsel %vm2477, %v2473, inf
        %2479 = vmin.xlane.f32.xlu0 %v2478
        %v2480 = vpop.xlane.xlu0 %2479
        %v2481 = vcvt.f32.s32 %v2480
        %v2482 = vcvt.f32.s32 %v2476
        %v2483 = vshll.u32 %v2482, 16
        %v2484 = vadd.s32 %v2483, %v2481
        %v2485 = vsel %vm569, %v2467, 2147483647
        %v2486 = vand.u32 %v2485, 65535
        %v2487 = vshra.s32 %v2485, 16
        %v2488 = vcvt.s32.f32 %v2486
        %v2489 = vcvt.s32.f32 %v2487
        %2490 = vmin.xlane.f32.xlu0 %v2489
        %v2491 = vpop.xlane.xlu0 %2490
        %vm2492 = vcmp.eq.f32.partialorder %v2489, %v2491
        %v2493 = vsel %vm2492, %v2488, inf
        %2494 = vmin.xlane.f32.xlu0 %v2493
        %v2495 = vpop.xlane.xlu0 %2494
        %v2496 = vcvt.f32.s32 %v2495
        %v2497 = vcvt.f32.s32 %v2491
        %v2498 = vshll.u32 %v2497, 16
        %v2499 = vadd.s32 %v2498, %v2496
        %v2500 = vsel %vm569, %v2468, 2147483647
        %v2501 = vand.u32 %v2500, 65535
        %v2502 = vshra.s32 %v2500, 16
        %v2503 = vcvt.s32.f32 %v2501
        %v2504 = vcvt.s32.f32 %v2502
        %2505 = vmin.xlane.f32.xlu0 %v2504
        %v2506 = vpop.xlane.xlu0 %2505
        %vm2507 = vcmp.eq.f32.partialorder %v2504, %v2506
        %v2508 = vsel %vm2507, %v2503, inf
        %2509 = vmin.xlane.f32.xlu0 %v2508
        %v2510 = vpop.xlane.xlu0 %2509
        %v2511 = vcvt.f32.s32 %v2510
        %v2512 = vcvt.f32.s32 %v2506
        %v2513 = vshll.u32 %v2512, 16
        %v2514 = vadd.s32 %v2513, %v2511
        %v2515 = vsel %vm569, %v2469, 2147483647
        %v2516 = vand.u32 %v2515, 65535
        %v2517 = vshra.s32 %v2515, 16
        %v2518 = vcvt.s32.f32 %v2516
        %v2519 = vcvt.s32.f32 %v2517
        %2520 = vmin.xlane.f32.xlu0 %v2519
        %v2521 = vpop.xlane.xlu0 %2520
        %vm2522 = vcmp.eq.f32.partialorder %v2519, %v2521
        %v2523 = vsel %vm2522, %v2518, inf
        %2524 = vmin.xlane.f32.xlu0 %v2523
        %v2525 = vpop.xlane.xlu0 %2524
        %v2526 = vcvt.f32.s32 %v2525
        %v2527 = vcvt.f32.s32 %v2521
        %v2528 = vshll.u32 %v2527, 16
        %v2529 = vadd.s32 %v2528, %v2526
        %vm2530 = vcmask 72768
        %2531 = vst.msk [vmem:[#allocation2] sm:$0xff] %vm2530, %v2484
        %2532 = vst.msk [vmem:[#allocation2 + $0x8] sm:$0xff] %vm2530, %v2499
        %2533 = vst.msk [vmem:[#allocation2 + $0x10] sm:$0xff] %vm2530, %v2514
        %2534 = vst.msk [vmem:[#allocation2 + $0x18] sm:$0xff] %vm2530, %v2529
        %vm2535 = vcmp.eq.s32.totalorder %v2466, %v2484
        %vm2536 = vcmp.eq.s32.totalorder %v2467, %v2499
        %vm2537 = vcmp.eq.s32.totalorder %v2468, %v2514
        %vm2538 = vcmp.eq.s32.totalorder %v2469, %v2529
        %v2539 = vsel %vm2535, 1, 0
        %v2540 = vsel %vm2536, 1, 0
        %v2541 = vsel %vm2537, 1, 0
        %v2542 = vsel %vm2538, 1, 0
        %v2543 = vcvt.s32.f32 %v2539
        %v2544 = vcvt.s32.f32 %v2540
        %v2545 = vcvt.s32.f32 %v2541
        %v2546 = vcvt.s32.f32 %v2542
        %v2548 = vsel %vm569, %v2543, 0
        %v2551 = vsel %vm569, %v2544, 0
        %v2554 = vsel %vm569, %v2545, 0
        %v2557 = vsel %vm569, %v2546, 0
        %2559 = vmatprep.subr.mxu0 0.0
        %2560 = vmatpush1.xpose.msra.mxu0 %v2548
        %2561 = vmatprep.subr.mxu0 0.0
        %2562 = vmatpush1.xpose.msra.mxu0 %v2551
        %2563 = vmatprep.subr.mxu0 0.0
        %2564 = vmatpush1.xpose.msra.mxu0 %v2554
        %2565 = vmatprep.subr.mxu0 0.0
        %2566 = vmatpush1.xpose.msra.mxu0 %v2557
        %2567 = vmatprep.subr.mxu0 0.0
        %2568 = vmatpush1.xpose.msra.mxu0 0.0
        %2569 = vmatprep.subr.mxu0 0.0
        %2570 = vmatpush1.xpose.msra.mxu0 0.0
        %2571 = vmatprep.subr.mxu0 0.0
        %2572 = vmatpush1.xpose.msra.mxu0 0.0
        %2573 = vmatprep.subr.mxu0 0.0
        %2574 = vmatpush1.xpose.msra.mxu0 0.0
        %2575 = vmatprep.subr.mxu0 0.0
        %2576 = vmatpush1.xpose.msra.mxu0 0.0
        %2577 = vmatprep.subr.mxu0 0.0
        %2578 = vmatpush1.xpose.msra.mxu0 0.0
        %2579 = vmatprep.subr.mxu0 0.0
        %2580 = vmatpush1.xpose.msra.mxu0 0.0
        %2581 = vmatprep.subr.mxu0 0.0
        %2582 = vmatpush1.xpose.msra.mxu0 0.0
        %2583 = vmatprep.subr.mxu0 0.0
        %2584 = vmatpush1.xpose.msra.mxu0 0.0
        %2585 = vmatprep.subr.mxu0 0.0
        %2586 = vmatpush1.xpose.msra.mxu0 0.0
        %2587 = vmatprep.subr.mxu0 0.0
        %2588 = vmatpush1.xpose.msra.mxu0 0.0
        %2589 = vmatprep.subr.mxu0 0.0
        %2590 = vmatpush1.xpose.msra.mxu0 0.0
        %2591 = vmatprep.subr.mxu0 0.0
        %2592 = vmatpush1.xpose.msra.mxu0 0.0
        %2593 = vmatprep.subr.mxu0 0.0
        %2594 = vmatpush1.xpose.msra.mxu0 0.0
        %2595 = vmatprep.subr.mxu0 0.0
        %2596 = vmatpush1.xpose.msra.mxu0 0.0
        %2597 = vmatprep.subr.mxu0 0.0
        %2598 = vmatpush1.xpose.msra.mxu0 0.0
        %2599 = vmatprep.subr.mxu0 0.0
        %2600 = vmatpush1.xpose.msra.mxu0 0.0
        %2601 = vmatprep.subr.mxu0 0.0
        %2602 = vmatpush1.xpose.msra.mxu0 0.0
        %2603 = vmatprep.subr.mxu0 0.0
        %2604 = vmatpush1.xpose.msra.mxu0 0.0
        %2605 = vmatprep.subr.mxu0 0.0
        %2606 = vmatpush1.xpose.msra.mxu0 0.0
        %2607 = vmatprep.subr.mxu0 0.0
        %2608 = vmatpush1.xpose.msra.mxu0 0.0
        %2609 = vmatprep.subr.mxu0 0.0
        %2610 = vmatpush1.xpose.msra.mxu0 0.0
        %2611 = vmatprep.subr.mxu0 0.0
        %2612 = vmatpush1.xpose.msra.mxu0 0.0
        %2613 = vmatprep.subr.mxu0 0.0
        %2614 = vmatpush1.xpose.msra.mxu0 0.0
        %2615 = vmatprep.subr.mxu0 0.0
        %2616 = vmatpush1.xpose.msra.mxu0 0.0
        %2617 = vmatprep.subr.mxu0 0.0
        %2618 = vmatpush1.xpose.msra.mxu0 0.0
        %2619 = vmatprep.subr.mxu0 0.0
        %2620 = vmatpush1.xpose.msra.mxu0 0.0
        %2621 = vmatprep.subr.mxu0 0.0
        %2622 = vmatpush1.xpose.msra.mxu0 0.0
        %2623 = vmatprep.mubr.f32.mxu0 0.0
        %2624 = vmatmul.mubr.f32.gmra.mrb[0].mxu0 %v647
        %v2625 = vpop.f32.mrb[0].mxu0
        %v2626 = vadd.f32 0.0, %v2625
        %v2627 = vpop.f32.mrb[0].mxu0
        %2628 = vdwg.mxu0
        %s2629 = scalar_lea.vmem %s399, 32
        %2630 = vst.msk [vmem:[%s2629] sm:$0x7] %vm731, %v2626
        %2631 = vmatprep.subr.mxu0 0.0
        %2632 = vmatpush1.xpose.msra.mxu0 %v2548
        %2633 = vmatprep.subr.mxu0 0.0
        %2634 = vmatpush1.xpose.msra.mxu0 %v2551
        %2635 = vmatprep.subr.mxu0 0.0
        %2636 = vmatpush1.xpose.msra.mxu0 %v2554
        %2637 = vmatprep.subr.mxu0 0.0
        %2638 = vmatpush1.xpose.msra.mxu0 %v2557
        %2639 = vmatprep.subr.mxu0 0.0
        %2640 = vmatpush1.xpose.msra.mxu0 0.0
        %2641 = vmatprep.subr.mxu0 0.0
        %2642 = vmatpush1.xpose.msra.mxu0 0.0
        %2643 = vmatprep.subr.mxu0 0.0
        %2644 = vmatpush1.xpose.msra.mxu0 0.0
        %2645 = vmatprep.subr.mxu0 0.0
        %2646 = vmatpush1.xpose.msra.mxu0 0.0
        %2647 = vmatprep.subr.mxu0 0.0
        %2648 = vmatpush1.xpose.msra.mxu0 0.0
        %2649 = vmatprep.subr.mxu0 0.0
        %2650 = vmatpush1.xpose.msra.mxu0 0.0
        %2651 = vmatprep.subr.mxu0 0.0
        %2652 = vmatpush1.xpose.msra.mxu0 0.0
        %2653 = vmatprep.subr.mxu0 0.0
        %2654 = vmatpush1.xpose.msra.mxu0 0.0
        %2655 = vmatprep.subr.mxu0 0.0
        %2656 = vmatpush1.xpose.msra.mxu0 0.0
        %2657 = vmatprep.subr.mxu0 0.0
        %2658 = vmatpush1.xpose.msra.mxu0 0.0
        %2659 = vmatprep.subr.mxu0 0.0
        %2660 = vmatpush1.xpose.msra.mxu0 0.0
        %2661 = vmatprep.subr.mxu0 0.0
        %2662 = vmatpush1.xpose.msra.mxu0 0.0
        %2663 = vmatprep.subr.mxu0 0.0
        %2664 = vmatpush1.xpose.msra.mxu0 0.0
        %2665 = vmatprep.subr.mxu0 0.0
        %2666 = vmatpush1.xpose.msra.mxu0 0.0
        %2667 = vmatprep.subr.mxu0 0.0
        %2668 = vmatpush1.xpose.msra.mxu0 0.0
        %2669 = vmatprep.subr.mxu0 0.0
        %2670 = vmatpush1.xpose.msra.mxu0 0.0
        %2671 = vmatprep.subr.mxu0 0.0
        %2672 = vmatpush1.xpose.msra.mxu0 0.0
        %2673 = vmatprep.subr.mxu0 0.0
        %2674 = vmatpush1.xpose.msra.mxu0 0.0
        %2675 = vmatprep.subr.mxu0 0.0
        %2676 = vmatpush1.xpose.msra.mxu0 0.0
        %2677 = vmatprep.subr.mxu0 0.0
        %2678 = vmatpush1.xpose.msra.mxu0 0.0
        %2679 = vmatprep.subr.mxu0 0.0
        %2680 = vmatpush1.xpose.msra.mxu0 0.0
        %2681 = vmatprep.subr.mxu0 0.0
        %2682 = vmatpush1.xpose.msra.mxu0 0.0
        %2683 = vmatprep.subr.mxu0 0.0
        %2684 = vmatpush1.xpose.msra.mxu0 0.0
        %2685 = vmatprep.subr.mxu0 0.0
        %2686 = vmatpush1.xpose.msra.mxu0 0.0
        %2687 = vmatprep.subr.mxu0 0.0
        %2688 = vmatpush1.xpose.msra.mxu0 0.0
        %2689 = vmatprep.subr.mxu0 0.0
        %2690 = vmatpush1.xpose.msra.mxu0 0.0
        %2691 = vmatprep.subr.mxu0 0.0
        %2692 = vmatpush1.xpose.msra.mxu0 0.0
        %2693 = vmatprep.subr.mxu0 0.0
        %2694 = vmatpush1.xpose.msra.mxu0 0.0
        %2695 = vmatprep.mubr.f32.mxu0 0.0
        %2696 = vmatmul.mubr.f32.gmra.mrb[0].mxu0 %v734
        %v2697 = vpop.f32.mrb[0].mxu0
        %v2698 = vadd.f32 0.0, %v2697
        %v2699 = vpop.f32.mrb[0].mxu0
        %2700 = vdwg.mxu0
        %s2701 = scalar_lea.vmem %s407, 32
        %2702 = vst.msk [vmem:[%s2701] sm:$0x7] %vm731, %v2698
        %v2703 = vsel %vm2535, 2147483647, %v2466
        %v2704 = vsel %vm2536, 2147483647, %v2467
        %v2705 = vsel %vm2537, 2147483647, %v2468
        %v2706 = vsel %vm2538, 2147483647, %v2469
        %v2707 = vsel %vm569, %v2703, 2147483647
        %v2708 = vand.u32 %v2707, 65535
        %v2709 = vshra.s32 %v2707, 16
        %v2710 = vcvt.s32.f32 %v2708
        %v2711 = vcvt.s32.f32 %v2709
        %2712 = vmin.xlane.f32.xlu0 %v2711
        %v2713 = vpop.xlane.xlu0 %2712
        %vm2714 = vcmp.eq.f32.partialorder %v2711, %v2713
        %v2715 = vsel %vm2714, %v2710, inf
        %2716 = vmin.xlane.f32.xlu0 %v2715
        %v2717 = vpop.xlane.xlu0 %2716
        %v2718 = vcvt.f32.s32 %v2717
        %v2719 = vcvt.f32.s32 %v2713
        %v2720 = vshll.u32 %v2719, 16
        %v2721 = vadd.s32 %v2720, %v2718
        %v2722 = vsel %vm569, %v2704, 2147483647
        %v2723 = vand.u32 %v2722, 65535
        %v2724 = vshra.s32 %v2722, 16
        %v2725 = vcvt.s32.f32 %v2723
        %v2726 = vcvt.s32.f32 %v2724
        %2727 = vmin.xlane.f32.xlu0 %v2726
        %v2728 = vpop.xlane.xlu0 %2727
        %vm2729 = vcmp.eq.f32.partialorder %v2726, %v2728
        %v2730 = vsel %vm2729, %v2725, inf
        %2731 = vmin.xlane.f32.xlu0 %v2730
        %v2732 = vpop.xlane.xlu0 %2731
        %v2733 = vcvt.f32.s32 %v2732
        %v2734 = vcvt.f32.s32 %v2728
        %v2735 = vshll.u32 %v2734, 16
        %v2736 = vadd.s32 %v2735, %v2733
        %v2737 = vsel %vm569, %v2705, 2147483647
        %v2738 = vand.u32 %v2737, 65535
        %v2739 = vshra.s32 %v2737, 16
        %v2740 = vcvt.s32.f32 %v2738
        %v2741 = vcvt.s32.f32 %v2739
        %2742 = vmin.xlane.f32.xlu0 %v2741
        %v2743 = vpop.xlane.xlu0 %2742
        %vm2744 = vcmp.eq.f32.partialorder %v2741, %v2743
        %v2745 = vsel %vm2744, %v2740, inf
        %2746 = vmin.xlane.f32.xlu0 %v2745
        %v2747 = vpop.xlane.xlu0 %2746
        %v2748 = vcvt.f32.s32 %v2747
        %v2749 = vcvt.f32.s32 %v2743
        %v2750 = vshll.u32 %v2749, 16
        %v2751 = vadd.s32 %v2750, %v2748
        %v2752 = vsel %vm569, %v2706, 2147483647
        %v2753 = vand.u32 %v2752, 65535
        %v2754 = vshra.s32 %v2752, 16
        %v2755 = vcvt.s32.f32 %v2753
        %v2756 = vcvt.s32.f32 %v2754
        %2757 = vmin.xlane.f32.xlu0 %v2756
        %v2758 = vpop.xlane.xlu0 %2757
        %vm2759 = vcmp.eq.f32.partialorder %v2756, %v2758
        %v2760 = vsel %vm2759, %v2755, inf
        %2761 = vmin.xlane.f32.xlu0 %v2760
        %v2762 = vpop.xlane.xlu0 %2761
        %v2763 = vcvt.f32.s32 %v2762
        %v2764 = vcvt.f32.s32 %v2758
        %v2765 = vshll.u32 %v2764, 16
        %v2766 = vadd.s32 %v2765, %v2763
        %vm2767 = vcmask 80968
        %2768 = vst.msk [vmem:[#allocation2] sm:$0xff] %vm2767, %v2721
        %2769 = vst.msk [vmem:[#allocation2 + $0x8] sm:$0xff] %vm2767, %v2736
        %2770 = vst.msk [vmem:[#allocation2 + $0x10] sm:$0xff] %vm2767, %v2751
        %2771 = vst.msk [vmem:[#allocation2 + $0x18] sm:$0xff] %vm2767, %v2766
        %vm2772 = vcmp.eq.s32.totalorder %v2703, %v2721
        %vm2773 = vcmp.eq.s32.totalorder %v2704, %v2736
        %vm2774 = vcmp.eq.s32.totalorder %v2705, %v2751
        %vm2775 = vcmp.eq.s32.totalorder %v2706, %v2766
        %v2776 = vsel %vm2772, 1, 0
        %v2777 = vsel %vm2773, 1, 0
        %v2778 = vsel %vm2774, 1, 0
        %v2779 = vsel %vm2775, 1, 0
        %v2780 = vcvt.s32.f32 %v2776
        %v2781 = vcvt.s32.f32 %v2777
        %v2782 = vcvt.s32.f32 %v2778
        %v2783 = vcvt.s32.f32 %v2779
        %v2785 = vsel %vm569, %v2780, 0
        %v2788 = vsel %vm569, %v2781, 0
        %v2791 = vsel %vm569, %v2782, 0
        %v2794 = vsel %vm569, %v2783, 0
        %2796 = vmatprep.subr.mxu0 0.0
        %2797 = vmatpush1.xpose.msra.mxu0 %v2785
        %2798 = vmatprep.subr.mxu0 0.0
        %2799 = vmatpush1.xpose.msra.mxu0 %v2788
        %2800 = vmatprep.subr.mxu0 0.0
        %2801 = vmatpush1.xpose.msra.mxu0 %v2791
        %2802 = vmatprep.subr.mxu0 0.0
        %2803 = vmatpush1.xpose.msra.mxu0 %v2794
        %2804 = vmatprep.subr.mxu0 0.0
        %2805 = vmatpush1.xpose.msra.mxu0 0.0
        %2806 = vmatprep.subr.mxu0 0.0
        %2807 = vmatpush1.xpose.msra.mxu0 0.0
        %2808 = vmatprep.subr.mxu0 0.0
        %2809 = vmatpush1.xpose.msra.mxu0 0.0
        %2810 = vmatprep.subr.mxu0 0.0
        %2811 = vmatpush1.xpose.msra.mxu0 0.0
        %2812 = vmatprep.subr.mxu0 0.0
        %2813 = vmatpush1.xpose.msra.mxu0 0.0
        %2814 = vmatprep.subr.mxu0 0.0
        %2815 = vmatpush1.xpose.msra.mxu0 0.0
        %2816 = vmatprep.subr.mxu0 0.0
        %2817 = vmatpush1.xpose.msra.mxu0 0.0
        %2818 = vmatprep.subr.mxu0 0.0
        %2819 = vmatpush1.xpose.msra.mxu0 0.0
        %2820 = vmatprep.subr.mxu0 0.0
        %2821 = vmatpush1.xpose.msra.mxu0 0.0
        %2822 = vmatprep.subr.mxu0 0.0
        %2823 = vmatpush1.xpose.msra.mxu0 0.0
        %2824 = vmatprep.subr.mxu0 0.0
        %2825 = vmatpush1.xpose.msra.mxu0 0.0
        %2826 = vmatprep.subr.mxu0 0.0
        %2827 = vmatpush1.xpose.msra.mxu0 0.0
        %2828 = vmatprep.subr.mxu0 0.0
        %2829 = vmatpush1.xpose.msra.mxu0 0.0
        %2830 = vmatprep.subr.mxu0 0.0
        %2831 = vmatpush1.xpose.msra.mxu0 0.0
        %2832 = vmatprep.subr.mxu0 0.0
        %2833 = vmatpush1.xpose.msra.mxu0 0.0
        %2834 = vmatprep.subr.mxu0 0.0
        %2835 = vmatpush1.xpose.msra.mxu0 0.0
        %2836 = vmatprep.subr.mxu0 0.0
        %2837 = vmatpush1.xpose.msra.mxu0 0.0
        %2838 = vmatprep.subr.mxu0 0.0
        %2839 = vmatpush1.xpose.msra.mxu0 0.0
        %2840 = vmatprep.subr.mxu0 0.0
        %2841 = vmatpush1.xpose.msra.mxu0 0.0
        %2842 = vmatprep.subr.mxu0 0.0
        %2843 = vmatpush1.xpose.msra.mxu0 0.0
        %2844 = vmatprep.subr.mxu0 0.0
        %2845 = vmatpush1.xpose.msra.mxu0 0.0
        %2846 = vmatprep.subr.mxu0 0.0
        %2847 = vmatpush1.xpose.msra.mxu0 0.0
        %2848 = vmatprep.subr.mxu0 0.0
        %2849 = vmatpush1.xpose.msra.mxu0 0.0
        %2850 = vmatprep.subr.mxu0 0.0
        %2851 = vmatpush1.xpose.msra.mxu0 0.0
        %2852 = vmatprep.subr.mxu0 0.0
        %2853 = vmatpush1.xpose.msra.mxu0 0.0
        %2854 = vmatprep.subr.mxu0 0.0
        %2855 = vmatpush1.xpose.msra.mxu0 0.0
        %2856 = vmatprep.subr.mxu0 0.0
        %2857 = vmatpush1.xpose.msra.mxu0 0.0
        %2858 = vmatprep.subr.mxu0 0.0
        %2859 = vmatpush1.xpose.msra.mxu0 0.0
        %2860 = vmatprep.mubr.f32.mxu0 0.0
        %2861 = vmatmul.mubr.f32.gmra.mrb[0].mxu0 %v647
        %v2862 = vpop.f32.mrb[0].mxu0
        %v2863 = vadd.f32 0.0, %v2862
        %v2864 = vpop.f32.mrb[0].mxu0
        %2865 = vdwg.mxu0
        %s2866 = scalar_lea.vmem %s399, 36
        %2867 = vst.msk [vmem:[%s2866] sm:$0x7] %vm731, %v2863
        %2868 = vmatprep.subr.mxu0 0.0
        %2869 = vmatpush1.xpose.msra.mxu0 %v2785
        %2870 = vmatprep.subr.mxu0 0.0
        %2871 = vmatpush1.xpose.msra.mxu0 %v2788
        %2872 = vmatprep.subr.mxu0 0.0
        %2873 = vmatpush1.xpose.msra.mxu0 %v2791
        %2874 = vmatprep.subr.mxu0 0.0
        %2875 = vmatpush1.xpose.msra.mxu0 %v2794
        %2876 = vmatprep.subr.mxu0 0.0
        %2877 = vmatpush1.xpose.msra.mxu0 0.0
        %2878 = vmatprep.subr.mxu0 0.0
        %2879 = vmatpush1.xpose.msra.mxu0 0.0
        %2880 = vmatprep.subr.mxu0 0.0
        %2881 = vmatpush1.xpose.msra.mxu0 0.0
        %2882 = vmatprep.subr.mxu0 0.0
        %2883 = vmatpush1.xpose.msra.mxu0 0.0
        %2884 = vmatprep.subr.mxu0 0.0
        %2885 = vmatpush1.xpose.msra.mxu0 0.0
        %2886 = vmatprep.subr.mxu0 0.0
        %2887 = vmatpush1.xpose.msra.mxu0 0.0
        %2888 = vmatprep.subr.mxu0 0.0
        %2889 = vmatpush1.xpose.msra.mxu0 0.0
        %2890 = vmatprep.subr.mxu0 0.0
        %2891 = vmatpush1.xpose.msra.mxu0 0.0
        %2892 = vmatprep.subr.mxu0 0.0
        %2893 = vmatpush1.xpose.msra.mxu0 0.0
        %2894 = vmatprep.subr.mxu0 0.0
        %2895 = vmatpush1.xpose.msra.mxu0 0.0
        %2896 = vmatprep.subr.mxu0 0.0
        %2897 = vmatpush1.xpose.msra.mxu0 0.0
        %2898 = vmatprep.subr.mxu0 0.0
        %2899 = vmatpush1.xpose.msra.mxu0 0.0
        %2900 = vmatprep.subr.mxu0 0.0
        %2901 = vmatpush1.xpose.msra.mxu0 0.0
        %2902 = vmatprep.subr.mxu0 0.0
        %2903 = vmatpush1.xpose.msra.mxu0 0.0
        %2904 = vmatprep.subr.mxu0 0.0
        %2905 = vmatpush1.xpose.msra.mxu0 0.0
        %2906 = vmatprep.subr.mxu0 0.0
        %2907 = vmatpush1.xpose.msra.mxu0 0.0
        %2908 = vmatprep.subr.mxu0 0.0
        %2909 = vmatpush1.xpose.msra.mxu0 0.0
        %2910 = vmatprep.subr.mxu0 0.0
        %2911 = vmatpush1.xpose.msra.mxu0 0.0
        %2912 = vmatprep.subr.mxu0 0.0
        %2913 = vmatpush1.xpose.msra.mxu0 0.0
        %2914 = vmatprep.subr.mxu0 0.0
        %2915 = vmatpush1.xpose.msra.mxu0 0.0
        %2916 = vmatprep.subr.mxu0 0.0
        %2917 = vmatpush1.xpose.msra.mxu0 0.0
        %2918 = vmatprep.subr.mxu0 0.0
        %2919 = vmatpush1.xpose.msra.mxu0 0.0
        %2920 = vmatprep.subr.mxu0 0.0
        %2921 = vmatpush1.xpose.msra.mxu0 0.0
        %2922 = vmatprep.subr.mxu0 0.0
        %2923 = vmatpush1.xpose.msra.mxu0 0.0
        %2924 = vmatprep.subr.mxu0 0.0
        %2925 = vmatpush1.xpose.msra.mxu0 0.0
        %2926 = vmatprep.subr.mxu0 0.0
        %2927 = vmatpush1.xpose.msra.mxu0 0.0
        %2928 = vmatprep.subr.mxu0 0.0
        %2929 = vmatpush1.xpose.msra.mxu0 0.0
        %2930 = vmatprep.subr.mxu0 0.0
        %2931 = vmatpush1.xpose.msra.mxu0 0.0
        %2932 = vmatprep.mubr.f32.mxu0 0.0
        %2933 = vmatmul.mubr.f32.gmra.mrb[0].mxu0 %v734
        %v2934 = vpop.f32.mrb[0].mxu0
        %v2935 = vadd.f32 0.0, %v2934
        %v2936 = vpop.f32.mrb[0].mxu0
        %2937 = vdwg.mxu0
        %s2938 = scalar_lea.vmem %s407, 36
        %2939 = vst.msk [vmem:[%s2938] sm:$0x7] %vm731, %v2935
        %v2940 = vsel %vm2772, 2147483647, %v2703
        %v2941 = vsel %vm2773, 2147483647, %v2704
        %v2942 = vsel %vm2774, 2147483647, %v2705
        %v2943 = vsel %vm2775, 2147483647, %v2706
        %v2944 = vsel %vm569, %v2940, 2147483647
        %v2945 = vand.u32 %v2944, 65535
        %v2946 = vshra.s32 %v2944, 16
        %v2947 = vcvt.s32.f32 %v2945
        %v2948 = vcvt.s32.f32 %v2946
        %2949 = vmin.xlane.f32.xlu0 %v2948
        %v2950 = vpop.xlane.xlu0 %2949
        %vm2951 = vcmp.eq.f32.partialorder %v2948, %v2950
        %v2952 = vsel %vm2951, %v2947, inf
        %2953 = vmin.xlane.f32.xlu0 %v2952
        %v2954 = vpop.xlane.xlu0 %2953
        %v2955 = vcvt.f32.s32 %v2954
        %v2956 = vcvt.f32.s32 %v2950
        %v2957 = vshll.u32 %v2956, 16
        %v2958 = vadd.s32 %v2957, %v2955
        %v2959 = vsel %vm569, %v2941, 2147483647
        %v2960 = vand.u32 %v2959, 65535
        %v2961 = vshra.s32 %v2959, 16
        %v2962 = vcvt.s32.f32 %v2960
        %v2963 = vcvt.s32.f32 %v2961
        %2964 = vmin.xlane.f32.xlu0 %v2963
        %v2965 = vpop.xlane.xlu0 %2964
        %vm2966 = vcmp.eq.f32.partialorder %v2963, %v2965
        %v2967 = vsel %vm2966, %v2962, inf
        %2968 = vmin.xlane.f32.xlu0 %v2967
        %v2969 = vpop.xlane.xlu0 %2968
        %v2970 = vcvt.f32.s32 %v2969
        %v2971 = vcvt.f32.s32 %v2965
        %v2972 = vshll.u32 %v2971, 16
        %v2973 = vadd.s32 %v2972, %v2970
        %v2974 = vsel %vm569, %v2942, 2147483647
        %v2975 = vand.u32 %v2974, 65535
        %v2976 = vshra.s32 %v2974, 16
        %v2977 = vcvt.s32.f32 %v2975
        %v2978 = vcvt.s32.f32 %v2976
        %2979 = vmin.xlane.f32.xlu0 %v2978
        %v2980 = vpop.xlane.xlu0 %2979
        %vm2981 = vcmp.eq.f32.partialorder %v2978, %v2980
        %v2982 = vsel %vm2981, %v2977, inf
        %2983 = vmin.xlane.f32.xlu0 %v2982
        %v2984 = vpop.xlane.xlu0 %2983
        %v2985 = vcvt.f32.s32 %v2984
        %v2986 = vcvt.f32.s32 %v2980
        %v2987 = vshll.u32 %v2986, 16
        %v2988 = vadd.s32 %v2987, %v2985
        %v2989 = vsel %vm569, %v2943, 2147483647
        %v2990 = vand.u32 %v2989, 65535
        %v2991 = vshra.s32 %v2989, 16
        %v2992 = vcvt.s32.f32 %v2990
        %v2993 = vcvt.s32.f32 %v2991
        %2994 = vmin.xlane.f32.xlu0 %v2993
        %v2995 = vpop.xlane.xlu0 %2994
        %vm2996 = vcmp.eq.f32.partialorder %v2993, %v2995
        %v2997 = vsel %vm2996, %v2992, inf
        %2998 = vmin.xlane.f32.xlu0 %v2997
        %v2999 = vpop.xlane.xlu0 %2998
        %v3000 = vcvt.f32.s32 %v2999
        %v3001 = vcvt.f32.s32 %v2995
        %v3002 = vshll.u32 %v3001, 16
        %v3003 = vadd.s32 %v3002, %v3000
        %vm3004 = vcmask 89168
        %3005 = vst.msk [vmem:[#allocation2] sm:$0xff] %vm3004, %v2958
        %3006 = vst.msk [vmem:[#allocation2 + $0x8] sm:$0xff] %vm3004, %v2973
        %3007 = vst.msk [vmem:[#allocation2 + $0x10] sm:$0xff] %vm3004, %v2988
        %3008 = vst.msk [vmem:[#allocation2 + $0x18] sm:$0xff] %vm3004, %v3003
        %vm3009 = vcmp.eq.s32.totalorder %v2940, %v2958
        %vm3010 = vcmp.eq.s32.totalorder %v2941, %v2973
        %vm3011 = vcmp.eq.s32.totalorder %v2942, %v2988
        %vm3012 = vcmp.eq.s32.totalorder %v2943, %v3003
        %v3013 = vsel %vm3009, 1, 0
        %v3014 = vsel %vm3010, 1, 0
        %v3015 = vsel %vm3011, 1, 0
        %v3016 = vsel %vm3012, 1, 0
        %v3017 = vcvt.s32.f32 %v3013
        %v3018 = vcvt.s32.f32 %v3014
        %v3019 = vcvt.s32.f32 %v3015
        %v3020 = vcvt.s32.f32 %v3016
        %v3022 = vsel %vm569, %v3017, 0
        %v3025 = vsel %vm569, %v3018, 0
        %v3028 = vsel %vm569, %v3019, 0
        %v3031 = vsel %vm569, %v3020, 0
        %3033 = vmatprep.subr.mxu0 0.0
        %3034 = vmatpush1.xpose.msra.mxu0 %v3022
        %3035 = vmatprep.subr.mxu0 0.0
        %3036 = vmatpush1.xpose.msra.mxu0 %v3025
        %3037 = vmatprep.subr.mxu0 0.0
        %3038 = vmatpush1.xpose.msra.mxu0 %v3028
        %3039 = vmatprep.subr.mxu0 0.0
        %3040 = vmatpush1.xpose.msra.mxu0 %v3031
        %3041 = vmatprep.subr.mxu0 0.0
        %3042 = vmatpush1.xpose.msra.mxu0 0.0
        %3043 = vmatprep.subr.mxu0 0.0
        %3044 = vmatpush1.xpose.msra.mxu0 0.0
        %3045 = vmatprep.subr.mxu0 0.0
        %3046 = vmatpush1.xpose.msra.mxu0 0.0
        %3047 = vmatprep.subr.mxu0 0.0
        %3048 = vmatpush1.xpose.msra.mxu0 0.0
        %3049 = vmatprep.subr.mxu0 0.0
        %3050 = vmatpush1.xpose.msra.mxu0 0.0
        %3051 = vmatprep.subr.mxu0 0.0
        %3052 = vmatpush1.xpose.msra.mxu0 0.0
        %3053 = vmatprep.subr.mxu0 0.0
        %3054 = vmatpush1.xpose.msra.mxu0 0.0
        %3055 = vmatprep.subr.mxu0 0.0
        %3056 = vmatpush1.xpose.msra.mxu0 0.0
        %3057 = vmatprep.subr.mxu0 0.0
        %3058 = vmatpush1.xpose.msra.mxu0 0.0
        %3059 = vmatprep.subr.mxu0 0.0
        %3060 = vmatpush1.xpose.msra.mxu0 0.0
        %3061 = vmatprep.subr.mxu0 0.0
        %3062 = vmatpush1.xpose.msra.mxu0 0.0
        %3063 = vmatprep.subr.mxu0 0.0
        %3064 = vmatpush1.xpose.msra.mxu0 0.0
        %3065 = vmatprep.subr.mxu0 0.0
        %3066 = vmatpush1.xpose.msra.mxu0 0.0
        %3067 = vmatprep.subr.mxu0 0.0
        %3068 = vmatpush1.xpose.msra.mxu0 0.0
        %3069 = vmatprep.subr.mxu0 0.0
        %3070 = vmatpush1.xpose.msra.mxu0 0.0
        %3071 = vmatprep.subr.mxu0 0.0
        %3072 = vmatpush1.xpose.msra.mxu0 0.0
        %3073 = vmatprep.subr.mxu0 0.0
        %3074 = vmatpush1.xpose.msra.mxu0 0.0
        %3075 = vmatprep.subr.mxu0 0.0
        %3076 = vmatpush1.xpose.msra.mxu0 0.0
        %3077 = vmatprep.subr.mxu0 0.0
        %3078 = vmatpush1.xpose.msra.mxu0 0.0
        %3079 = vmatprep.subr.mxu0 0.0
        %3080 = vmatpush1.xpose.msra.mxu0 0.0
        %3081 = vmatprep.subr.mxu0 0.0
        %3082 = vmatpush1.xpose.msra.mxu0 0.0
        %3083 = vmatprep.subr.mxu0 0.0
        %3084 = vmatpush1.xpose.msra.mxu0 0.0
        %3085 = vmatprep.subr.mxu0 0.0
        %3086 = vmatpush1.xpose.msra.mxu0 0.0
        %3087 = vmatprep.subr.mxu0 0.0
        %3088 = vmatpush1.xpose.msra.mxu0 0.0
        %3089 = vmatprep.subr.mxu0 0.0
        %3090 = vmatpush1.xpose.msra.mxu0 0.0
        %3091 = vmatprep.subr.mxu0 0.0
        %3092 = vmatpush1.xpose.msra.mxu0 0.0
        %3093 = vmatprep.subr.mxu0 0.0
        %3094 = vmatpush1.xpose.msra.mxu0 0.0
        %3095 = vmatprep.subr.mxu0 0.0
        %3096 = vmatpush1.xpose.msra.mxu0 0.0
        %3097 = vmatprep.mubr.f32.mxu0 0.0
        %3098 = vmatmul.mubr.f32.gmra.mrb[0].mxu0 %v647
        %v3099 = vpop.f32.mrb[0].mxu0
        %v3100 = vadd.f32 0.0, %v3099
        %v3101 = vpop.f32.mrb[0].mxu0
        %3102 = vdwg.mxu0
        %s3103 = scalar_lea.vmem %s399, 40
        %3104 = vst.msk [vmem:[%s3103] sm:$0x7] %vm731, %v3100
        %3105 = vmatprep.subr.mxu0 0.0
        %3106 = vmatpush1.xpose.msra.mxu0 %v3022
        %3107 = vmatprep.subr.mxu0 0.0
        %3108 = vmatpush1.xpose.msra.mxu0 %v3025
        %3109 = vmatprep.subr.mxu0 0.0
        %3110 = vmatpush1.xpose.msra.mxu0 %v3028
        %3111 = vmatprep.subr.mxu0 0.0
        %3112 = vmatpush1.xpose.msra.mxu0 %v3031
        %3113 = vmatprep.subr.mxu0 0.0
        %3114 = vmatpush1.xpose.msra.mxu0 0.0
        %3115 = vmatprep.subr.mxu0 0.0
        %3116 = vmatpush1.xpose.msra.mxu0 0.0
        %3117 = vmatprep.subr.mxu0 0.0
        %3118 = vmatpush1.xpose.msra.mxu0 0.0
        %3119 = vmatprep.subr.mxu0 0.0
        %3120 = vmatpush1.xpose.msra.mxu0 0.0
        %3121 = vmatprep.subr.mxu0 0.0
        %3122 = vmatpush1.xpose.msra.mxu0 0.0
        %3123 = vmatprep.subr.mxu0 0.0
        %3124 = vmatpush1.xpose.msra.mxu0 0.0
        %3125 = vmatprep.subr.mxu0 0.0
        %3126 = vmatpush1.xpose.msra.mxu0 0.0
        %3127 = vmatprep.subr.mxu0 0.0
        %3128 = vmatpush1.xpose.msra.mxu0 0.0
        %3129 = vmatprep.subr.mxu0 0.0
        %3130 = vmatpush1.xpose.msra.mxu0 0.0
        %3131 = vmatprep.subr.mxu0 0.0
        %3132 = vmatpush1.xpose.msra.mxu0 0.0
        %3133 = vmatprep.subr.mxu0 0.0
        %3134 = vmatpush1.xpose.msra.mxu0 0.0
        %3135 = vmatprep.subr.mxu0 0.0
        %3136 = vmatpush1.xpose.msra.mxu0 0.0
        %3137 = vmatprep.subr.mxu0 0.0
        %3138 = vmatpush1.xpose.msra.mxu0 0.0
        %3139 = vmatprep.subr.mxu0 0.0
        %3140 = vmatpush1.xpose.msra.mxu0 0.0
        %3141 = vmatprep.subr.mxu0 0.0
        %3142 = vmatpush1.xpose.msra.mxu0 0.0
        %3143 = vmatprep.subr.mxu0 0.0
        %3144 = vmatpush1.xpose.msra.mxu0 0.0
        %3145 = vmatprep.subr.mxu0 0.0
        %3146 = vmatpush1.xpose.msra.mxu0 0.0
        %3147 = vmatprep.subr.mxu0 0.0
        %3148 = vmatpush1.xpose.msra.mxu0 0.0
        %3149 = vmatprep.subr.mxu0 0.0
        %3150 = vmatpush1.xpose.msra.mxu0 0.0
        %3151 = vmatprep.subr.mxu0 0.0
        %3152 = vmatpush1.xpose.msra.mxu0 0.0
        %3153 = vmatprep.subr.mxu0 0.0
        %3154 = vmatpush1.xpose.msra.mxu0 0.0
        %3155 = vmatprep.subr.mxu0 0.0
        %3156 = vmatpush1.xpose.msra.mxu0 0.0
        %3157 = vmatprep.subr.mxu0 0.0
        %3158 = vmatpush1.xpose.msra.mxu0 0.0
        %3159 = vmatprep.subr.mxu0 0.0
        %3160 = vmatpush1.xpose.msra.mxu0 0.0
        %3161 = vmatprep.subr.mxu0 0.0
        %3162 = vmatpush1.xpose.msra.mxu0 0.0
        %3163 = vmatprep.subr.mxu0 0.0
        %3164 = vmatpush1.xpose.msra.mxu0 0.0
        %3165 = vmatprep.subr.mxu0 0.0
        %3166 = vmatpush1.xpose.msra.mxu0 0.0
        %3167 = vmatprep.subr.mxu0 0.0
        %3168 = vmatpush1.xpose.msra.mxu0 0.0
        %3169 = vmatprep.mubr.f32.mxu0 0.0
        %3170 = vmatmul.mubr.f32.gmra.mrb[0].mxu0 %v734
        %v3171 = vpop.f32.mrb[0].mxu0
        %v3172 = vadd.f32 0.0, %v3171
        %v3173 = vpop.f32.mrb[0].mxu0
        %3174 = vdwg.mxu0
        %s3175 = scalar_lea.vmem %s407, 40
        %3176 = vst.msk [vmem:[%s3175] sm:$0x7] %vm731, %v3172
        %v3177 = vsel %vm3009, 2147483647, %v2940
        %v3178 = vsel %vm3010, 2147483647, %v2941
        %v3179 = vsel %vm3011, 2147483647, %v2942
        %v3180 = vsel %vm3012, 2147483647, %v2943
        %v3181 = vsel %vm569, %v3177, 2147483647
        %v3182 = vand.u32 %v3181, 65535
        %v3183 = vshra.s32 %v3181, 16
        %v3184 = vcvt.s32.f32 %v3182
        %v3185 = vcvt.s32.f32 %v3183
        %3186 = vmin.xlane.f32.xlu0 %v3185
        %v3187 = vpop.xlane.xlu0 %3186
        %vm3188 = vcmp.eq.f32.partialorder %v3185, %v3187
        %v3189 = vsel %vm3188, %v3184, inf
        %3190 = vmin.xlane.f32.xlu0 %v3189
        %v3191 = vpop.xlane.xlu0 %3190
        %v3192 = vcvt.f32.s32 %v3191
        %v3193 = vcvt.f32.s32 %v3187
        %v3194 = vshll.u32 %v3193, 16
        %v3195 = vadd.s32 %v3194, %v3192
        %v3196 = vsel %vm569, %v3178, 2147483647
        %v3197 = vand.u32 %v3196, 65535
        %v3198 = vshra.s32 %v3196, 16
        %v3199 = vcvt.s32.f32 %v3197
        %v3200 = vcvt.s32.f32 %v3198
        %3201 = vmin.xlane.f32.xlu0 %v3200
        %v3202 = vpop.xlane.xlu0 %3201
        %vm3203 = vcmp.eq.f32.partialorder %v3200, %v3202
        %v3204 = vsel %vm3203, %v3199, inf
        %3205 = vmin.xlane.f32.xlu0 %v3204
        %v3206 = vpop.xlane.xlu0 %3205
        %v3207 = vcvt.f32.s32 %v3206
        %v3208 = vcvt.f32.s32 %v3202
        %v3209 = vshll.u32 %v3208, 16
        %v3210 = vadd.s32 %v3209, %v3207
        %v3211 = vsel %vm569, %v3179, 2147483647
        %v3212 = vand.u32 %v3211, 65535
        %v3213 = vshra.s32 %v3211, 16
        %v3214 = vcvt.s32.f32 %v3212
        %v3215 = vcvt.s32.f32 %v3213
        %3216 = vmin.xlane.f32.xlu0 %v3215
        %v3217 = vpop.xlane.xlu0 %3216
        %vm3218 = vcmp.eq.f32.partialorder %v3215, %v3217
        %v3219 = vsel %vm3218, %v3214, inf
        %3220 = vmin.xlane.f32.xlu0 %v3219
        %v3221 = vpop.xlane.xlu0 %3220
        %v3222 = vcvt.f32.s32 %v3221
        %v3223 = vcvt.f32.s32 %v3217
        %v3224 = vshll.u32 %v3223, 16
        %v3225 = vadd.s32 %v3224, %v3222
        %v3226 = vsel %vm569, %v3180, 2147483647
        %v3227 = vand.u32 %v3226, 65535
        %v3228 = vshra.s32 %v3226, 16
        %v3229 = vcvt.s32.f32 %v3227
        %v3230 = vcvt.s32.f32 %v3228
        %3231 = vmin.xlane.f32.xlu0 %v3230
        %v3232 = vpop.xlane.xlu0 %3231
        %vm3233 = vcmp.eq.f32.partialorder %v3230, %v3232
        %v3234 = vsel %vm3233, %v3229, inf
        %3235 = vmin.xlane.f32.xlu0 %v3234
        %v3236 = vpop.xlane.xlu0 %3235
        %v3237 = vcvt.f32.s32 %v3236
        %v3238 = vcvt.f32.s32 %v3232
        %v3239 = vshll.u32 %v3238, 16
        %v3240 = vadd.s32 %v3239, %v3237
        %vm3241 = vcmask 97368
        %3242 = vst.msk [vmem:[#allocation2] sm:$0xff] %vm3241, %v3195
        %3243 = vst.msk [vmem:[#allocation2 + $0x8] sm:$0xff] %vm3241, %v3210
        %3244 = vst.msk [vmem:[#allocation2 + $0x10] sm:$0xff] %vm3241, %v3225
        %3245 = vst.msk [vmem:[#allocation2 + $0x18] sm:$0xff] %vm3241, %v3240
        %vm3246 = vcmp.eq.s32.totalorder %v3177, %v3195
        %vm3247 = vcmp.eq.s32.totalorder %v3178, %v3210
        %vm3248 = vcmp.eq.s32.totalorder %v3179, %v3225
        %vm3249 = vcmp.eq.s32.totalorder %v3180, %v3240
        %v3250 = vsel %vm3246, 1, 0
        %v3251 = vsel %vm3247, 1, 0
        %v3252 = vsel %vm3248, 1, 0
        %v3253 = vsel %vm3249, 1, 0
        %v3254 = vcvt.s32.f32 %v3250
        %v3255 = vcvt.s32.f32 %v3251
        %v3256 = vcvt.s32.f32 %v3252
        %v3257 = vcvt.s32.f32 %v3253
        %v3259 = vsel %vm569, %v3254, 0
        %v3262 = vsel %vm569, %v3255, 0
        %v3265 = vsel %vm569, %v3256, 0
        %v3268 = vsel %vm569, %v3257, 0
        %3270 = vmatprep.subr.mxu0 0.0
        %3271 = vmatpush1.xpose.msra.mxu0 %v3259
        %3272 = vmatprep.subr.mxu0 0.0
        %3273 = vmatpush1.xpose.msra.mxu0 %v3262
        %3274 = vmatprep.subr.mxu0 0.0
        %3275 = vmatpush1.xpose.msra.mxu0 %v3265
        %3276 = vmatprep.subr.mxu0 0.0
        %3277 = vmatpush1.xpose.msra.mxu0 %v3268
        %3278 = vmatprep.subr.mxu0 0.0
        %3279 = vmatpush1.xpose.msra.mxu0 0.0
        %3280 = vmatprep.subr.mxu0 0.0
        %3281 = vmatpush1.xpose.msra.mxu0 0.0
        %3282 = vmatprep.subr.mxu0 0.0
        %3283 = vmatpush1.xpose.msra.mxu0 0.0
        %3284 = vmatprep.subr.mxu0 0.0
        %3285 = vmatpush1.xpose.msra.mxu0 0.0
        %3286 = vmatprep.subr.mxu0 0.0
        %3287 = vmatpush1.xpose.msra.mxu0 0.0
        %3288 = vmatprep.subr.mxu0 0.0
        %3289 = vmatpush1.xpose.msra.mxu0 0.0
        %3290 = vmatprep.subr.mxu0 0.0
        %3291 = vmatpush1.xpose.msra.mxu0 0.0
        %3292 = vmatprep.subr.mxu0 0.0
        %3293 = vmatpush1.xpose.msra.mxu0 0.0
        %3294 = vmatprep.subr.mxu0 0.0
        %3295 = vmatpush1.xpose.msra.mxu0 0.0
        %3296 = vmatprep.subr.mxu0 0.0
        %3297 = vmatpush1.xpose.msra.mxu0 0.0
        %3298 = vmatprep.subr.mxu0 0.0
        %3299 = vmatpush1.xpose.msra.mxu0 0.0
        %3300 = vmatprep.subr.mxu0 0.0
        %3301 = vmatpush1.xpose.msra.mxu0 0.0
        %3302 = vmatprep.subr.mxu0 0.0
        %3303 = vmatpush1.xpose.msra.mxu0 0.0
        %3304 = vmatprep.subr.mxu0 0.0
        %3305 = vmatpush1.xpose.msra.mxu0 0.0
        %3306 = vmatprep.subr.mxu0 0.0
        %3307 = vmatpush1.xpose.msra.mxu0 0.0
        %3308 = vmatprep.subr.mxu0 0.0
        %3309 = vmatpush1.xpose.msra.mxu0 0.0
        %3310 = vmatprep.subr.mxu0 0.0
        %3311 = vmatpush1.xpose.msra.mxu0 0.0
        %3312 = vmatprep.subr.mxu0 0.0
        %3313 = vmatpush1.xpose.msra.mxu0 0.0
        %3314 = vmatprep.subr.mxu0 0.0
        %3315 = vmatpush1.xpose.msra.mxu0 0.0
        %3316 = vmatprep.subr.mxu0 0.0
        %3317 = vmatpush1.xpose.msra.mxu0 0.0
        %3318 = vmatprep.subr.mxu0 0.0
        %3319 = vmatpush1.xpose.msra.mxu0 0.0
        %3320 = vmatprep.subr.mxu0 0.0
        %3321 = vmatpush1.xpose.msra.mxu0 0.0
        %3322 = vmatprep.subr.mxu0 0.0
        %3323 = vmatpush1.xpose.msra.mxu0 0.0
        %3324 = vmatprep.subr.mxu0 0.0
        %3325 = vmatpush1.xpose.msra.mxu0 0.0
        %3326 = vmatprep.subr.mxu0 0.0
        %3327 = vmatpush1.xpose.msra.mxu0 0.0
        %3328 = vmatprep.subr.mxu0 0.0
        %3329 = vmatpush1.xpose.msra.mxu0 0.0
        %3330 = vmatprep.subr.mxu0 0.0
        %3331 = vmatpush1.xpose.msra.mxu0 0.0
        %3332 = vmatprep.subr.mxu0 0.0
        %3333 = vmatpush1.xpose.msra.mxu0 0.0
        %3334 = vmatprep.mubr.f32.mxu0 0.0
        %3335 = vmatmul.mubr.f32.gmra.mrb[0].mxu0 %v647
        %v3336 = vpop.f32.mrb[0].mxu0
        %v3337 = vadd.f32 0.0, %v3336
        %v3338 = vpop.f32.mrb[0].mxu0
        %3339 = vdwg.mxu0
        %s3340 = scalar_lea.vmem %s399, 44
        %3341 = vst.msk [vmem:[%s3340] sm:$0x7] %vm731, %v3337
        %3342 = vmatprep.subr.mxu0 0.0
        %3343 = vmatpush1.xpose.msra.mxu0 %v3259
        %3344 = vmatprep.subr.mxu0 0.0
        %3345 = vmatpush1.xpose.msra.mxu0 %v3262
        %3346 = vmatprep.subr.mxu0 0.0
        %3347 = vmatpush1.xpose.msra.mxu0 %v3265
        %3348 = vmatprep.subr.mxu0 0.0
        %3349 = vmatpush1.xpose.msra.mxu0 %v3268
        %3350 = vmatprep.subr.mxu0 0.0
        %3351 = vmatpush1.xpose.msra.mxu0 0.0
        %3352 = vmatprep.subr.mxu0 0.0
        %3353 = vmatpush1.xpose.msra.mxu0 0.0
        %3354 = vmatprep.subr.mxu0 0.0
        %3355 = vmatpush1.xpose.msra.mxu0 0.0
        %3356 = vmatprep.subr.mxu0 0.0
        %3357 = vmatpush1.xpose.msra.mxu0 0.0
        %3358 = vmatprep.subr.mxu0 0.0
        %3359 = vmatpush1.xpose.msra.mxu0 0.0
        %3360 = vmatprep.subr.mxu0 0.0
        %3361 = vmatpush1.xpose.msra.mxu0 0.0
        %3362 = vmatprep.subr.mxu0 0.0
        %3363 = vmatpush1.xpose.msra.mxu0 0.0
        %3364 = vmatprep.subr.mxu0 0.0
        %3365 = vmatpush1.xpose.msra.mxu0 0.0
        %3366 = vmatprep.subr.mxu0 0.0
        %3367 = vmatpush1.xpose.msra.mxu0 0.0
        %3368 = vmatprep.subr.mxu0 0.0
        %3369 = vmatpush1.xpose.msra.mxu0 0.0
        %3370 = vmatprep.subr.mxu0 0.0
        %3371 = vmatpush1.xpose.msra.mxu0 0.0
        %3372 = vmatprep.subr.mxu0 0.0
        %3373 = vmatpush1.xpose.msra.mxu0 0.0
        %3374 = vmatprep.subr.mxu0 0.0
        %3375 = vmatpush1.xpose.msra.mxu0 0.0
        %3376 = vmatprep.subr.mxu0 0.0
        %3377 = vmatpush1.xpose.msra.mxu0 0.0
        %3378 = vmatprep.subr.mxu0 0.0
        %3379 = vmatpush1.xpose.msra.mxu0 0.0
        %3380 = vmatprep.subr.mxu0 0.0
        %3381 = vmatpush1.xpose.msra.mxu0 0.0
        %3382 = vmatprep.subr.mxu0 0.0
        %3383 = vmatpush1.xpose.msra.mxu0 0.0
        %3384 = vmatprep.subr.mxu0 0.0
        %3385 = vmatpush1.xpose.msra.mxu0 0.0
        %3386 = vmatprep.subr.mxu0 0.0
        %3387 = vmatpush1.xpose.msra.mxu0 0.0
        %3388 = vmatprep.subr.mxu0 0.0
        %3389 = vmatpush1.xpose.msra.mxu0 0.0
        %3390 = vmatprep.subr.mxu0 0.0
        %3391 = vmatpush1.xpose.msra.mxu0 0.0
        %3392 = vmatprep.subr.mxu0 0.0
        %3393 = vmatpush1.xpose.msra.mxu0 0.0
        %3394 = vmatprep.subr.mxu0 0.0
        %3395 = vmatpush1.xpose.msra.mxu0 0.0
        %3396 = vmatprep.subr.mxu0 0.0
        %3397 = vmatpush1.xpose.msra.mxu0 0.0
        %3398 = vmatprep.subr.mxu0 0.0
        %3399 = vmatpush1.xpose.msra.mxu0 0.0
        %3400 = vmatprep.subr.mxu0 0.0
        %3401 = vmatpush1.xpose.msra.mxu0 0.0
        %3402 = vmatprep.subr.mxu0 0.0
        %3403 = vmatpush1.xpose.msra.mxu0 0.0
        %3404 = vmatprep.subr.mxu0 0.0
        %3405 = vmatpush1.xpose.msra.mxu0 0.0
        %3406 = vmatprep.mubr.f32.mxu0 0.0
        %3407 = vmatmul.mubr.f32.gmra.mrb[0].mxu0 %v734
        %v3408 = vpop.f32.mrb[0].mxu0
        %v3409 = vadd.f32 0.0, %v3408
        %v3410 = vpop.f32.mrb[0].mxu0
        %3411 = vdwg.mxu0
        %s3412 = scalar_lea.vmem %s407, 44
        %3413 = vst.msk [vmem:[%s3412] sm:$0x7] %vm731, %v3409
        %v3414 = vsel %vm3246, 2147483647, %v3177
        %v3415 = vsel %vm3247, 2147483647, %v3178
        %v3416 = vsel %vm3248, 2147483647, %v3179
        %v3417 = vsel %vm3249, 2147483647, %v3180
        %v3418 = vsel %vm569, %v3414, 2147483647
        %v3419 = vand.u32 %v3418, 65535
        %v3420 = vshra.s32 %v3418, 16
        %v3421 = vcvt.s32.f32 %v3419
        %v3422 = vcvt.s32.f32 %v3420
        %3423 = vmin.xlane.f32.xlu0 %v3422
        %v3424 = vpop.xlane.xlu0 %3423
        %vm3425 = vcmp.eq.f32.partialorder %v3422, %v3424
        %v3426 = vsel %vm3425, %v3421, inf
        %3427 = vmin.xlane.f32.xlu0 %v3426
        %v3428 = vpop.xlane.xlu0 %3427
        %v3429 = vcvt.f32.s32 %v3428
        %v3430 = vcvt.f32.s32 %v3424
        %v3431 = vshll.u32 %v3430, 16
        %v3432 = vadd.s32 %v3431, %v3429
        %v3433 = vsel %vm569, %v3415, 2147483647
        %v3434 = vand.u32 %v3433, 65535
        %v3435 = vshra.s32 %v3433, 16
        %v3436 = vcvt.s32.f32 %v3434
        %v3437 = vcvt.s32.f32 %v3435
        %3438 = vmin.xlane.f32.xlu0 %v3437
        %v3439 = vpop.xlane.xlu0 %3438
        %vm3440 = vcmp.eq.f32.partialorder %v3437, %v3439
        %v3441 = vsel %vm3440, %v3436, inf
        %3442 = vmin.xlane.f32.xlu0 %v3441
        %v3443 = vpop.xlane.xlu0 %3442
        %v3444 = vcvt.f32.s32 %v3443
        %v3445 = vcvt.f32.s32 %v3439
        %v3446 = vshll.u32 %v3445, 16
        %v3447 = vadd.s32 %v3446, %v3444
        %v3448 = vsel %vm569, %v3416, 2147483647
        %v3449 = vand.u32 %v3448, 65535
        %v3450 = vshra.s32 %v3448, 16
        %v3451 = vcvt.s32.f32 %v3449
        %v3452 = vcvt.s32.f32 %v3450
        %3453 = vmin.xlane.f32.xlu0 %v3452
        %v3454 = vpop.xlane.xlu0 %3453
        %vm3455 = vcmp.eq.f32.partialorder %v3452, %v3454
        %v3456 = vsel %vm3455, %v3451, inf
        %3457 = vmin.xlane.f32.xlu0 %v3456
        %v3458 = vpop.xlane.xlu0 %3457
        %v3459 = vcvt.f32.s32 %v3458
        %v3460 = vcvt.f32.s32 %v3454
        %v3461 = vshll.u32 %v3460, 16
        %v3462 = vadd.s32 %v3461, %v3459
        %v3463 = vsel %vm569, %v3417, 2147483647
        %v3464 = vand.u32 %v3463, 65535
        %v3465 = vshra.s32 %v3463, 16
        %v3466 = vcvt.s32.f32 %v3464
        %v3467 = vcvt.s32.f32 %v3465
        %3468 = vmin.xlane.f32.xlu0 %v3467
        %v3469 = vpop.xlane.xlu0 %3468
        %vm3470 = vcmp.eq.f32.partialorder %v3467, %v3469
        %v3471 = vsel %vm3470, %v3466, inf
        %3472 = vmin.xlane.f32.xlu0 %v3471
        %v3473 = vpop.xlane.xlu0 %3472
        %v3474 = vcvt.f32.s32 %v3473
        %v3475 = vcvt.f32.s32 %v3469
        %v3476 = vshll.u32 %v3475, 16
        %v3477 = vadd.s32 %v3476, %v3474
        %vm3478 = vcmask 105568
        %3479 = vst.msk [vmem:[#allocation2] sm:$0xff] %vm3478, %v3432
        %3480 = vst.msk [vmem:[#allocation2 + $0x8] sm:$0xff] %vm3478, %v3447
        %3481 = vst.msk [vmem:[#allocation2 + $0x10] sm:$0xff] %vm3478, %v3462
        %3482 = vst.msk [vmem:[#allocation2 + $0x18] sm:$0xff] %vm3478, %v3477
        %vm3483 = vcmp.eq.s32.totalorder %v3414, %v3432
        %vm3484 = vcmp.eq.s32.totalorder %v3415, %v3447
        %vm3485 = vcmp.eq.s32.totalorder %v3416, %v3462
        %vm3486 = vcmp.eq.s32.totalorder %v3417, %v3477
        %v3487 = vsel %vm3483, 1, 0
        %v3488 = vsel %vm3484, 1, 0
        %v3489 = vsel %vm3485, 1, 0
        %v3490 = vsel %vm3486, 1, 0
        %v3491 = vcvt.s32.f32 %v3487
        %v3492 = vcvt.s32.f32 %v3488
        %v3493 = vcvt.s32.f32 %v3489
        %v3494 = vcvt.s32.f32 %v3490
        %v3496 = vsel %vm569, %v3491, 0
        %v3499 = vsel %vm569, %v3492, 0
        %v3502 = vsel %vm569, %v3493, 0
        %v3505 = vsel %vm569, %v3494, 0
        %3507 = vmatprep.subr.mxu0 0.0
        %3508 = vmatpush1.xpose.msra.mxu0 %v3496
        %3509 = vmatprep.subr.mxu0 0.0
        %3510 = vmatpush1.xpose.msra.mxu0 %v3499
        %3511 = vmatprep.subr.mxu0 0.0
        %3512 = vmatpush1.xpose.msra.mxu0 %v3502
        %3513 = vmatprep.subr.mxu0 0.0
        %3514 = vmatpush1.xpose.msra.mxu0 %v3505
        %3515 = vmatprep.subr.mxu0 0.0
        %3516 = vmatpush1.xpose.msra.mxu0 0.0
        %3517 = vmatprep.subr.mxu0 0.0
        %3518 = vmatpush1.xpose.msra.mxu0 0.0
        %3519 = vmatprep.subr.mxu0 0.0
        %3520 = vmatpush1.xpose.msra.mxu0 0.0
        %3521 = vmatprep.subr.mxu0 0.0
        %3522 = vmatpush1.xpose.msra.mxu0 0.0
        %3523 = vmatprep.subr.mxu0 0.0
        %3524 = vmatpush1.xpose.msra.mxu0 0.0
        %3525 = vmatprep.subr.mxu0 0.0
        %3526 = vmatpush1.xpose.msra.mxu0 0.0
        %3527 = vmatprep.subr.mxu0 0.0
        %3528 = vmatpush1.xpose.msra.mxu0 0.0
        %3529 = vmatprep.subr.mxu0 0.0
        %3530 = vmatpush1.xpose.msra.mxu0 0.0
        %3531 = vmatprep.subr.mxu0 0.0
        %3532 = vmatpush1.xpose.msra.mxu0 0.0
        %3533 = vmatprep.subr.mxu0 0.0
        %3534 = vmatpush1.xpose.msra.mxu0 0.0
        %3535 = vmatprep.subr.mxu0 0.0
        %3536 = vmatpush1.xpose.msra.mxu0 0.0
        %3537 = vmatprep.subr.mxu0 0.0
        %3538 = vmatpush1.xpose.msra.mxu0 0.0
        %3539 = vmatprep.subr.mxu0 0.0
        %3540 = vmatpush1.xpose.msra.mxu0 0.0
        %3541 = vmatprep.subr.mxu0 0.0
        %3542 = vmatpush1.xpose.msra.mxu0 0.0
        %3543 = vmatprep.subr.mxu0 0.0
        %3544 = vmatpush1.xpose.msra.mxu0 0.0
        %3545 = vmatprep.subr.mxu0 0.0
        %3546 = vmatpush1.xpose.msra.mxu0 0.0
        %3547 = vmatprep.subr.mxu0 0.0
        %3548 = vmatpush1.xpose.msra.mxu0 0.0
        %3549 = vmatprep.subr.mxu0 0.0
        %3550 = vmatpush1.xpose.msra.mxu0 0.0
        %3551 = vmatprep.subr.mxu0 0.0
        %3552 = vmatpush1.xpose.msra.mxu0 0.0
        %3553 = vmatprep.subr.mxu0 0.0
        %3554 = vmatpush1.xpose.msra.mxu0 0.0
        %3555 = vmatprep.subr.mxu0 0.0
        %3556 = vmatpush1.xpose.msra.mxu0 0.0
        %3557 = vmatprep.subr.mxu0 0.0
        %3558 = vmatpush1.xpose.msra.mxu0 0.0
        %3559 = vmatprep.subr.mxu0 0.0
        %3560 = vmatpush1.xpose.msra.mxu0 0.0
        %3561 = vmatprep.subr.mxu0 0.0
        %3562 = vmatpush1.xpose.msra.mxu0 0.0
        %3563 = vmatprep.subr.mxu0 0.0
        %3564 = vmatpush1.xpose.msra.mxu0 0.0
        %3565 = vmatprep.subr.mxu0 0.0
        %3566 = vmatpush1.xpose.msra.mxu0 0.0
        %3567 = vmatprep.subr.mxu0 0.0
        %3568 = vmatpush1.xpose.msra.mxu0 0.0
        %3569 = vmatprep.subr.mxu0 0.0
        %3570 = vmatpush1.xpose.msra.mxu0 0.0
        %3571 = vmatprep.mubr.f32.mxu0 0.0
        %3572 = vmatmul.mubr.f32.gmra.mrb[0].mxu0 %v647
        %v3573 = vpop.f32.mrb[0].mxu0
        %v3574 = vadd.f32 0.0, %v3573
        %v3575 = vpop.f32.mrb[0].mxu0
        %3576 = vdwg.mxu0
        %s3577 = scalar_lea.vmem %s399, 48
        %3578 = vst.msk [vmem:[%s3577] sm:$0x7] %vm731, %v3574
        %3579 = vmatprep.subr.mxu0 0.0
        %3580 = vmatpush1.xpose.msra.mxu0 %v3496
        %3581 = vmatprep.subr.mxu0 0.0
        %3582 = vmatpush1.xpose.msra.mxu0 %v3499
        %3583 = vmatprep.subr.mxu0 0.0
        %3584 = vmatpush1.xpose.msra.mxu0 %v3502
        %3585 = vmatprep.subr.mxu0 0.0
        %3586 = vmatpush1.xpose.msra.mxu0 %v3505
        %3587 = vmatprep.subr.mxu0 0.0
        %3588 = vmatpush1.xpose.msra.mxu0 0.0
        %3589 = vmatprep.subr.mxu0 0.0
        %3590 = vmatpush1.xpose.msra.mxu0 0.0
        %3591 = vmatprep.subr.mxu0 0.0
        %3592 = vmatpush1.xpose.msra.mxu0 0.0
        %3593 = vmatprep.subr.mxu0 0.0
        %3594 = vmatpush1.xpose.msra.mxu0 0.0
        %3595 = vmatprep.subr.mxu0 0.0
        %3596 = vmatpush1.xpose.msra.mxu0 0.0
        %3597 = vmatprep.subr.mxu0 0.0
        %3598 = vmatpush1.xpose.msra.mxu0 0.0
        %3599 = vmatprep.subr.mxu0 0.0
        %3600 = vmatpush1.xpose.msra.mxu0 0.0
        %3601 = vmatprep.subr.mxu0 0.0
        %3602 = vmatpush1.xpose.msra.mxu0 0.0
        %3603 = vmatprep.subr.mxu0 0.0
        %3604 = vmatpush1.xpose.msra.mxu0 0.0
        %3605 = vmatprep.subr.mxu0 0.0
        %3606 = vmatpush1.xpose.msra.mxu0 0.0
        %3607 = vmatprep.subr.mxu0 0.0
        %3608 = vmatpush1.xpose.msra.mxu0 0.0
        %3609 = vmatprep.subr.mxu0 0.0
        %3610 = vmatpush1.xpose.msra.mxu0 0.0
        %3611 = vmatprep.subr.mxu0 0.0
        %3612 = vmatpush1.xpose.msra.mxu0 0.0
        %3613 = vmatprep.subr.mxu0 0.0
        %3614 = vmatpush1.xpose.msra.mxu0 0.0
        %3615 = vmatprep.subr.mxu0 0.0
        %3616 = vmatpush1.xpose.msra.mxu0 0.0
        %3617 = vmatprep.subr.mxu0 0.0
        %3618 = vmatpush1.xpose.msra.mxu0 0.0
        %3619 = vmatprep.subr.mxu0 0.0
        %3620 = vmatpush1.xpose.msra.mxu0 0.0
        %3621 = vmatprep.subr.mxu0 0.0
        %3622 = vmatpush1.xpose.msra.mxu0 0.0
        %3623 = vmatprep.subr.mxu0 0.0
        %3624 = vmatpush1.xpose.msra.mxu0 0.0
        %3625 = vmatprep.subr.mxu0 0.0
        %3626 = vmatpush1.xpose.msra.mxu0 0.0
        %3627 = vmatprep.subr.mxu0 0.0
        %3628 = vmatpush1.xpose.msra.mxu0 0.0
        %3629 = vmatprep.subr.mxu0 0.0
        %3630 = vmatpush1.xpose.msra.mxu0 0.0
        %3631 = vmatprep.subr.mxu0 0.0
        %3632 = vmatpush1.xpose.msra.mxu0 0.0
        %3633 = vmatprep.subr.mxu0 0.0
        %3634 = vmatpush1.xpose.msra.mxu0 0.0
        %3635 = vmatprep.subr.mxu0 0.0
        %3636 = vmatpush1.xpose.msra.mxu0 0.0
        %3637 = vmatprep.subr.mxu0 0.0
        %3638 = vmatpush1.xpose.msra.mxu0 0.0
        %3639 = vmatprep.subr.mxu0 0.0
        %3640 = vmatpush1.xpose.msra.mxu0 0.0
        %3641 = vmatprep.subr.mxu0 0.0
        %3642 = vmatpush1.xpose.msra.mxu0 0.0
        %3643 = vmatprep.mubr.f32.mxu0 0.0
        %3644 = vmatmul.mubr.f32.gmra.mrb[0].mxu0 %v734
        %v3645 = vpop.f32.mrb[0].mxu0
        %v3646 = vadd.f32 0.0, %v3645
        %v3647 = vpop.f32.mrb[0].mxu0
        %3648 = vdwg.mxu0
        %s3649 = scalar_lea.vmem %s407, 48
        %3650 = vst.msk [vmem:[%s3649] sm:$0x7] %vm731, %v3646
        %v3651 = vsel %vm3483, 2147483647, %v3414
        %v3652 = vsel %vm3484, 2147483647, %v3415
        %v3653 = vsel %vm3485, 2147483647, %v3416
        %v3654 = vsel %vm3486, 2147483647, %v3417
        %v3655 = vsel %vm569, %v3651, 2147483647
        %v3656 = vand.u32 %v3655, 65535
        %v3657 = vshra.s32 %v3655, 16
        %v3658 = vcvt.s32.f32 %v3656
        %v3659 = vcvt.s32.f32 %v3657
        %3660 = vmin.xlane.f32.xlu0 %v3659
        %v3661 = vpop.xlane.xlu0 %3660
        %vm3662 = vcmp.eq.f32.partialorder %v3659, %v3661
        %v3663 = vsel %vm3662, %v3658, inf
        %3664 = vmin.xlane.f32.xlu0 %v3663
        %v3665 = vpop.xlane.xlu0 %3664
        %v3666 = vcvt.f32.s32 %v3665
        %v3667 = vcvt.f32.s32 %v3661
        %v3668 = vshll.u32 %v3667, 16
        %v3669 = vadd.s32 %v3668, %v3666
        %v3670 = vsel %vm569, %v3652, 2147483647
        %v3671 = vand.u32 %v3670, 65535
        %v3672 = vshra.s32 %v3670, 16
        %v3673 = vcvt.s32.f32 %v3671
        %v3674 = vcvt.s32.f32 %v3672
        %3675 = vmin.xlane.f32.xlu0 %v3674
        %v3676 = vpop.xlane.xlu0 %3675
        %vm3677 = vcmp.eq.f32.partialorder %v3674, %v3676
        %v3678 = vsel %vm3677, %v3673, inf
        %3679 = vmin.xlane.f32.xlu0 %v3678
        %v3680 = vpop.xlane.xlu0 %3679
        %v3681 = vcvt.f32.s32 %v3680
        %v3682 = vcvt.f32.s32 %v3676
        %v3683 = vshll.u32 %v3682, 16
        %v3684 = vadd.s32 %v3683, %v3681
        %v3685 = vsel %vm569, %v3653, 2147483647
        %v3686 = vand.u32 %v3685, 65535
        %v3687 = vshra.s32 %v3685, 16
        %v3688 = vcvt.s32.f32 %v3686
        %v3689 = vcvt.s32.f32 %v3687
        %3690 = vmin.xlane.f32.xlu0 %v3689
        %v3691 = vpop.xlane.xlu0 %3690
        %vm3692 = vcmp.eq.f32.partialorder %v3689, %v3691
        %v3693 = vsel %vm3692, %v3688, inf
        %3694 = vmin.xlane.f32.xlu0 %v3693
        %v3695 = vpop.xlane.xlu0 %3694
        %v3696 = vcvt.f32.s32 %v3695
        %v3697 = vcvt.f32.s32 %v3691
        %v3698 = vshll.u32 %v3697, 16
        %v3699 = vadd.s32 %v3698, %v3696
        %v3700 = vsel %vm569, %v3654, 2147483647
        %v3701 = vand.u32 %v3700, 65535
        %v3702 = vshra.s32 %v3700, 16
        %v3703 = vcvt.s32.f32 %v3701
        %v3704 = vcvt.s32.f32 %v3702
        %3705 = vmin.xlane.f32.xlu0 %v3704
        %v3706 = vpop.xlane.xlu0 %3705
        %vm3707 = vcmp.eq.f32.partialorder %v3704, %v3706
        %v3708 = vsel %vm3707, %v3703, inf
        %3709 = vmin.xlane.f32.xlu0 %v3708
        %v3710 = vpop.xlane.xlu0 %3709
        %v3711 = vcvt.f32.s32 %v3710
        %v3712 = vcvt.f32.s32 %v3706
        %v3713 = vshll.u32 %v3712, 16
        %v3714 = vadd.s32 %v3713, %v3711
        %vm3715 = vcmask 113768
        %3716 = vst.msk [vmem:[#allocation2] sm:$0xff] %vm3715, %v3669
        %3717 = vst.msk [vmem:[#allocation2 + $0x8] sm:$0xff] %vm3715, %v3684
        %3718 = vst.msk [vmem:[#allocation2 + $0x10] sm:$0xff] %vm3715, %v3699
        %3719 = vst.msk [vmem:[#allocation2 + $0x18] sm:$0xff] %vm3715, %v3714
        %vm3720 = vcmp.eq.s32.totalorder %v3651, %v3669
        %vm3721 = vcmp.eq.s32.totalorder %v3652, %v3684
        %vm3722 = vcmp.eq.s32.totalorder %v3653, %v3699
        %vm3723 = vcmp.eq.s32.totalorder %v3654, %v3714
        %v3724 = vsel %vm3720, 1, 0
        %v3725 = vsel %vm3721, 1, 0
        %v3726 = vsel %vm3722, 1, 0
        %v3727 = vsel %vm3723, 1, 0
        %v3728 = vcvt.s32.f32 %v3724
        %v3729 = vcvt.s32.f32 %v3725
        %v3730 = vcvt.s32.f32 %v3726
        %v3731 = vcvt.s32.f32 %v3727
        %v3733 = vsel %vm569, %v3728, 0
        %v3736 = vsel %vm569, %v3729, 0
        %v3739 = vsel %vm569, %v3730, 0
        %v3742 = vsel %vm569, %v3731, 0
        %3744 = vmatprep.subr.mxu0 0.0
        %3745 = vmatpush1.xpose.msra.mxu0 %v3733
        %3746 = vmatprep.subr.mxu0 0.0
        %3747 = vmatpush1.xpose.msra.mxu0 %v3736
        %3748 = vmatprep.subr.mxu0 0.0
        %3749 = vmatpush1.xpose.msra.mxu0 %v3739
        %3750 = vmatprep.subr.mxu0 0.0
        %3751 = vmatpush1.xpose.msra.mxu0 %v3742
        %3752 = vmatprep.subr.mxu0 0.0
        %3753 = vmatpush1.xpose.msra.mxu0 0.0
        %3754 = vmatprep.subr.mxu0 0.0
        %3755 = vmatpush1.xpose.msra.mxu0 0.0
        %3756 = vmatprep.subr.mxu0 0.0
        %3757 = vmatpush1.xpose.msra.mxu0 0.0
        %3758 = vmatprep.subr.mxu0 0.0
        %3759 = vmatpush1.xpose.msra.mxu0 0.0
        %3760 = vmatprep.subr.mxu0 0.0
        %3761 = vmatpush1.xpose.msra.mxu0 0.0
        %3762 = vmatprep.subr.mxu0 0.0
        %3763 = vmatpush1.xpose.msra.mxu0 0.0
        %3764 = vmatprep.subr.mxu0 0.0
        %3765 = vmatpush1.xpose.msra.mxu0 0.0
        %3766 = vmatprep.subr.mxu0 0.0
        %3767 = vmatpush1.xpose.msra.mxu0 0.0
        %3768 = vmatprep.subr.mxu0 0.0
        %3769 = vmatpush1.xpose.msra.mxu0 0.0
        %3770 = vmatprep.subr.mxu0 0.0
        %3771 = vmatpush1.xpose.msra.mxu0 0.0
        %3772 = vmatprep.subr.mxu0 0.0
        %3773 = vmatpush1.xpose.msra.mxu0 0.0
        %3774 = vmatprep.subr.mxu0 0.0
        %3775 = vmatpush1.xpose.msra.mxu0 0.0
        %3776 = vmatprep.subr.mxu0 0.0
        %3777 = vmatpush1.xpose.msra.mxu0 0.0
        %3778 = vmatprep.subr.mxu0 0.0
        %3779 = vmatpush1.xpose.msra.mxu0 0.0
        %3780 = vmatprep.subr.mxu0 0.0
        %3781 = vmatpush1.xpose.msra.mxu0 0.0
        %3782 = vmatprep.subr.mxu0 0.0
        %3783 = vmatpush1.xpose.msra.mxu0 0.0
        %3784 = vmatprep.subr.mxu0 0.0
        %3785 = vmatpush1.xpose.msra.mxu0 0.0
        %3786 = vmatprep.subr.mxu0 0.0
        %3787 = vmatpush1.xpose.msra.mxu0 0.0
        %3788 = vmatprep.subr.mxu0 0.0
        %3789 = vmatpush1.xpose.msra.mxu0 0.0
        %3790 = vmatprep.subr.mxu0 0.0
        %3791 = vmatpush1.xpose.msra.mxu0 0.0
        %3792 = vmatprep.subr.mxu0 0.0
        %3793 = vmatpush1.xpose.msra.mxu0 0.0
        %3794 = vmatprep.subr.mxu0 0.0
        %3795 = vmatpush1.xpose.msra.mxu0 0.0
        %3796 = vmatprep.subr.mxu0 0.0
        %3797 = vmatpush1.xpose.msra.mxu0 0.0
        %3798 = vmatprep.subr.mxu0 0.0
        %3799 = vmatpush1.xpose.msra.mxu0 0.0
        %3800 = vmatprep.subr.mxu0 0.0
        %3801 = vmatpush1.xpose.msra.mxu0 0.0
        %3802 = vmatprep.subr.mxu0 0.0
        %3803 = vmatpush1.xpose.msra.mxu0 0.0
        %3804 = vmatprep.subr.mxu0 0.0
        %3805 = vmatpush1.xpose.msra.mxu0 0.0
        %3806 = vmatprep.subr.mxu0 0.0
        %3807 = vmatpush1.xpose.msra.mxu0 0.0
        %3808 = vmatprep.mubr.f32.mxu0 0.0
        %3809 = vmatmul.mubr.f32.gmra.mrb[0].mxu0 %v647
        %v3810 = vpop.f32.mrb[0].mxu0
        %v3811 = vadd.f32 0.0, %v3810
        %v3812 = vpop.f32.mrb[0].mxu0
        %3813 = vdwg.mxu0
        %s3814 = scalar_lea.vmem %s399, 52
        %3815 = vst.msk [vmem:[%s3814] sm:$0x7] %vm731, %v3811
        %3816 = vmatprep.subr.mxu0 0.0
        %3817 = vmatpush1.xpose.msra.mxu0 %v3733
        %3818 = vmatprep.subr.mxu0 0.0
        %3819 = vmatpush1.xpose.msra.mxu0 %v3736
        %3820 = vmatprep.subr.mxu0 0.0
        %3821 = vmatpush1.xpose.msra.mxu0 %v3739
        %3822 = vmatprep.subr.mxu0 0.0
        %3823 = vmatpush1.xpose.msra.mxu0 %v3742
        %3824 = vmatprep.subr.mxu0 0.0
        %3825 = vmatpush1.xpose.msra.mxu0 0.0
        %3826 = vmatprep.subr.mxu0 0.0
        %3827 = vmatpush1.xpose.msra.mxu0 0.0
        %3828 = vmatprep.subr.mxu0 0.0
        %3829 = vmatpush1.xpose.msra.mxu0 0.0
        %3830 = vmatprep.subr.mxu0 0.0
        %3831 = vmatpush1.xpose.msra.mxu0 0.0
        %3832 = vmatprep.subr.mxu0 0.0
        %3833 = vmatpush1.xpose.msra.mxu0 0.0
        %3834 = vmatprep.subr.mxu0 0.0
        %3835 = vmatpush1.xpose.msra.mxu0 0.0
        %3836 = vmatprep.subr.mxu0 0.0
        %3837 = vmatpush1.xpose.msra.mxu0 0.0
        %3838 = vmatprep.subr.mxu0 0.0
        %3839 = vmatpush1.xpose.msra.mxu0 0.0
        %3840 = vmatprep.subr.mxu0 0.0
        %3841 = vmatpush1.xpose.msra.mxu0 0.0
        %3842 = vmatprep.subr.mxu0 0.0
        %3843 = vmatpush1.xpose.msra.mxu0 0.0
        %3844 = vmatprep.subr.mxu0 0.0
        %3845 = vmatpush1.xpose.msra.mxu0 0.0
        %3846 = vmatprep.subr.mxu0 0.0
        %3847 = vmatpush1.xpose.msra.mxu0 0.0
        %3848 = vmatprep.subr.mxu0 0.0
        %3849 = vmatpush1.xpose.msra.mxu0 0.0
        %3850 = vmatprep.subr.mxu0 0.0
        %3851 = vmatpush1.xpose.msra.mxu0 0.0
        %3852 = vmatprep.subr.mxu0 0.0
        %3853 = vmatpush1.xpose.msra.mxu0 0.0
        %3854 = vmatprep.subr.mxu0 0.0
        %3855 = vmatpush1.xpose.msra.mxu0 0.0
        %3856 = vmatprep.subr.mxu0 0.0
        %3857 = vmatpush1.xpose.msra.mxu0 0.0
        %3858 = vmatprep.subr.mxu0 0.0
        %3859 = vmatpush1.xpose.msra.mxu0 0.0
        %3860 = vmatprep.subr.mxu0 0.0
        %3861 = vmatpush1.xpose.msra.mxu0 0.0
        %3862 = vmatprep.subr.mxu0 0.0
        %3863 = vmatpush1.xpose.msra.mxu0 0.0
        %3864 = vmatprep.subr.mxu0 0.0
        %3865 = vmatpush1.xpose.msra.mxu0 0.0
        %3866 = vmatprep.subr.mxu0 0.0
        %3867 = vmatpush1.xpose.msra.mxu0 0.0
        %3868 = vmatprep.subr.mxu0 0.0
        %3869 = vmatpush1.xpose.msra.mxu0 0.0
        %3870 = vmatprep.subr.mxu0 0.0
        %3871 = vmatpush1.xpose.msra.mxu0 0.0
        %3872 = vmatprep.subr.mxu0 0.0
        %3873 = vmatpush1.xpose.msra.mxu0 0.0
        %3874 = vmatprep.subr.mxu0 0.0
        %3875 = vmatpush1.xpose.msra.mxu0 0.0
        %3876 = vmatprep.subr.mxu0 0.0
        %3877 = vmatpush1.xpose.msra.mxu0 0.0
        %3878 = vmatprep.subr.mxu0 0.0
        %3879 = vmatpush1.xpose.msra.mxu0 0.0
        %3880 = vmatprep.mubr.f32.mxu0 0.0
        %3881 = vmatmul.mubr.f32.gmra.mrb[0].mxu0 %v734
        %v3882 = vpop.f32.mrb[0].mxu0
        %v3883 = vadd.f32 0.0, %v3882
        %v3884 = vpop.f32.mrb[0].mxu0
        %3885 = vdwg.mxu0
        %s3886 = scalar_lea.vmem %s407, 52
        %3887 = vst.msk [vmem:[%s3886] sm:$0x7] %vm731, %v3883
        %v3888 = vsel %vm3720, 2147483647, %v3651
        %v3889 = vsel %vm3721, 2147483647, %v3652
        %v3890 = vsel %vm3722, 2147483647, %v3653
        %v3891 = vsel %vm3723, 2147483647, %v3654
        %v3892 = vsel %vm569, %v3888, 2147483647
        %v3893 = vand.u32 %v3892, 65535
        %v3894 = vshra.s32 %v3892, 16
        %v3895 = vcvt.s32.f32 %v3893
        %v3896 = vcvt.s32.f32 %v3894
        %3897 = vmin.xlane.f32.xlu0 %v3896
        %v3898 = vpop.xlane.xlu0 %3897
        %vm3899 = vcmp.eq.f32.partialorder %v3896, %v3898
        %v3900 = vsel %vm3899, %v3895, inf
        %3901 = vmin.xlane.f32.xlu0 %v3900
        %v3902 = vpop.xlane.xlu0 %3901
        %v3903 = vcvt.f32.s32 %v3902
        %v3904 = vcvt.f32.s32 %v3898
        %v3905 = vshll.u32 %v3904, 16
        %v3906 = vadd.s32 %v3905, %v3903
        %v3907 = vsel %vm569, %v3889, 2147483647
        %v3908 = vand.u32 %v3907, 65535
        %v3909 = vshra.s32 %v3907, 16
        %v3910 = vcvt.s32.f32 %v3908
        %v3911 = vcvt.s32.f32 %v3909
        %3912 = vmin.xlane.f32.xlu0 %v3911
        %v3913 = vpop.xlane.xlu0 %3912
        %vm3914 = vcmp.eq.f32.partialorder %v3911, %v3913
        %v3915 = vsel %vm3914, %v3910, inf
        %3916 = vmin.xlane.f32.xlu0 %v3915
        %v3917 = vpop.xlane.xlu0 %3916
        %v3918 = vcvt.f32.s32 %v3917
        %v3919 = vcvt.f32.s32 %v3913
        %v3920 = vshll.u32 %v3919, 16
        %v3921 = vadd.s32 %v3920, %v3918
        %v3922 = vsel %vm569, %v3890, 2147483647
        %v3923 = vand.u32 %v3922, 65535
        %v3924 = vshra.s32 %v3922, 16
        %v3925 = vcvt.s32.f32 %v3923
        %v3926 = vcvt.s32.f32 %v3924
        %3927 = vmin.xlane.f32.xlu0 %v3926
        %v3928 = vpop.xlane.xlu0 %3927
        %vm3929 = vcmp.eq.f32.partialorder %v3926, %v3928
        %v3930 = vsel %vm3929, %v3925, inf
        %3931 = vmin.xlane.f32.xlu0 %v3930
        %v3932 = vpop.xlane.xlu0 %3931
        %v3933 = vcvt.f32.s32 %v3932
        %v3934 = vcvt.f32.s32 %v3928
        %v3935 = vshll.u32 %v3934, 16
        %v3936 = vadd.s32 %v3935, %v3933
        %v3937 = vsel %vm569, %v3891, 2147483647
        %v3938 = vand.u32 %v3937, 65535
        %v3939 = vshra.s32 %v3937, 16
        %v3940 = vcvt.s32.f32 %v3938
        %v3941 = vcvt.s32.f32 %v3939
        %3942 = vmin.xlane.f32.xlu0 %v3941
        %v3943 = vpop.xlane.xlu0 %3942
        %vm3944 = vcmp.eq.f32.partialorder %v3941, %v3943
        %v3945 = vsel %vm3944, %v3940, inf
        %3946 = vmin.xlane.f32.xlu0 %v3945
        %v3947 = vpop.xlane.xlu0 %3946
        %v3948 = vcvt.f32.s32 %v3947
        %v3949 = vcvt.f32.s32 %v3943
        %v3950 = vshll.u32 %v3949, 16
        %v3951 = vadd.s32 %v3950, %v3948
        %vm3952 = vcmask 121968
        %3953 = vst.msk [vmem:[#allocation2] sm:$0xff] %vm3952, %v3906
        %3954 = vst.msk [vmem:[#allocation2 + $0x8] sm:$0xff] %vm3952, %v3921
        %3955 = vst.msk [vmem:[#allocation2 + $0x10] sm:$0xff] %vm3952, %v3936
        %3956 = vst.msk [vmem:[#allocation2 + $0x18] sm:$0xff] %vm3952, %v3951
        %vm3957 = vcmp.eq.s32.totalorder %v3888, %v3906
        %vm3958 = vcmp.eq.s32.totalorder %v3889, %v3921
        %vm3959 = vcmp.eq.s32.totalorder %v3890, %v3936
        %vm3960 = vcmp.eq.s32.totalorder %v3891, %v3951
        %v3961 = vsel %vm3957, 1, 0
        %v3962 = vsel %vm3958, 1, 0
        %v3963 = vsel %vm3959, 1, 0
        %v3964 = vsel %vm3960, 1, 0
        %v3965 = vcvt.s32.f32 %v3961
        %v3966 = vcvt.s32.f32 %v3962
        %v3967 = vcvt.s32.f32 %v3963
        %v3968 = vcvt.s32.f32 %v3964
        %v3970 = vsel %vm569, %v3965, 0
        %v3973 = vsel %vm569, %v3966, 0
        %v3976 = vsel %vm569, %v3967, 0
        %v3979 = vsel %vm569, %v3968, 0
        %3981 = vmatprep.subr.mxu0 0.0
        %3982 = vmatpush1.xpose.msra.mxu0 %v3970
        %3983 = vmatprep.subr.mxu0 0.0
        %3984 = vmatpush1.xpose.msra.mxu0 %v3973
        %3985 = vmatprep.subr.mxu0 0.0
        %3986 = vmatpush1.xpose.msra.mxu0 %v3976
        %3987 = vmatprep.subr.mxu0 0.0
        %3988 = vmatpush1.xpose.msra.mxu0 %v3979
        %3989 = vmatprep.subr.mxu0 0.0
        %3990 = vmatpush1.xpose.msra.mxu0 0.0
        %3991 = vmatprep.subr.mxu0 0.0
        %3992 = vmatpush1.xpose.msra.mxu0 0.0
        %3993 = vmatprep.subr.mxu0 0.0
        %3994 = vmatpush1.xpose.msra.mxu0 0.0
        %3995 = vmatprep.subr.mxu0 0.0
        %3996 = vmatpush1.xpose.msra.mxu0 0.0
        %3997 = vmatprep.subr.mxu0 0.0
        %3998 = vmatpush1.xpose.msra.mxu0 0.0
        %3999 = vmatprep.subr.mxu0 0.0
        %4000 = vmatpush1.xpose.msra.mxu0 0.0
        %4001 = vmatprep.subr.mxu0 0.0
        %4002 = vmatpush1.xpose.msra.mxu0 0.0
        %4003 = vmatprep.subr.mxu0 0.0
        %4004 = vmatpush1.xpose.msra.mxu0 0.0
        %4005 = vmatprep.subr.mxu0 0.0
        %4006 = vmatpush1.xpose.msra.mxu0 0.0
        %4007 = vmatprep.subr.mxu0 0.0
        %4008 = vmatpush1.xpose.msra.mxu0 0.0
        %4009 = vmatprep.subr.mxu0 0.0
        %4010 = vmatpush1.xpose.msra.mxu0 0.0
        %4011 = vmatprep.subr.mxu0 0.0
        %4012 = vmatpush1.xpose.msra.mxu0 0.0
        %4013 = vmatprep.subr.mxu0 0.0
        %4014 = vmatpush1.xpose.msra.mxu0 0.0
        %4015 = vmatprep.subr.mxu0 0.0
        %4016 = vmatpush1.xpose.msra.mxu0 0.0
        %4017 = vmatprep.subr.mxu0 0.0
        %4018 = vmatpush1.xpose.msra.mxu0 0.0
        %4019 = vmatprep.subr.mxu0 0.0
        %4020 = vmatpush1.xpose.msra.mxu0 0.0
        %4021 = vmatprep.subr.mxu0 0.0
        %4022 = vmatpush1.xpose.msra.mxu0 0.0
        %4023 = vmatprep.subr.mxu0 0.0
        %4024 = vmatpush1.xpose.msra.mxu0 0.0
        %4025 = vmatprep.subr.mxu0 0.0
        %4026 = vmatpush1.xpose.msra.mxu0 0.0
        %4027 = vmatprep.subr.mxu0 0.0
        %4028 = vmatpush1.xpose.msra.mxu0 0.0
        %4029 = vmatprep.subr.mxu0 0.0
        %4030 = vmatpush1.xpose.msra.mxu0 0.0
        %4031 = vmatprep.subr.mxu0 0.0
        %4032 = vmatpush1.xpose.msra.mxu0 0.0
        %4033 = vmatprep.subr.mxu0 0.0
        %4034 = vmatpush1.xpose.msra.mxu0 0.0
        %4035 = vmatprep.subr.mxu0 0.0
        %4036 = vmatpush1.xpose.msra.mxu0 0.0
        %4037 = vmatprep.subr.mxu0 0.0
        %4038 = vmatpush1.xpose.msra.mxu0 0.0
        %4039 = vmatprep.subr.mxu0 0.0
        %4040 = vmatpush1.xpose.msra.mxu0 0.0
        %4041 = vmatprep.subr.mxu0 0.0
        %4042 = vmatpush1.xpose.msra.mxu0 0.0
        %4043 = vmatprep.subr.mxu0 0.0
        %4044 = vmatpush1.xpose.msra.mxu0 0.0
        %4045 = vmatprep.mubr.f32.mxu0 0.0
        %4046 = vmatmul.mubr.f32.gmra.mrb[0].mxu0 %v647
        %v4047 = vpop.f32.mrb[0].mxu0
        %v4048 = vadd.f32 0.0, %v4047
        %v4049 = vpop.f32.mrb[0].mxu0
        %4050 = vdwg.mxu0
        %s4051 = scalar_lea.vmem %s399, 56
        %4052 = vst.msk [vmem:[%s4051] sm:$0x7] %vm731, %v4048
        %4053 = vmatprep.subr.mxu0 0.0
        %4054 = vmatpush1.xpose.msra.mxu0 %v3970
        %4055 = vmatprep.subr.mxu0 0.0
        %4056 = vmatpush1.xpose.msra.mxu0 %v3973
        %4057 = vmatprep.subr.mxu0 0.0
        %4058 = vmatpush1.xpose.msra.mxu0 %v3976
        %4059 = vmatprep.subr.mxu0 0.0
        %4060 = vmatpush1.xpose.msra.mxu0 %v3979
        %4061 = vmatprep.subr.mxu0 0.0
        %4062 = vmatpush1.xpose.msra.mxu0 0.0
        %4063 = vmatprep.subr.mxu0 0.0
        %4064 = vmatpush1.xpose.msra.mxu0 0.0
        %4065 = vmatprep.subr.mxu0 0.0
        %4066 = vmatpush1.xpose.msra.mxu0 0.0
        %4067 = vmatprep.subr.mxu0 0.0
        %4068 = vmatpush1.xpose.msra.mxu0 0.0
        %4069 = vmatprep.subr.mxu0 0.0
        %4070 = vmatpush1.xpose.msra.mxu0 0.0
        %4071 = vmatprep.subr.mxu0 0.0
        %4072 = vmatpush1.xpose.msra.mxu0 0.0
        %4073 = vmatprep.subr.mxu0 0.0
        %4074 = vmatpush1.xpose.msra.mxu0 0.0
        %4075 = vmatprep.subr.mxu0 0.0
        %4076 = vmatpush1.xpose.msra.mxu0 0.0
        %4077 = vmatprep.subr.mxu0 0.0
        %4078 = vmatpush1.xpose.msra.mxu0 0.0
        %4079 = vmatprep.subr.mxu0 0.0
        %4080 = vmatpush1.xpose.msra.mxu0 0.0
        %4081 = vmatprep.subr.mxu0 0.0
        %4082 = vmatpush1.xpose.msra.mxu0 0.0
        %4083 = vmatprep.subr.mxu0 0.0
        %4084 = vmatpush1.xpose.msra.mxu0 0.0
        %4085 = vmatprep.subr.mxu0 0.0
        %4086 = vmatpush1.xpose.msra.mxu0 0.0
        %4087 = vmatprep.subr.mxu0 0.0
        %4088 = vmatpush1.xpose.msra.mxu0 0.0
        %4089 = vmatprep.subr.mxu0 0.0
        %4090 = vmatpush1.xpose.msra.mxu0 0.0
        %4091 = vmatprep.subr.mxu0 0.0
        %4092 = vmatpush1.xpose.msra.mxu0 0.0
        %4093 = vmatprep.subr.mxu0 0.0
        %4094 = vmatpush1.xpose.msra.mxu0 0.0
        %4095 = vmatprep.subr.mxu0 0.0
        %4096 = vmatpush1.xpose.msra.mxu0 0.0
        %4097 = vmatprep.subr.mxu0 0.0
        %4098 = vmatpush1.xpose.msra.mxu0 0.0
        %4099 = vmatprep.subr.mxu0 0.0
        %4100 = vmatpush1.xpose.msra.mxu0 0.0
        %4101 = vmatprep.subr.mxu0 0.0
        %4102 = vmatpush1.xpose.msra.mxu0 0.0
        %4103 = vmatprep.subr.mxu0 0.0
        %4104 = vmatpush1.xpose.msra.mxu0 0.0
        %4105 = vmatprep.subr.mxu0 0.0
        %4106 = vmatpush1.xpose.msra.mxu0 0.0
        %4107 = vmatprep.subr.mxu0 0.0
        %4108 = vmatpush1.xpose.msra.mxu0 0.0
        %4109 = vmatprep.subr.mxu0 0.0
        %4110 = vmatpush1.xpose.msra.mxu0 0.0
        %4111 = vmatprep.subr.mxu0 0.0
        %4112 = vmatpush1.xpose.msra.mxu0 0.0
        %4113 = vmatprep.subr.mxu0 0.0
        %4114 = vmatpush1.xpose.msra.mxu0 0.0
        %4115 = vmatprep.subr.mxu0 0.0
        %4116 = vmatpush1.xpose.msra.mxu0 0.0
        %4117 = vmatprep.mubr.f32.mxu0 0.0
        %4118 = vmatmul.mubr.f32.gmra.mrb[0].mxu0 %v734
        %v4119 = vpop.f32.mrb[0].mxu0
        %v4120 = vadd.f32 0.0, %v4119
        %v4121 = vpop.f32.mrb[0].mxu0
        %4122 = vdwg.mxu0
        %s4123 = scalar_lea.vmem %s407, 56
        %4124 = vst.msk [vmem:[%s4123] sm:$0x7] %vm731, %v4120
        %v4125 = vsel %vm3957, 2147483647, %v3888
        %v4126 = vsel %vm3958, 2147483647, %v3889
        %v4127 = vsel %vm3959, 2147483647, %v3890
        %v4128 = vsel %vm3960, 2147483647, %v3891
        %v4129 = vsel %vm569, %v4125, 2147483647
        %v4130 = vand.u32 %v4129, 65535
        %v4131 = vshra.s32 %v4129, 16
        %v4132 = vcvt.s32.f32 %v4130
        %v4133 = vcvt.s32.f32 %v4131
        %4134 = vmin.xlane.f32.xlu0 %v4133
        %v4135 = vpop.xlane.xlu0 %4134
        %vm4136 = vcmp.eq.f32.partialorder %v4133, %v4135
        %v4137 = vsel %vm4136, %v4132, inf
        %4138 = vmin.xlane.f32.xlu0 %v4137
        %v4139 = vpop.xlane.xlu0 %4138
        %v4140 = vcvt.f32.s32 %v4139
        %v4141 = vcvt.f32.s32 %v4135
        %v4142 = vshll.u32 %v4141, 16
        %v4143 = vadd.s32 %v4142, %v4140
        %v4144 = vsel %vm569, %v4126, 2147483647
        %v4145 = vand.u32 %v4144, 65535
        %v4146 = vshra.s32 %v4144, 16
        %v4147 = vcvt.s32.f32 %v4145
        %v4148 = vcvt.s32.f32 %v4146
        %4149 = vmin.xlane.f32.xlu0 %v4148
        %v4150 = vpop.xlane.xlu0 %4149
        %vm4151 = vcmp.eq.f32.partialorder %v4148, %v4150
        %v4152 = vsel %vm4151, %v4147, inf
        %4153 = vmin.xlane.f32.xlu0 %v4152
        %v4154 = vpop.xlane.xlu0 %4153
        %v4155 = vcvt.f32.s32 %v4154
        %v4156 = vcvt.f32.s32 %v4150
        %v4157 = vshll.u32 %v4156, 16
        %v4158 = vadd.s32 %v4157, %v4155
        %v4159 = vsel %vm569, %v4127, 2147483647
        %v4160 = vand.u32 %v4159, 65535
        %v4161 = vshra.s32 %v4159, 16
        %v4162 = vcvt.s32.f32 %v4160
        %v4163 = vcvt.s32.f32 %v4161
        %4164 = vmin.xlane.f32.xlu0 %v4163
        %v4165 = vpop.xlane.xlu0 %4164
        %vm4166 = vcmp.eq.f32.partialorder %v4163, %v4165
        %v4167 = vsel %vm4166, %v4162, inf
        %4168 = vmin.xlane.f32.xlu0 %v4167
        %v4169 = vpop.xlane.xlu0 %4168
        %v4170 = vcvt.f32.s32 %v4169
        %v4171 = vcvt.f32.s32 %v4165
        %v4172 = vshll.u32 %v4171, 16
        %v4173 = vadd.s32 %v4172, %v4170
        %v4174 = vsel %vm569, %v4128, 2147483647
        %v4175 = vand.u32 %v4174, 65535
        %v4176 = vshra.s32 %v4174, 16
        %v4177 = vcvt.s32.f32 %v4175
        %v4178 = vcvt.s32.f32 %v4176
        %4179 = vmin.xlane.f32.xlu0 %v4178
        %v4180 = vpop.xlane.xlu0 %4179
        %vm4181 = vcmp.eq.f32.partialorder %v4178, %v4180
        %v4182 = vsel %vm4181, %v4177, inf
        %4183 = vmin.xlane.f32.xlu0 %v4182
        %v4184 = vpop.xlane.xlu0 %4183
        %v4185 = vcvt.f32.s32 %v4184
        %v4186 = vcvt.f32.s32 %v4180
        %v4187 = vshll.u32 %v4186, 16
        %v4188 = vadd.s32 %v4187, %v4185
        %vm4189 = vcmask 130168
        %4190 = vst.msk [vmem:[#allocation2] sm:$0xff] %vm4189, %v4143
        %4191 = vst.msk [vmem:[#allocation2 + $0x8] sm:$0xff] %vm4189, %v4158
        %4192 = vst.msk [vmem:[#allocation2 + $0x10] sm:$0xff] %vm4189, %v4173
        %4193 = vst.msk [vmem:[#allocation2 + $0x18] sm:$0xff] %vm4189, %v4188
        %vm4194 = vcmp.eq.s32.totalorder %v4125, %v4143
        %vm4195 = vcmp.eq.s32.totalorder %v4126, %v4158
        %vm4196 = vcmp.eq.s32.totalorder %v4127, %v4173
        %vm4197 = vcmp.eq.s32.totalorder %v4128, %v4188
        %v4198 = vsel %vm4194, 1, 0
        %v4199 = vsel %vm4195, 1, 0
        %v4200 = vsel %vm4196, 1, 0
        %v4201 = vsel %vm4197, 1, 0
        %v4202 = vcvt.s32.f32 %v4198
        %v4203 = vcvt.s32.f32 %v4199
        %v4204 = vcvt.s32.f32 %v4200
        %v4205 = vcvt.s32.f32 %v4201
        %v4207 = vsel %vm569, %v4202, 0
        %v4210 = vsel %vm569, %v4203, 0
        %v4213 = vsel %vm569, %v4204, 0
        %v4216 = vsel %vm569, %v4205, 0
        %4218 = vmatprep.subr.mxu0 0.0
        %4219 = vmatpush1.xpose.msra.mxu0 %v4207
        %4220 = vmatprep.subr.mxu0 0.0
        %4221 = vmatpush1.xpose.msra.mxu0 %v4210
        %4222 = vmatprep.subr.mxu0 0.0
        %4223 = vmatpush1.xpose.msra.mxu0 %v4213
        %4224 = vmatprep.subr.mxu0 0.0
        %4225 = vmatpush1.xpose.msra.mxu0 %v4216
        %4226 = vmatprep.subr.mxu0 0.0
        %4227 = vmatpush1.xpose.msra.mxu0 0.0
        %4228 = vmatprep.subr.mxu0 0.0
        %4229 = vmatpush1.xpose.msra.mxu0 0.0
        %4230 = vmatprep.subr.mxu0 0.0
        %4231 = vmatpush1.xpose.msra.mxu0 0.0
        %4232 = vmatprep.subr.mxu0 0.0
        %4233 = vmatpush1.xpose.msra.mxu0 0.0
        %4234 = vmatprep.subr.mxu0 0.0
        %4235 = vmatpush1.xpose.msra.mxu0 0.0
        %4236 = vmatprep.subr.mxu0 0.0
        %4237 = vmatpush1.xpose.msra.mxu0 0.0
        %4238 = vmatprep.subr.mxu0 0.0
        %4239 = vmatpush1.xpose.msra.mxu0 0.0
        %4240 = vmatprep.subr.mxu0 0.0
        %4241 = vmatpush1.xpose.msra.mxu0 0.0
        %4242 = vmatprep.subr.mxu0 0.0
        %4243 = vmatpush1.xpose.msra.mxu0 0.0
        %4244 = vmatprep.subr.mxu0 0.0
        %4245 = vmatpush1.xpose.msra.mxu0 0.0
        %4246 = vmatprep.subr.mxu0 0.0
        %4247 = vmatpush1.xpose.msra.mxu0 0.0
        %4248 = vmatprep.subr.mxu0 0.0
        %4249 = vmatpush1.xpose.msra.mxu0 0.0
        %4250 = vmatprep.subr.mxu0 0.0
        %4251 = vmatpush1.xpose.msra.mxu0 0.0
        %4252 = vmatprep.subr.mxu0 0.0
        %4253 = vmatpush1.xpose.msra.mxu0 0.0
        %4254 = vmatprep.subr.mxu0 0.0
        %4255 = vmatpush1.xpose.msra.mxu0 0.0
        %4256 = vmatprep.subr.mxu0 0.0
        %4257 = vmatpush1.xpose.msra.mxu0 0.0
        %4258 = vmatprep.subr.mxu0 0.0
        %4259 = vmatpush1.xpose.msra.mxu0 0.0
        %4260 = vmatprep.subr.mxu0 0.0
        %4261 = vmatpush1.xpose.msra.mxu0 0.0
        %4262 = vmatprep.subr.mxu0 0.0
        %4263 = vmatpush1.xpose.msra.mxu0 0.0
        %4264 = vmatprep.subr.mxu0 0.0
        %4265 = vmatpush1.xpose.msra.mxu0 0.0
        %4266 = vmatprep.subr.mxu0 0.0
        %4267 = vmatpush1.xpose.msra.mxu0 0.0
        %4268 = vmatprep.subr.mxu0 0.0
        %4269 = vmatpush1.xpose.msra.mxu0 0.0
        %4270 = vmatprep.subr.mxu0 0.0
        %4271 = vmatpush1.xpose.msra.mxu0 0.0
        %4272 = vmatprep.subr.mxu0 0.0
        %4273 = vmatpush1.xpose.msra.mxu0 0.0
        %4274 = vmatprep.subr.mxu0 0.0
        %4275 = vmatpush1.xpose.msra.mxu0 0.0
        %4276 = vmatprep.subr.mxu0 0.0
        %4277 = vmatpush1.xpose.msra.mxu0 0.0
        %4278 = vmatprep.subr.mxu0 0.0
        %4279 = vmatpush1.xpose.msra.mxu0 0.0
        %4280 = vmatprep.subr.mxu0 0.0
        %4281 = vmatpush1.xpose.msra.mxu0 0.0
        %4282 = vmatprep.mubr.f32.mxu0 0.0
        %4283 = vmatmul.mubr.f32.gmra.mrb[0].mxu0 %v647
        %v4284 = vpop.f32.mrb[0].mxu0
        %v4285 = vadd.f32 0.0, %v4284
        %v4286 = vpop.f32.mrb[0].mxu0
        %4287 = vdwg.mxu0
        %s4288 = scalar_lea.vmem %s399, 60
        %4289 = vst.msk [vmem:[%s4288] sm:$0x7] %vm731, %v4285
        %4290 = vmatprep.subr.mxu0 0.0
        %4291 = vmatpush1.xpose.msra.mxu0 %v4207
        %4292 = vmatprep.subr.mxu0 0.0
        %4293 = vmatpush1.xpose.msra.mxu0 %v4210
        %4294 = vmatprep.subr.mxu0 0.0
        %4295 = vmatpush1.xpose.msra.mxu0 %v4213
        %4296 = vmatprep.subr.mxu0 0.0
        %4297 = vmatpush1.xpose.msra.mxu0 %v4216
        %4298 = vmatprep.subr.mxu0 0.0
        %4299 = vmatpush1.xpose.msra.mxu0 0.0
        %4300 = vmatprep.subr.mxu0 0.0
        %4301 = vmatpush1.xpose.msra.mxu0 0.0
        %4302 = vmatprep.subr.mxu0 0.0
        %4303 = vmatpush1.xpose.msra.mxu0 0.0
        %4304 = vmatprep.subr.mxu0 0.0
        %4305 = vmatpush1.xpose.msra.mxu0 0.0
        %4306 = vmatprep.subr.mxu0 0.0
        %4307 = vmatpush1.xpose.msra.mxu0 0.0
        %4308 = vmatprep.subr.mxu0 0.0
        %4309 = vmatpush1.xpose.msra.mxu0 0.0
        %4310 = vmatprep.subr.mxu0 0.0
        %4311 = vmatpush1.xpose.msra.mxu0 0.0
        %4312 = vmatprep.subr.mxu0 0.0
        %4313 = vmatpush1.xpose.msra.mxu0 0.0
        %4314 = vmatprep.subr.mxu0 0.0
        %4315 = vmatpush1.xpose.msra.mxu0 0.0
        %4316 = vmatprep.subr.mxu0 0.0
        %4317 = vmatpush1.xpose.msra.mxu0 0.0
        %4318 = vmatprep.subr.mxu0 0.0
        %4319 = vmatpush1.xpose.msra.mxu0 0.0
        %4320 = vmatprep.subr.mxu0 0.0
        %4321 = vmatpush1.xpose.msra.mxu0 0.0
        %4322 = vmatprep.subr.mxu0 0.0
        %4323 = vmatpush1.xpose.msra.mxu0 0.0
        %4324 = vmatprep.subr.mxu0 0.0
        %4325 = vmatpush1.xpose.msra.mxu0 0.0
        %4326 = vmatprep.subr.mxu0 0.0
        %4327 = vmatpush1.xpose.msra.mxu0 0.0
        %4328 = vmatprep.subr.mxu0 0.0
        %4329 = vmatpush1.xpose.msra.mxu0 0.0
        %4330 = vmatprep.subr.mxu0 0.0
        %4331 = vmatpush1.xpose.msra.mxu0 0.0
        %4332 = vmatprep.subr.mxu0 0.0
        %4333 = vmatpush1.xpose.msra.mxu0 0.0
        %4334 = vmatprep.subr.mxu0 0.0
        %4335 = vmatpush1.xpose.msra.mxu0 0.0
        %4336 = vmatprep.subr.mxu0 0.0
        %4337 = vmatpush1.xpose.msra.mxu0 0.0
        %4338 = vmatprep.subr.mxu0 0.0
        %4339 = vmatpush1.xpose.msra.mxu0 0.0
        %4340 = vmatprep.subr.mxu0 0.0
        %4341 = vmatpush1.xpose.msra.mxu0 0.0
        %4342 = vmatprep.subr.mxu0 0.0
        %4343 = vmatpush1.xpose.msra.mxu0 0.0
        %4344 = vmatprep.subr.mxu0 0.0
        %4345 = vmatpush1.xpose.msra.mxu0 0.0
        %4346 = vmatprep.subr.mxu0 0.0
        %4347 = vmatpush1.xpose.msra.mxu0 0.0
        %4348 = vmatprep.subr.mxu0 0.0
        %4349 = vmatpush1.xpose.msra.mxu0 0.0
        %4350 = vmatprep.subr.mxu0 0.0
        %4351 = vmatpush1.xpose.msra.mxu0 0.0
        %4352 = vmatprep.subr.mxu0 0.0
        %4353 = vmatpush1.xpose.msra.mxu0 0.0
        %4354 = vmatprep.mubr.f32.mxu0 0.0
        %4355 = vmatmul.mubr.f32.gmra.mrb[0].mxu0 %v734
        %v4356 = vpop.f32.mrb[0].mxu0
        %v4357 = vadd.f32 0.0, %v4356
        %v4358 = vpop.f32.mrb[0].mxu0
        %4359 = vdwg.mxu0
        %s4360 = scalar_lea.vmem %s407, 60
        %4361 = vst.msk [vmem:[%s4360] sm:$0x7] %vm731, %v4357
        %v4362 = vld [vmem:[#allocation2] sm:$0xff]
        %v4363 = vld [vmem:[#allocation2 + $0x8] sm:$0xff]
        %v4364 = vld [vmem:[#allocation2 + $0x10] sm:$0xff]
        %v4365 = vld [vmem:[#allocation2 + $0x18] sm:$0xff]
        %4370 = vxpose.xlu0.b32.start [1/16] %v4362, 128
        %4371 = vxpose.xlu0.b32.cont [2/16] %v4363, 128
        %4372 = vxpose.xlu0.b32.cont [3/16] %v4364, 128
        %4373 = vxpose.xlu0.b32.cont [4/16] %v4365, 128
        %4374 = vxpose.xlu0.b32.cont [5/16] 0.0, 128
        %4375 = vxpose.xlu0.b32.cont [6/16] 0.0, 128
        %4376 = vxpose.xlu0.b32.cont [7/16] 0.0, 128
        %4377 = vxpose.xlu0.b32.cont [8/16] 0.0, 128
        %4378 = vxpose.xlu0.b32.cont [9/16] 0.0, 128
        %4379 = vxpose.xlu0.b32.cont [10/16] 0.0, 128
        %4380 = vxpose.xlu0.b32.cont [11/16] 0.0, 128
        %4381 = vxpose.xlu0.b32.cont [12/16] 0.0, 128
        %4382 = vxpose.xlu0.b32.cont [13/16] 0.0, 128
        %4383 = vxpose.xlu0.b32.cont [14/16] 0.0, 128
        %4384 = vxpose.xlu0.b32.cont [15/16] 0.0, 128
        %4385 = vxpose.xlu0.b32.end [16/16] 0.0, 128
        %v4386 = vpop.trf.xlu0
        %v4387 = vpop.trf.xlu0
        %v4388 = vpop.trf.xlu0
        %v4389 = vpop.trf.xlu0
        %v4390 = vpop.trf.xlu0
        %v4391 = vpop.trf.xlu0
        %v4392 = vpop.trf.xlu0
        %v4393 = vpop.trf.xlu0
        %v4394 = vpop.trf.xlu0
        %v4395 = vpop.trf.xlu0
        %v4396 = vpop.trf.xlu0
        %v4397 = vpop.trf.xlu0
        %v4398 = vpop.trf.xlu0
        %v4399 = vpop.trf.xlu0
        %v4400 = vpop.trf.xlu0
        %v4401 = vpop.trf.xlu0
        %v4404 = vand.u32 %v4386, 31
        %v4405 = vand.u32 %v4387, 31
        %4406 = vst.msk [vmem:[%s350] sm:$0xff] %vm569, %v4404
        %4407 = vst.msk [vmem:[%s350 + $0x8] sm:$0xff] %vm569, %v4405
        %v4408 = vand.u32 %v4386, 4294967264
        %v4409 = vand.u32 %v4387, 4294967264
        %4412 = vst.msk [vmem:[%s343] sm:$0xff] %vm569, %v4408
        %4413 = vst.msk [vmem:[%s343 + $0x8] sm:$0xff] %vm569, %v4409
        %s4414 = sand.u32 %s153, 1
        %s4415 = scalar_lea.sflag [#allocation4], %s4414
        %s4416 = sand.u32 %s153, 1
        %s4417 = smul.addr %s4416, 16
        %s4418 = scalar_lea.vmem [#allocation3], %s4417
        %s4419 = sand.u32 %s181, 1
        %s4420 = scalar_lea.sflag [#allocation6], %s4419
        %s4421 = sand.u32 %s181, 1
        %s4422 = smul.addr %s4421, 16
        %s4423 = scalar_lea.vmem [#allocation5], %s4422
        %p4424 = scmp.lt.s32.totalorder %s29, 1
        %s4425 = scalar_select %p4424, %s29, 1
        %p4426 = scmp.lt.s32.totalorder %s30, 0
        %s4427 = scalar_select %p4426, %s30, 0
        %s4428 = smul.addr %s4425, 16
        %s4429 = sadd.s32 %s4427, %s4428
        %s4430 = smul.addr %s4429, 4
        %s4431 = scalar_lea.vmem %s6, %s4430
        %p4432 = scmp.lt.s32.totalorder %s29, 1
        %s4433 = scalar_select %p4432, %s29, 1
        %p4434 = scmp.lt.s32.totalorder %s30, 0
        %s4435 = scalar_select %p4434, %s30, 0
        %s4436 = smul.addr %s4433, 16
        %s4437 = sadd.s32 %s4435, %s4436
        %s4438 = smul.addr %s4437, 4
        %s4439 = scalar_lea.vmem %s7, %s4438
        // Predicated region
        $region37: #{tpu_custom_call.1} parent=35 // pred_check
          %p4440 = pneg %p163
        $region38: #{tpu_custom_call.1} parent=35 // pred_check_branch
          %4442 = sbr.rel (%p4440) target = $region40
        $region39: #{tpu_custom_call.1} parent=35 // pred_region
          %s4444 = ssub.s32 256, 256
          %4445 = vsyncadd %s4415, %s4444
          %s4446 = smul.addr %s29, 2
          %s4447 = sadd.s32 %s30, %s4446
          %s4448 = smul.addr %s4447, 128
          %s4449 = scalar_lea.hbm %s4, %s4448
          %s4450 = sshll.u32 %s4418, 4
          %s4451 = int_to_ptr.vmem [resolvable:$true] %s4450
          %4456 = dma.vmem_to_hbm [thread:$0]  %s4451, 256, %s4449, %s4415, 128, 128, 8
        $region40: #{tpu_custom_call.1} parent=35 // pred_fallthru
          _
        // Predicated region
        $region41: #{tpu_custom_call.1} parent=35 // pred_check
          %p4457 = pneg %p191
        $region42: #{tpu_custom_call.1} parent=35 // pred_check_branch
          %4459 = sbr.rel (%p4457) target = $region44
        $region43: #{tpu_custom_call.1} parent=35 // pred_region
          %s4461 = ssub.s32 256, 256
          %4462 = vsyncadd %s4420, %s4461
          %s4463 = smul.addr %s29, 2
          %s4464 = sadd.s32 %s30, %s4463
          %s4465 = smul.addr %s4464, 128
          %s4466 = scalar_lea.hbm %s5, %s4465
          %s4467 = sshll.u32 %s4423, 4
          %s4468 = int_to_ptr.vmem [resolvable:$true] %s4467
          %4473 = dma.vmem_to_hbm [thread:$0]  %s4468, 256, %s4466, %s4420, 128, 128, 8
        $region44: #{tpu_custom_call.1} parent=35 // pred_fallthru
          _
        // Predicated region
        $region45: #{tpu_custom_call.1} parent=35 // pred_check
          %p4474 = pneg %p219
        $region46: #{tpu_custom_call.1} parent=35 // pred_check_branch
          %4476 = sbr.rel (%p4474) target = $region48
        $region47: #{tpu_custom_call.1} parent=35 // pred_region
          _
        $region48: #{tpu_custom_call.1} parent=35 // pred_fallthru
          _
        // Predicated region
        $region49: #{tpu_custom_call.1} parent=35 // pred_check
          %p4477 = pneg %p247
        $region50: #{tpu_custom_call.1} parent=35 // pred_check_branch
          %4479 = sbr.rel (%p4477) target = $region52
        $region51: #{tpu_custom_call.1} parent=35 // pred_region
          _
        $region52: #{tpu_custom_call.1} parent=35 // pred_fallthru
          _
      $region36: #{tpu_custom_call.1} parent=5 // pred_fallthru
        _
      %p4480 = scmp.le.s32.totalorder 2, %s20
      // Predicated region
      $region53: #{tpu_custom_call.1} parent=5 // pred_check
        %p4481 = pneg %p4480
      $region54: #{tpu_custom_call.1} parent=5 // pred_check_branch
        %4483 = sbr.rel (%p4481) target = $region56
      $region55: #{tpu_custom_call.1} parent=5 // pred_region
        %s4484 = ssub.s32 %s20, 2
        // Predicated region
        $region57: #{tpu_custom_call.1} parent=55 // pred_check
          %p4485 = pneg %p169
        $region58: #{tpu_custom_call.1} parent=55 // pred_check_branch
          %4487 = sbr.rel (%p4485) target = $region60
        $region59: #{tpu_custom_call.1} parent=55 // pred_region
          %s4488 = sand.u32 %s154, 1
          %s4489 = scalar_lea.sflag [#allocation4], %s4488
          %s4490 = sand.u32 %s154, 1
          %s4491 = smul.addr %s4490, 16
          %s4492 = scalar_lea.vmem [#allocation3], %s4491
          %4493 = dma.done %s4489, 256
        $region60: #{tpu_custom_call.1} parent=55 // pred_fallthru
          _
        // Predicated region
        $region61: #{tpu_custom_call.1} parent=55 // pred_check
          %p4494 = pneg %p197
        $region62: #{tpu_custom_call.1} parent=55 // pred_check_branch
          %4496 = sbr.rel (%p4494) target = $region64
        $region63: #{tpu_custom_call.1} parent=55 // pred_region
          %s4497 = sand.u32 %s182, 1
          %s4498 = scalar_lea.sflag [#allocation6], %s4497
          %s4499 = sand.u32 %s182, 1
          %s4500 = smul.addr %s4499, 16
          %s4501 = scalar_lea.vmem [#allocation5], %s4500
          %4502 = dma.done %s4498, 256
        $region64: #{tpu_custom_call.1} parent=55 // pred_fallthru
          _
        // Predicated region
        $region65: #{tpu_custom_call.1} parent=55 // pred_check
          %p4503 = pneg %p225
        $region66: #{tpu_custom_call.1} parent=55 // pred_check_branch
          %4505 = sbr.rel (%p4503) target = $region68
        $region67: #{tpu_custom_call.1} parent=55 // pred_region
          %p4506 = scmp.lt.s32.totalorder %s31, 1
          %s4507 = scalar_select %p4506, %s31, 1
          %p4508 = scmp.lt.s32.totalorder %s32, 0
          %s4509 = scalar_select %p4508, %s32, 0
          %s4510 = smul.addr %s4507, 16
          %s4511 = sadd.s32 %s4509, %s4510
          %s4512 = smul.addr %s4511, 4
          %s4513 = scalar_lea.vmem %s6, %s4512
        $region68: #{tpu_custom_call.1} parent=55 // pred_fallthru
          _
        // Predicated region
        $region69: #{tpu_custom_call.1} parent=55 // pred_check
          %p4514 = pneg %p253
        $region70: #{tpu_custom_call.1} parent=55 // pred_check_branch
          %4516 = sbr.rel (%p4514) target = $region72
        $region71: #{tpu_custom_call.1} parent=55 // pred_region
          %p4517 = scmp.lt.s32.totalorder %s31, 1
          %s4518 = scalar_select %p4517, %s31, 1
          %p4519 = scmp.lt.s32.totalorder %s32, 0
          %s4520 = scalar_select %p4519, %s32, 0
          %s4521 = smul.addr %s4518, 16
          %s4522 = sadd.s32 %s4520, %s4521
          %s4523 = smul.addr %s4522, 4
          %s4524 = scalar_lea.vmem %s7, %s4523
        $region72: #{tpu_custom_call.1} parent=55 // pred_fallthru
          _
      $region56: #{tpu_custom_call.1} parent=5 // pred_fallthru
        _
    $region6: #{tpu_custom_call.1} parent=1 // loop_footer
      %s24 = sadd.s32 1, %s20
    $region7: #{tpu_custom_call.1} parent=1 // loop_footer_branch
      %19 = sbr.rel target = $region3
    $region8: #{tpu_custom_call.1} parent=1 // loop_exit
      _
    %4525 = vsyncpa [#allocation4], 1
    %s4526 = scalar_lea.sflag [#allocation4], 1
    %4527 = vsyncpa %s4526, 1
    %4528 = vsyncpa [#allocation6], 1
    %s4529 = scalar_lea.sflag [#allocation6], 1
    %4530 = vsyncpa %s4529, 1

</llo_original>
